<compile_context>
chip_gen: v7x
topology: tpu7x:2x2x1
jax: 0.10.0
libtpu: 0.0.40
codegen_flags: <defaults>
</compile_context>

<pallas_src>
import functools
import math

import jax
import jax.numpy as jnp
from jax import lax
from jax.experimental import pallas as pl
from jax.experimental.pallas import tpu as pltpu  # noqa: F401  (kept for TPU-specific tuning hooks)


# ----------------------------------------------------------------------------
# In-kernel helper (the PyTorch module uses nn.LayerNorm(..., eps=1e-08)).
# ----------------------------------------------------------------------------
def _layernorm(x, w, b, eps=1e-8):
    mu = jnp.mean(x, axis=-1, keepdims=True)
    xc = x - mu
    var = jnp.mean(xc * xc, axis=-1, keepdims=True)
    return xc * lax.rsqrt(var + eps) * w + b


# ----------------------------------------------------------------------------
# Fused kernel: all blocks + last layernorm + logit reductions, one invocation.
# ----------------------------------------------------------------------------
def sasrec_fused_kernel(batch, seqlen,
                        x_ref, valid_ref,
                        aln_w, aln_b, wq, wk, wv, bq, bk, bv, wo, bo,
                        fln_w, fln_b, w1, b1, w2, b2,
                        lln_w, lln_b, cand_ref,
                        out_ref):
    B, T = batch, seqlen
    BT, H = x_ref.shape
    num_blocks = wq.shape[0]
    num_heads = wq.shape[1]
    dh = wq.shape[-1]
    scale = 1.0 / math.sqrt(dh)

    x = x_ref[...].astype(jnp.float32)           # (B*T, H)
    valid = valid_ref[...].astype(jnp.float32)   # (B*T, 1)  1.0 = valid, 0.0 = pad

    # Additive causal bias (0 on/below diagonal, -1e30 above) — computed once,
    # reused by every block / head as a plain vadd.
    row = lax.broadcasted_iota(jnp.int32, (T, T), 0)
    col = lax.broadcasted_iota(jnp.int32, (T, T), 1)
    causal_bias = jnp.where(col <= row, 0.0, -1e30).astype(jnp.float32)[None]  # (1,T,T)

    for blk in range(num_blocks):                # static loop; weights stay in VMEM
        # Q = LayerNorm(x); K, V come from the *un-normalized* x (SASRec quirk).
        q_in = _layernorm(x, aln_w[blk], aln_b[blk])              # (B*T, H)

        attn = jnp.zeros((BT, H), jnp.float32) + bo[blk]          # output-proj bias
        for h in range(num_heads):               # static loop; per-head weights,
            # no lane-axis slicing / concat.
            qh = (jnp.dot(q_in, wq[blk, h], preferred_element_type=jnp.float32)
                  + bq[blk, h]) * scale                           # (B*T, dh)
            kh = jnp.dot(x, wk[blk, h], preferred_element_type=jnp.float32) + bk[blk, h]
            vh = jnp.dot(x, wv[blk, h], preferred_element_type=jnp.float32) + bv[blk, h]

            s = jnp.einsum('bqd,bkd->bqk',
                           qh.reshape(B, T, dh), kh.reshape(B, T, dh),
                           preferred_element_type=jnp.float32)    # (B, T, T)
            s = s + causal_bias
            s = s - jnp.max(s, axis=-1, keepdims=True)
            p = jnp.exp(s)
            p = p * pl.reciprocal(jnp.sum(p, axis=-1, keepdims=True), approx=True)
            oh = jnp.einsum('bqk,bkd->bqd', p, vh.reshape(B, T, dh),
                            preferred_element_type=jnp.float32)   # (B, T, dh)

            # Accumulate the output projection per head: oh @ Wo[h*dh:(h+1)*dh, :]
            attn = attn + jnp.dot(oh.reshape(BT, dh), wo[blk, h],
                                  preferred_element_type=jnp.float32)

        seqs = q_in + attn                        # residual on the layernormed Q

        # Point-wise feed-forward: Conv1d(k=1) == matmul over the hidden axis.
        z = _layernorm(seqs, fln_w[blk], fln_b[blk])
        h1 = jnp.maximum(
            jnp.dot(z, w1[blk], preferred_element_type=jnp.float32) + b1[blk], 0.0)
        ffn = jnp.dot(h1, w2[blk], preferred_element_type=jnp.float32) + b2[blk]
        x = (ffn + z) * valid                     # timeline (pad) mask

    # Head: final layernorm + fused pos/neg logit reductions (one output slab).
    feats = _layernorm(x, lln_w[...], lln_b[...])                 # (B*T, H)
    cand = cand_ref[...].astype(jnp.float32)                      # (B*T, 1+N, H)
    out_ref[...] = jnp.sum(feats[:, None, :] * cand, axis=-1)     # (B*T, 1+N)


# ----------------------------------------------------------------------------
# Parameter restructuring (plain JAX glue).
# ----------------------------------------------------------------------------
_BLOCK_WEIGHTS = ('aln_w', 'aln_b', 'wq', 'wk', 'wv', 'bq', 'bk', 'bv',
                  'wo', 'bo', 'fln_w', 'fln_b', 'w1', 'b1', 'w2', 'b2')


def _stack_block_params(blocks, num_heads):
    """Stack per-block weights along a leading axis; split QKV/Wo per head."""
    H = blocks[0]['wq'].shape[0]
    dh = H // num_heads

    def head_in(w):    # (H, H)  -> (num_heads, H, dh)   (q/k/v projections)
        return jnp.transpose(w.reshape(H, num_heads, dh), (1, 0, 2))

    def head_bias(b):  # (1, H)  -> (num_heads, 1, dh)
        return jnp.transpose(b.reshape(1, num_heads, dh), (1, 0, 2))

    def head_out(w):   # (H, H)  -> (num_heads, dh, H)   (output projection)
        return w.reshape(num_heads, dh, H)

    convert = dict(wq=head_in, wk=head_in, wv=head_in,
                   bq=head_bias, bk=head_bias, bv=head_bias, wo=head_out)
    out = {}
    for name in _BLOCK_WEIGHTS:
        f = convert.get(name, lambda a: a)
        out[name] = jnp.stack([f(blk[name]) for blk in blocks])
    return out


def run_fused(seqs, valid, stacked, lln_w, lln_b, cand):
    B, T, H = seqs.shape
    n_cand = cand.shape[2]
    x2 = seqs.reshape(B * T, H).astype(jnp.float32)
    valid2 = valid.reshape(B * T, 1).astype(jnp.float32)
    cand2 = cand.reshape(B * T, n_cand, H).astype(jnp.float32)

    kernel = functools.partial(sasrec_fused_kernel, B, T)
    # Single fused invocation (grid=()): every array lives fully in VMEM for the
    # whole network — no multi-buffering, no per-block HBM round trips.
    # TODO(synk): for large B, tile the batch axis over a ("parallel",) grid so
    # both v7x TensorCores get work; at this demo scale one invocation is optimal.
    return pl.pallas_call(
        kernel,
        out_shape=jax.ShapeDtypeStruct((B * T, n_cand), jnp.float32),
    )(x2, valid2, *[stacked[n] for n in _BLOCK_WEIGHTS], lln_w, lln_b, cand2)


# ----------------------------------------------------------------------------
# Full forward pass (embedding gathers in plain JAX, everything else in Pallas).
# ----------------------------------------------------------------------------
def sasrec_forward(params, log_seqs, pos_seqs, neg_seqs, *, num_heads, pad_token):
    item_emb = params['item_emb']                # (item_num + 1, H)
    B, T = log_seqs.shape
    H = item_emb.shape[1]

    # log2feats prologue.
    seqs = item_emb[log_seqs] * jnp.float32(math.sqrt(H))
    seqs = seqs + params['pos_emb'][:T][None, :, :]
    # TODO(synk): nn.Dropout layers (emb/attn/ffn) are identity — inference mode.
    valid = (log_seqs != pad_token).astype(jnp.float32)[..., None]   # (B, T, 1)
    seqs = seqs * valid

    stacked = _stack_block_params(params['blocks'], num_heads)

    # Head candidates: pack pos + neg embeddings into one (B, T, 1+N, H) slab.
    pos_embs = item_emb[pos_seqs]                                    # (B, T, H)
    neg_embs = item_emb[jnp.transpose(neg_seqs, (0, 2, 1))]          # (B, T, N, H)
    cand = jnp.concatenate([pos_embs[:, :, None, :], neg_embs], axis=2)

    logits = run_fused(seqs, valid, stacked,
                       params['last_ln_w'], params['last_ln_b'], cand)  # (B*T, 1+N)
    pos_logits = logits[:, 0]
    neg_logits = logits[:, 1:]
    return pos_seqs.reshape(-1), pos_logits, neg_logits


# ----------------------------------------------------------------------------
# Pure-JAX reference (same math, independent code path) for correctness check.
# ----------------------------------------------------------------------------
def reference_forward(params, log_seqs, pos_seqs, neg_seqs, *, num_heads, pad_token):
    item_emb = params['item_emb']
    B, T = log_seqs.shape
    H = item_emb.shape[1]
    dh = H // num_heads
    seqs = item_emb[log_seqs] * math.sqrt(H) + params['pos_emb'][:T][None]
    valid = (log_seqs != pad_token).astype(jnp.float32)[..., None]
    seqs = seqs * valid
    causal = jnp.tril(jnp.ones((T, T), bool))
    for blk in params['blocks']:
        q_in = _layernorm(seqs, blk['aln_w'], blk['aln_b'])
        q = q_in @ blk['wq'] + blk['bq']
        k = seqs @ blk['wk'] + blk['bk']
        v = seqs @ blk['wv'] + blk['bv']
        qh = q.reshape(B, T, num_heads, dh).transpose(0, 2, 1, 3) / math.sqrt(dh)
        kh = k.reshape(B, T, num_heads, dh).transpose(0, 2, 1, 3)
        vh = v.reshape(B, T, num_heads, dh).transpose(0, 2, 1, 3)
        s = jnp.einsum('bhqd,bhkd->bhqk', qh, kh)
        s = jnp.where(causal, s, -1e30)
        p = jax.nn.softmax(s, axis=-1)
        o = jnp.einsum('bhqk,bhkd->bhqd', p, vh).transpose(0, 2, 1, 3).reshape(B, T, H)
        attn = o @ blk['wo'] + blk['bo']
        seqs = q_in + attn
        z = _layernorm(seqs, blk['fln_w'], blk['fln_b'])
        ffn = jnp.maximum(z @ blk['w1'] + blk['b1'], 0.0) @ blk['w2'] + blk['b2']
        seqs = (ffn + z) * valid
    feats = _layernorm(seqs, params['last_ln_w'], params['last_ln_b'])
    lf = feats.reshape(B * T, H)
    pos_e = item_emb[pos_seqs.reshape(-1)]
    neg_e = item_emb[jnp.transpose(neg_seqs, (0, 2, 1)).reshape(B * T, -1)]
    pos_logits = jnp.sum(lf * pos_e, -1)
    neg_logits = jnp.sum(lf[:, None, :] * neg_e, -1)
    return pos_seqs.reshape(-1), pos_logits, neg_logits


# ----------------------------------------------------------------------------
# Deterministic synthetic parameters (shapes per SASRecBackBone.__init__).
# ----------------------------------------------------------------------------
def init_params(key, item_num, config):
    H = config['hidden_units']
    L = config['maxlen']
    nb = config['num_blocks']
    scale = 0.05

    def nrm(k, shape):
        return jax.random.normal(k, shape, jnp.float32) * scale

    keys = jax.random.split(key, 2 + nb)
    params = dict(
        # xavier init in the reference overwrites the padding row too, so we
        # do not force it to zero here.
        item_emb=nrm(keys[0], (item_num + 1, H)),
        pos_emb=nrm(keys[1], (L, H)),
        last_ln_w=jnp.ones((1, H), jnp.float32),
        last_ln_b=jnp.zeros((1, H), jnp.float32),
        blocks=[],
    )
    for i in range(nb):
        ks = jax.random.split(keys[2 + i], 6)
        params['blocks'].append(dict(
            aln_w=jnp.ones((1, H), jnp.float32),
            aln_b=jnp.zeros((1, H), jnp.float32),
            # stored pre-transposed (x @ W convention)
            wq=nrm(ks[0], (H, H)), wk=nrm(ks[1], (H, H)), wv=nrm(ks[2], (H, H)),
            bq=jnp.zeros((1, H), jnp.float32),
            bk=jnp.zeros((1, H), jnp.float32),
            bv=jnp.zeros((1, H), jnp.float32),
            wo=nrm(ks[3], (H, H)), bo=jnp.zeros((1, H), jnp.float32),
            fln_w=jnp.ones((1, H), jnp.float32),
            fln_b=jnp.zeros((1, H), jnp.float32),
            w1=nrm(ks[4], (H, H)), b1=jnp.zeros((1, H), jnp.float32),
            w2=nrm(ks[5], (H, H)), b2=jnp.zeros((1, H), jnp.float32),
        ))
    return params


if __name__ == "__main__":
    config = dict(hidden_units=32, maxlen=8, num_blocks=2, num_heads=2,
                  dropout_rate=0.2, manual_seed=0)
    item_num = 50
    pad_token = item_num
    B, N_NEG = 2, 3
    T = config['maxlen']

    key = jax.random.PRNGKey(0)
    pkey, dkey = jax.random.split(key)
    params = init_params(pkey, item_num, config)

    k1, k2, k3 = jax.random.split(dkey, 3)
    log_seqs = jax.random.randint(k1, (B, T), 0, item_num + 1)   # may hit pad
    pos_seqs = jax.random.randint(k2, (B, T), 0, item_num)
    neg_seqs = jax.random.randint(k3, (B, N_NEG, T), 0, item_num)

    fwd = jax.jit(functools.partial(sasrec_forward,
                                    num_heads=config['num_heads'],
                                    pad_token=pad_token))
    out = fwd(params, log_seqs, pos_seqs, neg_seqs)
    out = jax.block_until_ready(out)

    ref = reference_forward(params, log_seqs, pos_seqs, neg_seqs,
                            num_heads=config['num_heads'], pad_token=pad_token)
    assert out[0].shape == (B * T,)
    assert out[1].shape == (B * T,)
    assert out[2].shape == (B * T, N_NEG)
    assert jnp.allclose(out[0], ref[0])
    assert jnp.allclose(out[1], ref[1], atol=2e-3, rtol=2e-3)
    assert jnp.allclose(out[2], ref[2], atol=2e-3, rtol=2e-3)

    print("KERNEL_OK")
</pallas_src>

<mosaic_0001>
module attributes {stable_mosaic.version = 11 : i64} {
  func.func @sasrec_fused_kernel(%arg0: memref<16x32xf32, #tpu.memory_space<vmem>>, %arg1: memref<16x1xf32, #tpu.memory_space<vmem>>, %arg2: memref<2x1x32xf32, #tpu.memory_space<vmem>>, %arg3: memref<2x1x32xf32, #tpu.memory_space<vmem>>, %arg4: memref<2x2x32x16xf32, #tpu.memory_space<vmem>>, %arg5: memref<2x2x32x16xf32, #tpu.memory_space<vmem>>, %arg6: memref<2x2x32x16xf32, #tpu.memory_space<vmem>>, %arg7: memref<2x2x1x16xf32, #tpu.memory_space<vmem>>, %arg8: memref<2x2x1x16xf32, #tpu.memory_space<vmem>>, %arg9: memref<2x2x1x16xf32, #tpu.memory_space<vmem>>, %arg10: memref<2x2x16x32xf32, #tpu.memory_space<vmem>>, %arg11: memref<2x1x32xf32, #tpu.memory_space<vmem>>, %arg12: memref<2x1x32xf32, #tpu.memory_space<vmem>>, %arg13: memref<2x1x32xf32, #tpu.memory_space<vmem>>, %arg14: memref<2x32x32xf32, #tpu.memory_space<vmem>>, %arg15: memref<2x1x32xf32, #tpu.memory_space<vmem>>, %arg16: memref<2x32x32xf32, #tpu.memory_space<vmem>>, %arg17: memref<2x1x32xf32, #tpu.memory_space<vmem>>, %arg18: memref<1x32xf32, #tpu.memory_space<vmem>>, %arg19: memref<1x32xf32, #tpu.memory_space<vmem>>, %arg20: memref<16x4x32xf32, #tpu.memory_space<vmem>>, %arg21: memref<16x4xf32, #tpu.memory_space<vmem>>) attributes {dimension_semantics = [], scalar_prefetch = 0 : i64, scratch_operands = 0 : i64, tpu.core_type = #tpu.core_type<tc>} {
    %c0 = arith.constant 0 : index
    %c0_0 = arith.constant 0 : index
    %0 = vector.load %arg0[%c0, %c0_0] : memref<16x32xf32, #tpu.memory_space<vmem>>, vector<16x32xf32>
    %c0_1 = arith.constant 0 : index
    %c0_2 = arith.constant 0 : index
    %1 = vector.load %arg1[%c0_1, %c0_2] : memref<16x1xf32, #tpu.memory_space<vmem>>, vector<16x1xf32>
    %2 = tpu.iota {dimensions = array<i32: 0>} : vector<8x8xi32>
    %3 = tpu.iota {dimensions = array<i32: 1>} : vector<8x8xi32>
    %4 = arith.cmpi sle, %3, %2 : vector<8x8xi32>
    %cst = arith.constant 0.000000e+00 : f32
    %cst_3 = arith.constant -1.000000e+30 : f32
    %5 = vector.broadcast %cst : f32 to vector<8x8xf32>
    %6 = vector.broadcast %cst_3 : f32 to vector<8x8xf32>
    %7 = arith.select %4, %5, %6 : vector<8x8xi1>, vector<8x8xf32>
    %8 = vector.shape_cast %7 : vector<8x8xf32> to vector<1x8x8xf32>
    %c0_4 = arith.constant 0 : index
    %c0_5 = arith.constant 0 : index
    %c0_6 = arith.constant 0 : index
    %9 = vector.load %arg2[%c0_4, %c0_5, %c0_6] : memref<2x1x32xf32, #tpu.memory_space<vmem>>, vector<1x1x32xf32>
    %10 = vector.shape_cast %9 : vector<1x1x32xf32> to vector<1x32xf32>
    %c0_7 = arith.constant 0 : index
    %c0_8 = arith.constant 0 : index
    %c0_9 = arith.constant 0 : index
    %11 = vector.load %arg3[%c0_7, %c0_8, %c0_9] : memref<2x1x32xf32, #tpu.memory_space<vmem>>, vector<1x1x32xf32>
    %12 = vector.shape_cast %11 : vector<1x1x32xf32> to vector<1x32xf32>
    %cst_10 = arith.constant dense<0.000000e+00> : vector<16xf32>
    %13 = vector.multi_reduction <add>, %0, %cst_10 [1] : vector<16x32xf32> to vector<16xf32>
    %14 = vector.shape_cast %13 : vector<16xf32> to vector<16x1xf32>
    %cst_11 = arith.constant 3.200000e+01 : f32
    %15 = vector.broadcast %cst_11 : f32 to vector<16x1xf32>
    %16 = arith.divf %14, %15 : vector<16x1xf32>
    %17 = vector.broadcast %16 : vector<16x1xf32> to vector<16x32xf32>
    %18 = arith.subf %0, %17 : vector<16x32xf32>
    %19 = arith.mulf %18, %18 : vector<16x32xf32>
    %cst_12 = arith.constant dense<0.000000e+00> : vector<16xf32>
    %20 = vector.multi_reduction <add>, %19, %cst_12 [1] : vector<16x32xf32> to vector<16xf32>
    %21 = vector.shape_cast %20 : vector<16xf32> to vector<16x1xf32>
    %cst_13 = arith.constant 3.200000e+01 : f32
    %22 = vector.broadcast %cst_13 : f32 to vector<16x1xf32>
    %23 = arith.divf %21, %22 : vector<16x1xf32>
    %cst_14 = arith.constant 9.99999993E-9 : f32
    %24 = vector.broadcast %cst_14 : f32 to vector<16x1xf32>
    %25 = arith.addf %23, %24 : vector<16x1xf32>
    %26 = math.rsqrt %25 : vector<16x1xf32>
    %27 = vector.broadcast %26 : vector<16x1xf32> to vector<16x32xf32>
    %28 = arith.mulf %18, %27 : vector<16x32xf32>
    %29 = vector.broadcast %10 : vector<1x32xf32> to vector<16x32xf32>
    %30 = arith.mulf %28, %29 : vector<16x32xf32>
    %31 = vector.broadcast %12 : vector<1x32xf32> to vector<16x32xf32>
    %32 = arith.addf %30, %31 : vector<16x32xf32>
    %cst_15 = arith.constant 0.000000e+00 : f32
    %33 = vector.broadcast %cst_15 : f32 to vector<16x32xf32>
    %c0_16 = arith.constant 0 : index
    %c0_17 = arith.constant 0 : index
    %c0_18 = arith.constant 0 : index
    %34 = vector.load %arg11[%c0_16, %c0_17, %c0_18] : memref<2x1x32xf32, #tpu.memory_space<vmem>>, vector<1x1x32xf32>
    %35 = vector.shape_cast %34 : vector<1x1x32xf32> to vector<1x32xf32>
    %36 = vector.broadcast %35 : vector<1x32xf32> to vector<16x32xf32>
    %37 = arith.addf %33, %36 : vector<16x32xf32>
    %c0_19 = arith.constant 0 : index
    %c0_20 = arith.constant 0 : index
    %c0_21 = arith.constant 0 : index
    %c0_22 = arith.constant 0 : index
    %38 = vector.load %arg4[%c0_19, %c0_20, %c0_21, %c0_22] : memref<2x2x32x16xf32, #tpu.memory_space<vmem>>, vector<1x1x32x16xf32>
    %39 = vector.shape_cast %38 : vector<1x1x32x16xf32> to vector<32x16xf32>
    %cst_23 = arith.constant dense<0.000000e+00> : vector<16x16xf32>
    %40 = tpu.matmul %32, %39, %cst_23 {dimension_numbers = #tpu.dot_dimension_numbers<[1], [0], [0], [1], [0, 0, 1, 1], [], []>} : vector<16x32xf32>, vector<32x16xf32>, vector<16x16xf32> -> vector<16x16xf32>
    %c0_24 = arith.constant 0 : index
    %c0_25 = arith.constant 0 : index
    %c0_26 = arith.constant 0 : index
    %c0_27 = arith.constant 0 : index
    %41 = vector.load %arg7[%c0_24, %c0_25, %c0_26, %c0_27] : memref<2x2x1x16xf32, #tpu.memory_space<vmem>>, vector<1x1x1x16xf32>
    %42 = vector.shape_cast %41 : vector<1x1x1x16xf32> to vector<1x16xf32>
    %43 = vector.broadcast %42 : vector<1x16xf32> to vector<16x16xf32>
    %44 = arith.addf %40, %43 : vector<16x16xf32>
    %cst_28 = arith.constant 2.500000e-01 : f32
    %45 = vector.broadcast %cst_28 : f32 to vector<16x16xf32>
    %46 = arith.mulf %44, %45 : vector<16x16xf32>
    %c0_29 = arith.constant 0 : index
    %c0_30 = arith.constant 0 : index
    %c0_31 = arith.constant 0 : index
    %c0_32 = arith.constant 0 : index
    %47 = vector.load %arg5[%c0_29, %c0_30, %c0_31, %c0_32] : memref<2x2x32x16xf32, #tpu.memory_space<vmem>>, vector<1x1x32x16xf32>
    %48 = vector.shape_cast %47 : vector<1x1x32x16xf32> to vector<32x16xf32>
    %cst_33 = arith.constant dense<0.000000e+00> : vector<16x16xf32>
    %49 = tpu.matmul %0, %48, %cst_33 {dimension_numbers = #tpu.dot_dimension_numbers<[1], [0], [0], [1], [0, 0, 1, 1], [], []>} : vector<16x32xf32>, vector<32x16xf32>, vector<16x16xf32> -> vector<16x16xf32>
    %c0_34 = arith.constant 0 : index
    %c0_35 = arith.constant 0 : index
    %c0_36 = arith.constant 0 : index
    %c0_37 = arith.constant 0 : index
    %50 = vector.load %arg8[%c0_34, %c0_35, %c0_36, %c0_37] : memref<2x2x1x16xf32, #tpu.memory_space<vmem>>, vector<1x1x1x16xf32>
    %51 = vector.shape_cast %50 : vector<1x1x1x16xf32> to vector<1x16xf32>
    %52 = vector.broadcast %51 : vector<1x16xf32> to vector<16x16xf32>
    %53 = arith.addf %49, %52 : vector<16x16xf32>
    %c0_38 = arith.constant 0 : index
    %c0_39 = arith.constant 0 : index
    %c0_40 = arith.constant 0 : index
    %c0_41 = arith.constant 0 : index
    %54 = vector.load %arg6[%c0_38, %c0_39, %c0_40, %c0_41] : memref<2x2x32x16xf32, #tpu.memory_space<vmem>>, vector<1x1x32x16xf32>
    %55 = vector.shape_cast %54 : vector<1x1x32x16xf32> to vector<32x16xf32>
    %cst_42 = arith.constant dense<0.000000e+00> : vector<16x16xf32>
    %56 = tpu.matmul %0, %55, %cst_42 {dimension_numbers = #tpu.dot_dimension_numbers<[1], [0], [0], [1], [0, 0, 1, 1], [], []>} : vector<16x32xf32>, vector<32x16xf32>, vector<16x16xf32> -> vector<16x16xf32>
    %c0_43 = arith.constant 0 : index
    %c0_44 = arith.constant 0 : index
    %c0_45 = arith.constant 0 : index
    %c0_46 = arith.constant 0 : index
    %57 = vector.load %arg9[%c0_43, %c0_44, %c0_45, %c0_46] : memref<2x2x1x16xf32, #tpu.memory_space<vmem>>, vector<1x1x1x16xf32>
    %58 = vector.shape_cast %57 : vector<1x1x1x16xf32> to vector<1x16xf32>
    %59 = vector.broadcast %58 : vector<1x16xf32> to vector<16x16xf32>
    %60 = arith.addf %56, %59 : vector<16x16xf32>
    %61 = vector.shape_cast %46 : vector<16x16xf32> to vector<2x8x16xf32>
    %62 = vector.shape_cast %53 : vector<16x16xf32> to vector<2x8x16xf32>
    "tpu.trace_start"() <{level = 10 : i32, message = "bqd,bkd->bqk"}> : () -> ()
    %cst_47 = arith.constant dense<0.000000e+00> : vector<2x8x8xf32>
    %63 = tpu.matmul %61, %62, %cst_47 {dimension_numbers = #tpu.dot_dimension_numbers<[2], [2], [1], [1], [0, 0, 0, 1, 1, 1], [0], [0]>} : vector<2x8x16xf32>, vector<2x8x16xf32>, vector<2x8x8xf32> -> vector<2x8x8xf32>
    "tpu.trace_stop"() : () -> ()
    %64 = vector.broadcast %8 : vector<1x8x8xf32> to vector<2x8x8xf32>
    %65 = arith.addf %63, %64 : vector<2x8x8xf32>
    %cst_48 = arith.constant dense<0xFF800000> : vector<2x8xf32>
    %66 = vector.multi_reduction <maximumf>, %65, %cst_48 [2] : vector<2x8x8xf32> to vector<2x8xf32>
    %67 = vector.shape_cast %66 : vector<2x8xf32> to vector<2x8x1xf32>
    %68 = vector.broadcast %67 : vector<2x8x1xf32> to vector<2x8x8xf32>
    %69 = arith.subf %65, %68 : vector<2x8x8xf32>
    %70 = math.exp %69 : vector<2x8x8xf32>
    %cst_49 = arith.constant dense<0.000000e+00> : vector<2x8xf32>
    %71 = vector.multi_reduction <add>, %70, %cst_49 [2] : vector<2x8x8xf32> to vector<2x8xf32>
    %72 = vector.shape_cast %71 : vector<2x8xf32> to vector<2x8x1xf32>
    %73 = tpu.reciprocal %72 {approx = true} : vector<2x8x1xf32> -> vector<2x8x1xf32>
    %74 = vector.broadcast %73 : vector<2x8x1xf32> to vector<2x8x8xf32>
    %75 = arith.mulf %70, %74 : vector<2x8x8xf32>
    %76 = vector.shape_cast %60 : vector<16x16xf32> to vector<2x8x16xf32>
    "tpu.trace_start"() <{level = 10 : i32, message = "bqk,bkd->bqd"}> : () -> ()
    %cst_50 = arith.constant dense<0.000000e+00> : vector<2x8x16xf32>
    %77 = tpu.matmul %75, %76, %cst_50 {dimension_numbers = #tpu.dot_dimension_numbers<[2], [1], [1], [2], [0, 0, 0, 1, 1, 2], [0], [0]>} : vector<2x8x8xf32>, vector<2x8x16xf32>, vector<2x8x16xf32> -> vector<2x8x16xf32>
    "tpu.trace_stop"() : () -> ()
    %78 = vector.shape_cast %77 : vector<2x8x16xf32> to vector<16x16xf32>
    %c0_51 = arith.constant 0 : index
    %c0_52 = arith.constant 0 : index
    %c0_53 = arith.constant 0 : index
    %c0_54 = arith.constant 0 : index
    %79 = vector.load %arg10[%c0_51, %c0_52, %c0_53, %c0_54] : memref<2x2x16x32xf32, #tpu.memory_space<vmem>>, vector<1x1x16x32xf32>
    %80 = vector.shape_cast %79 : vector<1x1x16x32xf32> to vector<16x32xf32>
    %cst_55 = arith.constant dense<0.000000e+00> : vector<16x32xf32>
    %81 = tpu.matmul %78, %80, %cst_55 {dimension_numbers = #tpu.dot_dimension_numbers<[1], [0], [0], [1], [0, 0, 1, 1], [], []>} : vector<16x16xf32>, vector<16x32xf32>, vector<16x32xf32> -> vector<16x32xf32>
    %82 = arith.addf %37, %81 : vector<16x32xf32>
    %c0_56 = arith.constant 0 : index
    %c1 = arith.constant 1 : index
    %c0_57 = arith.constant 0 : index
    %c0_58 = arith.constant 0 : index
    %83 = vector.load %arg4[%c0_56, %c1, %c0_57, %c0_58] : memref<2x2x32x16xf32, #tpu.memory_space<vmem>>, vector<1x1x32x16xf32>
    %84 = vector.shape_cast %83 : vector<1x1x32x16xf32> to vector<32x16xf32>
    %cst_59 = arith.constant dense<0.000000e+00> : vector<16x16xf32>
    %85 = tpu.matmul %32, %84, %cst_59 {dimension_numbers = #tpu.dot_dimension_numbers<[1], [0], [0], [1], [0, 0, 1, 1], [], []>} : vector<16x32xf32>, vector<32x16xf32>, vector<16x16xf32> -> vector<16x16xf32>
    %c0_60 = arith.constant 0 : index
    %c1_61 = arith.constant 1 : index
    %c0_62 = arith.constant 0 : index
    %c0_63 = arith.constant 0 : index
    %86 = vector.load %arg7[%c0_60, %c1_61, %c0_62, %c0_63] : memref<2x2x1x16xf32, #tpu.memory_space<vmem>>, vector<1x1x1x16xf32>
    %87 = vector.shape_cast %86 : vector<1x1x1x16xf32> to vector<1x16xf32>
    %88 = vector.broadcast %87 : vector<1x16xf32> to vector<16x16xf32>
    %89 = arith.addf %85, %88 : vector<16x16xf32>
    %cst_64 = arith.constant 2.500000e-01 : f32
    %90 = vector.broadcast %cst_64 : f32 to vector<16x16xf32>
    %91 = arith.mulf %89, %90 : vector<16x16xf32>
    %c0_65 = arith.constant 0 : index
    %c1_66 = arith.constant 1 : index
    %c0_67 = arith.constant 0 : index
    %c0_68 = arith.constant 0 : index
    %92 = vector.load %arg5[%c0_65, %c1_66, %c0_67, %c0_68] : memref<2x2x32x16xf32, #tpu.memory_space<vmem>>, vector<1x1x32x16xf32>
    %93 = vector.shape_cast %92 : vector<1x1x32x16xf32> to vector<32x16xf32>
    %cst_69 = arith.constant dense<0.000000e+00> : vector<16x16xf32>
    %94 = tpu.matmul %0, %93, %cst_69 {dimension_numbers = #tpu.dot_dimension_numbers<[1], [0], [0], [1], [0, 0, 1, 1], [], []>} : vector<16x32xf32>, vector<32x16xf32>, vector<16x16xf32> -> vector<16x16xf32>
    %c0_70 = arith.constant 0 : index
    %c1_71 = arith.constant 1 : index
    %c0_72 = arith.constant 0 : index
    %c0_73 = arith.constant 0 : index
    %95 = vector.load %arg8[%c0_70, %c1_71, %c0_72, %c0_73] : memref<2x2x1x16xf32, #tpu.memory_space<vmem>>, vector<1x1x1x16xf32>
    %96 = vector.shape_cast %95 : vector<1x1x1x16xf32> to vector<1x16xf32>
    %97 = vector.broadcast %96 : vector<1x16xf32> to vector<16x16xf32>
    %98 = arith.addf %94, %97 : vector<16x16xf32>
    %c0_74 = arith.constant 0 : index
    %c1_75 = arith.constant 1 : index
    %c0_76 = arith.constant 0 : index
    %c0_77 = arith.constant 0 : index
    %99 = vector.load %arg6[%c0_74, %c1_75, %c0_76, %c0_77] : memref<2x2x32x16xf32, #tpu.memory_space<vmem>>, vector<1x1x32x16xf32>
    %100 = vector.shape_cast %99 : vector<1x1x32x16xf32> to vector<32x16xf32>
    %cst_78 = arith.constant dense<0.000000e+00> : vector<16x16xf32>
    %101 = tpu.matmul %0, %100, %cst_78 {dimension_numbers = #tpu.dot_dimension_numbers<[1], [0], [0], [1], [0, 0, 1, 1], [], []>} : vector<16x32xf32>, vector<32x16xf32>, vector<16x16xf32> -> vector<16x16xf32>
    %c0_79 = arith.constant 0 : index
    %c1_80 = arith.constant 1 : index
    %c0_81 = arith.constant 0 : index
    %c0_82 = arith.constant 0 : index
    %102 = vector.load %arg9[%c0_79, %c1_80, %c0_81, %c0_82] : memref<2x2x1x16xf32, #tpu.memory_space<vmem>>, vector<1x1x1x16xf32>
    %103 = vector.shape_cast %102 : vector<1x1x1x16xf32> to vector<1x16xf32>
    %104 = vector.broadcast %103 : vector<1x16xf32> to vector<16x16xf32>
    %105 = arith.addf %101, %104 : vector<16x16xf32>
    %106 = vector.shape_cast %91 : vector<16x16xf32> to vector<2x8x16xf32>
    %107 = vector.shape_cast %98 : vector<16x16xf32> to vector<2x8x16xf32>
    "tpu.trace_start"() <{level = 10 : i32, message = "bqd,bkd->bqk"}> : () -> ()
    %cst_83 = arith.constant dense<0.000000e+00> : vector<2x8x8xf32>
    %108 = tpu.matmul %106, %107, %cst_83 {dimension_numbers = #tpu.dot_dimension_numbers<[2], [2], [1], [1], [0, 0, 0, 1, 1, 1], [0], [0]>} : vector<2x8x16xf32>, vector<2x8x16xf32>, vector<2x8x8xf32> -> vector<2x8x8xf32>
    "tpu.trace_stop"() : () -> ()
    %109 = vector.broadcast %8 : vector<1x8x8xf32> to vector<2x8x8xf32>
    %110 = arith.addf %108, %109 : vector<2x8x8xf32>
    %cst_84 = arith.constant dense<0xFF800000> : vector<2x8xf32>
    %111 = vector.multi_reduction <maximumf>, %110, %cst_84 [2] : vector<2x8x8xf32> to vector<2x8xf32>
    %112 = vector.shape_cast %111 : vector<2x8xf32> to vector<2x8x1xf32>
    %113 = vector.broadcast %112 : vector<2x8x1xf32> to vector<2x8x8xf32>
    %114 = arith.subf %110, %113 : vector<2x8x8xf32>
    %115 = math.exp %114 : vector<2x8x8xf32>
    %cst_85 = arith.constant dense<0.000000e+00> : vector<2x8xf32>
    %116 = vector.multi_reduction <add>, %115, %cst_85 [2] : vector<2x8x8xf32> to vector<2x8xf32>
    %117 = vector.shape_cast %116 : vector<2x8xf32> to vector<2x8x1xf32>
    %118 = tpu.reciprocal %117 {approx = true} : vector<2x8x1xf32> -> vector<2x8x1xf32>
    %119 = vector.broadcast %118 : vector<2x8x1xf32> to vector<2x8x8xf32>
    %120 = arith.mulf %115, %119 : vector<2x8x8xf32>
    %121 = vector.shape_cast %105 : vector<16x16xf32> to vector<2x8x16xf32>
    "tpu.trace_start"() <{level = 10 : i32, message = "bqk,bkd->bqd"}> : () -> ()
    %cst_86 = arith.constant dense<0.000000e+00> : vector<2x8x16xf32>
    %122 = tpu.matmul %120, %121, %cst_86 {dimension_numbers = #tpu.dot_dimension_numbers<[2], [1], [1], [2], [0, 0, 0, 1, 1, 2], [0], [0]>} : vector<2x8x8xf32>, vector<2x8x16xf32>, vector<2x8x16xf32> -> vector<2x8x16xf32>
    "tpu.trace_stop"() : () -> ()
    %123 = vector.shape_cast %122 : vector<2x8x16xf32> to vector<16x16xf32>
    %c0_87 = arith.constant 0 : index
    %c1_88 = arith.constant 1 : index
    %c0_89 = arith.constant 0 : index
    %c0_90 = arith.constant 0 : index
    %124 = vector.load %arg10[%c0_87, %c1_88, %c0_89, %c0_90] : memref<2x2x16x32xf32, #tpu.memory_space<vmem>>, vector<1x1x16x32xf32>
    %125 = vector.shape_cast %124 : vector<1x1x16x32xf32> to vector<16x32xf32>
    %cst_91 = arith.constant dense<0.000000e+00> : vector<16x32xf32>
    %126 = tpu.matmul %123, %125, %cst_91 {dimension_numbers = #tpu.dot_dimension_numbers<[1], [0], [0], [1], [0, 0, 1, 1], [], []>} : vector<16x16xf32>, vector<16x32xf32>, vector<16x32xf32> -> vector<16x32xf32>
    %127 = arith.addf %82, %126 : vector<16x32xf32>
    %128 = arith.addf %32, %127 : vector<16x32xf32>
    %c0_92 = arith.constant 0 : index
    %c0_93 = arith.constant 0 : index
    %c0_94 = arith.constant 0 : index
    %129 = vector.load %arg12[%c0_92, %c0_93, %c0_94] : memref<2x1x32xf32, #tpu.memory_space<vmem>>, vector<1x1x32xf32>
    %130 = vector.shape_cast %129 : vector<1x1x32xf32> to vector<1x32xf32>
    %c0_95 = arith.constant 0 : index
    %c0_96 = arith.constant 0 : index
    %c0_97 = arith.constant 0 : index
    %131 = vector.load %arg13[%c0_95, %c0_96, %c0_97] : memref<2x1x32xf32, #tpu.memory_space<vmem>>, vector<1x1x32xf32>
    %132 = vector.shape_cast %131 : vector<1x1x32xf32> to vector<1x32xf32>
    %cst_98 = arith.constant dense<0.000000e+00> : vector<16xf32>
    %133 = vector.multi_reduction <add>, %128, %cst_98 [1] : vector<16x32xf32> to vector<16xf32>
    %134 = vector.shape_cast %133 : vector<16xf32> to vector<16x1xf32>
    %cst_99 = arith.constant 3.200000e+01 : f32
    %135 = vector.broadcast %cst_99 : f32 to vector<16x1xf32>
    %136 = arith.divf %134, %135 : vector<16x1xf32>
    %137 = vector.broadcast %136 : vector<16x1xf32> to vector<16x32xf32>
    %138 = arith.subf %128, %137 : vector<16x32xf32>
    %139 = arith.mulf %138, %138 : vector<16x32xf32>
    %cst_100 = arith.constant dense<0.000000e+00> : vector<16xf32>
    %140 = vector.multi_reduction <add>, %139, %cst_100 [1] : vector<16x32xf32> to vector<16xf32>
    %141 = vector.shape_cast %140 : vector<16xf32> to vector<16x1xf32>
    %cst_101 = arith.constant 3.200000e+01 : f32
    %142 = vector.broadcast %cst_101 : f32 to vector<16x1xf32>
    %143 = arith.divf %141, %142 : vector<16x1xf32>
    %cst_102 = arith.constant 9.99999993E-9 : f32
    %144 = vector.broadcast %cst_102 : f32 to vector<16x1xf32>
    %145 = arith.addf %143, %144 : vector<16x1xf32>
    %146 = math.rsqrt %145 : vector<16x1xf32>
    %147 = vector.broadcast %146 : vector<16x1xf32> to vector<16x32xf32>
    %148 = arith.mulf %138, %147 : vector<16x32xf32>
    %149 = vector.broadcast %130 : vector<1x32xf32> to vector<16x32xf32>
    %150 = arith.mulf %148, %149 : vector<16x32xf32>
    %151 = vector.broadcast %132 : vector<1x32xf32> to vector<16x32xf32>
    %152 = arith.addf %150, %151 : vector<16x32xf32>
    %c0_103 = arith.constant 0 : index
    %c0_104 = arith.constant 0 : index
    %c0_105 = arith.constant 0 : index
    %153 = vector.load %arg14[%c0_103, %c0_104, %c0_105] : memref<2x32x32xf32, #tpu.memory_space<vmem>>, vector<1x32x32xf32>
    %154 = vector.shape_cast %153 : vector<1x32x32xf32> to vector<32x32xf32>
    %cst_106 = arith.constant dense<0.000000e+00> : vector<16x32xf32>
    %155 = tpu.matmul %152, %154, %cst_106 {dimension_numbers = #tpu.dot_dimension_numbers<[1], [0], [0], [1], [0, 0, 1, 1], [], []>} : vector<16x32xf32>, vector<32x32xf32>, vector<16x32xf32> -> vector<16x32xf32>
    %c0_107 = arith.constant 0 : index
    %c0_108 = arith.constant 0 : index
    %c0_109 = arith.constant 0 : index
    %156 = vector.load %arg15[%c0_107, %c0_108, %c0_109] : memref<2x1x32xf32, #tpu.memory_space<vmem>>, vector<1x1x32xf32>
    %157 = vector.shape_cast %156 : vector<1x1x32xf32> to vector<1x32xf32>
    %158 = vector.broadcast %157 : vector<1x32xf32> to vector<16x32xf32>
    %159 = arith.addf %155, %158 : vector<16x32xf32>
    %cst_110 = arith.constant 0.000000e+00 : f32
    %160 = vector.broadcast %cst_110 : f32 to vector<16x32xf32>
    %161 = arith.maximumf %159, %160 : vector<16x32xf32>
    %c0_111 = arith.constant 0 : index
    %c0_112 = arith.constant 0 : index
    %c0_113 = arith.constant 0 : index
    %162 = vector.load %arg16[%c0_111, %c0_112, %c0_113] : memref<2x32x32xf32, #tpu.memory_space<vmem>>, vector<1x32x32xf32>
    %163 = vector.shape_cast %162 : vector<1x32x32xf32> to vector<32x32xf32>
    %cst_114 = arith.constant dense<0.000000e+00> : vector<16x32xf32>
    %164 = tpu.matmul %161, %163, %cst_114 {dimension_numbers = #tpu.dot_dimension_numbers<[1], [0], [0], [1], [0, 0, 1, 1], [], []>} : vector<16x32xf32>, vector<32x32xf32>, vector<16x32xf32> -> vector<16x32xf32>
    %c0_115 = arith.constant 0 : index
    %c0_116 = arith.constant 0 : index
    %c0_117 = arith.constant 0 : index
    %165 = vector.load %arg17[%c0_115, %c0_116, %c0_117] : memref<2x1x32xf32, #tpu.memory_space<vmem>>, vector<1x1x32xf32>
    %166 = vector.shape_cast %165 : vector<1x1x32xf32> to vector<1x32xf32>
    %167 = vector.broadcast %166 : vector<1x32xf32> to vector<16x32xf32>
    %168 = arith.addf %164, %167 : vector<16x32xf32>
    %169 = arith.addf %168, %152 : vector<16x32xf32>
    %170 = vector.broadcast %1 : vector<16x1xf32> to vector<16x32xf32>
    %171 = arith.mulf %169, %170 : vector<16x32xf32>
    %c1_118 = arith.constant 1 : index
    %c0_119 = arith.constant 0 : index
    %c0_120 = arith.constant 0 : index
    %172 = vector.load %arg2[%c1_118, %c0_119, %c0_120] : memref<2x1x32xf32, #tpu.memory_space<vmem>>, vector<1x1x32xf32>
    %173 = vector.shape_cast %172 : vector<1x1x32xf32> to vector<1x32xf32>
    %c1_121 = arith.constant 1 : index
    %c0_122 = arith.constant 0 : index
    %c0_123 = arith.constant 0 : index
    %174 = vector.load %arg3[%c1_121, %c0_122, %c0_123] : memref<2x1x32xf32, #tpu.memory_space<vmem>>, vector<1x1x32xf32>
    %175 = vector.shape_cast %174 : vector<1x1x32xf32> to vector<1x32xf32>
    %cst_124 = arith.constant dense<0.000000e+00> : vector<16xf32>
    %176 = vector.multi_reduction <add>, %171, %cst_124 [1] : vector<16x32xf32> to vector<16xf32>
    %177 = vector.shape_cast %176 : vector<16xf32> to vector<16x1xf32>
    %cst_125 = arith.constant 3.200000e+01 : f32
    %178 = vector.broadcast %cst_125 : f32 to vector<16x1xf32>
    %179 = arith.divf %177, %178 : vector<16x1xf32>
    %180 = vector.broadcast %179 : vector<16x1xf32> to vector<16x32xf32>
    %181 = arith.subf %171, %180 : vector<16x32xf32>
    %182 = arith.mulf %181, %181 : vector<16x32xf32>
    %cst_126 = arith.constant dense<0.000000e+00> : vector<16xf32>
    %183 = vector.multi_reduction <add>, %182, %cst_126 [1] : vector<16x32xf32> to vector<16xf32>
    %184 = vector.shape_cast %183 : vector<16xf32> to vector<16x1xf32>
    %cst_127 = arith.constant 3.200000e+01 : f32
    %185 = vector.broadcast %cst_127 : f32 to vector<16x1xf32>
    %186 = arith.divf %184, %185 : vector<16x1xf32>
    %cst_128 = arith.constant 9.99999993E-9 : f32
    %187 = vector.broadcast %cst_128 : f32 to vector<16x1xf32>
    %188 = arith.addf %186, %187 : vector<16x1xf32>
    %189 = math.rsqrt %188 : vector<16x1xf32>
    %190 = vector.broadcast %189 : vector<16x1xf32> to vector<16x32xf32>
    %191 = arith.mulf %181, %190 : vector<16x32xf32>
    %192 = vector.broadcast %173 : vector<1x32xf32> to vector<16x32xf32>
    %193 = arith.mulf %191, %192 : vector<16x32xf32>
    %194 = vector.broadcast %175 : vector<1x32xf32> to vector<16x32xf32>
    %195 = arith.addf %193, %194 : vector<16x32xf32>
    %cst_129 = arith.constant 0.000000e+00 : f32
    %196 = vector.broadcast %cst_129 : f32 to vector<16x32xf32>
    %c1_130 = arith.constant 1 : index
    %c0_131 = arith.constant 0 : index
    %c0_132 = arith.constant 0 : index
    %197 = vector.load %arg11[%c1_130, %c0_131, %c0_132] : memref<2x1x32xf32, #tpu.memory_space<vmem>>, vector<1x1x32xf32>
    %198 = vector.shape_cast %197 : vector<1x1x32xf32> to vector<1x32xf32>
    %199 = vector.broadcast %198 : vector<1x32xf32> to vector<16x32xf32>
    %200 = arith.addf %196, %199 : vector<16x32xf32>
    %c1_133 = arith.constant 1 : index
    %c0_134 = arith.constant 0 : index
    %c0_135 = arith.constant 0 : index
    %c0_136 = arith.constant 0 : index
    %201 = vector.load %arg4[%c1_133, %c0_134, %c0_135, %c0_136] : memref<2x2x32x16xf32, #tpu.memory_space<vmem>>, vector<1x1x32x16xf32>
    %202 = vector.shape_cast %201 : vector<1x1x32x16xf32> to vector<32x16xf32>
    %cst_137 = arith.constant dense<0.000000e+00> : vector<16x16xf32>
    %203 = tpu.matmul %195, %202, %cst_137 {dimension_numbers = #tpu.dot_dimension_numbers<[1], [0], [0], [1], [0, 0, 1, 1], [], []>} : vector<16x32xf32>, vector<32x16xf32>, vector<16x16xf32> -> vector<16x16xf32>
    %c1_138 = arith.constant 1 : index
    %c0_139 = arith.constant 0 : index
    %c0_140 = arith.constant 0 : index
    %c0_141 = arith.constant 0 : index
    %204 = vector.load %arg7[%c1_138, %c0_139, %c0_140, %c0_141] : memref<2x2x1x16xf32, #tpu.memory_space<vmem>>, vector<1x1x1x16xf32>
    %205 = vector.shape_cast %204 : vector<1x1x1x16xf32> to vector<1x16xf32>
    %206 = vector.broadcast %205 : vector<1x16xf32> to vector<16x16xf32>
    %207 = arith.addf %203, %206 : vector<16x16xf32>
    %cst_142 = arith.constant 2.500000e-01 : f32
    %208 = vector.broadcast %cst_142 : f32 to vector<16x16xf32>
    %209 = arith.mulf %207, %208 : vector<16x16xf32>
    %c1_143 = arith.constant 1 : index
    %c0_144 = arith.constant 0 : index
    %c0_145 = arith.constant 0 : index
    %c0_146 = arith.constant 0 : index
    %210 = vector.load %arg5[%c1_143, %c0_144, %c0_145, %c0_146] : memref<2x2x32x16xf32, #tpu.memory_space<vmem>>, vector<1x1x32x16xf32>
    %211 = vector.shape_cast %210 : vector<1x1x32x16xf32> to vector<32x16xf32>
    %cst_147 = arith.constant dense<0.000000e+00> : vector<16x16xf32>
    %212 = tpu.matmul %171, %211, %cst_147 {dimension_numbers = #tpu.dot_dimension_numbers<[1], [0], [0], [1], [0, 0, 1, 1], [], []>} : vector<16x32xf32>, vector<32x16xf32>, vector<16x16xf32> -> vector<16x16xf32>
    %c1_148 = arith.constant 1 : index
    %c0_149 = arith.constant 0 : index
    %c0_150 = arith.constant 0 : index
    %c0_151 = arith.constant 0 : index
    %213 = vector.load %arg8[%c1_148, %c0_149, %c0_150, %c0_151] : memref<2x2x1x16xf32, #tpu.memory_space<vmem>>, vector<1x1x1x16xf32>
    %214 = vector.shape_cast %213 : vector<1x1x1x16xf32> to vector<1x16xf32>
    %215 = vector.broadcast %214 : vector<1x16xf32> to vector<16x16xf32>
    %216 = arith.addf %212, %215 : vector<16x16xf32>
    %c1_152 = arith.constant 1 : index
    %c0_153 = arith.constant 0 : index
    %c0_154 = arith.constant 0 : index
    %c0_155 = arith.constant 0 : index
    %217 = vector.load %arg6[%c1_152, %c0_153, %c0_154, %c0_155] : memref<2x2x32x16xf32, #tpu.memory_space<vmem>>, vector<1x1x32x16xf32>
    %218 = vector.shape_cast %217 : vector<1x1x32x16xf32> to vector<32x16xf32>
    %cst_156 = arith.constant dense<0.000000e+00> : vector<16x16xf32>
    %219 = tpu.matmul %171, %218, %cst_156 {dimension_numbers = #tpu.dot_dimension_numbers<[1], [0], [0], [1], [0, 0, 1, 1], [], []>} : vector<16x32xf32>, vector<32x16xf32>, vector<16x16xf32> -> vector<16x16xf32>
    %c1_157 = arith.constant 1 : index
    %c0_158 = arith.constant 0 : index
    %c0_159 = arith.constant 0 : index
    %c0_160 = arith.constant 0 : index
    %220 = vector.load %arg9[%c1_157, %c0_158, %c0_159, %c0_160] : memref<2x2x1x16xf32, #tpu.memory_space<vmem>>, vector<1x1x1x16xf32>
    %221 = vector.shape_cast %220 : vector<1x1x1x16xf32> to vector<1x16xf32>
    %222 = vector.broadcast %221 : vector<1x16xf32> to vector<16x16xf32>
    %223 = arith.addf %219, %222 : vector<16x16xf32>
    %224 = vector.shape_cast %209 : vector<16x16xf32> to vector<2x8x16xf32>
    %225 = vector.shape_cast %216 : vector<16x16xf32> to vector<2x8x16xf32>
    "tpu.trace_start"() <{level = 10 : i32, message = "bqd,bkd->bqk"}> : () -> ()
    %cst_161 = arith.constant dense<0.000000e+00> : vector<2x8x8xf32>
    %226 = tpu.matmul %224, %225, %cst_161 {dimension_numbers = #tpu.dot_dimension_numbers<[2], [2], [1], [1], [0, 0, 0, 1, 1, 1], [0], [0]>} : vector<2x8x16xf32>, vector<2x8x16xf32>, vector<2x8x8xf32> -> vector<2x8x8xf32>
    "tpu.trace_stop"() : () -> ()
    %227 = vector.broadcast %8 : vector<1x8x8xf32> to vector<2x8x8xf32>
    %228 = arith.addf %226, %227 : vector<2x8x8xf32>
    %cst_162 = arith.constant dense<0xFF800000> : vector<2x8xf32>
    %229 = vector.multi_reduction <maximumf>, %228, %cst_162 [2] : vector<2x8x8xf32> to vector<2x8xf32>
    %230 = vector.shape_cast %229 : vector<2x8xf32> to vector<2x8x1xf32>
    %231 = vector.broadcast %230 : vector<2x8x1xf32> to vector<2x8x8xf32>
    %232 = arith.subf %228, %231 : vector<2x8x8xf32>
    %233 = math.exp %232 : vector<2x8x8xf32>
    %cst_163 = arith.constant dense<0.000000e+00> : vector<2x8xf32>
    %234 = vector.multi_reduction <add>, %233, %cst_163 [2] : vector<2x8x8xf32> to vector<2x8xf32>
    %235 = vector.shape_cast %234 : vector<2x8xf32> to vector<2x8x1xf32>
    %236 = tpu.reciprocal %235 {approx = true} : vector<2x8x1xf32> -> vector<2x8x1xf32>
    %237 = vector.broadcast %236 : vector<2x8x1xf32> to vector<2x8x8xf32>
    %238 = arith.mulf %233, %237 : vector<2x8x8xf32>
    %239 = vector.shape_cast %223 : vector<16x16xf32> to vector<2x8x16xf32>
    "tpu.trace_start"() <{level = 10 : i32, message = "bqk,bkd->bqd"}> : () -> ()
    %cst_164 = arith.constant dense<0.000000e+00> : vector<2x8x16xf32>
    %240 = tpu.matmul %238, %239, %cst_164 {dimension_numbers = #tpu.dot_dimension_numbers<[2], [1], [1], [2], [0, 0, 0, 1, 1, 2], [0], [0]>} : vector<2x8x8xf32>, vector<2x8x16xf32>, vector<2x8x16xf32> -> vector<2x8x16xf32>
    "tpu.trace_stop"() : () -> ()
    %241 = vector.shape_cast %240 : vector<2x8x16xf32> to vector<16x16xf32>
    %c1_165 = arith.constant 1 : index
    %c0_166 = arith.constant 0 : index
    %c0_167 = arith.constant 0 : index
    %c0_168 = arith.constant 0 : index
    %242 = vector.load %arg10[%c1_165, %c0_166, %c0_167, %c0_168] : memref<2x2x16x32xf32, #tpu.memory_space<vmem>>, vector<1x1x16x32xf32>
    %243 = vector.shape_cast %242 : vector<1x1x16x32xf32> to vector<16x32xf32>
    %cst_169 = arith.constant dense<0.000000e+00> : vector<16x32xf32>
    %244 = tpu.matmul %241, %243, %cst_169 {dimension_numbers = #tpu.dot_dimension_numbers<[1], [0], [0], [1], [0, 0, 1, 1], [], []>} : vector<16x16xf32>, vector<16x32xf32>, vector<16x32xf32> -> vector<16x32xf32>
    %245 = arith.addf %200, %244 : vector<16x32xf32>
    %c1_170 = arith.constant 1 : index
    %c1_171 = arith.constant 1 : index
    %c0_172 = arith.constant 0 : index
    %c0_173 = arith.constant 0 : index
    %246 = vector.load %arg4[%c1_170, %c1_171, %c0_172, %c0_173] : memref<2x2x32x16xf32, #tpu.memory_space<vmem>>, vector<1x1x32x16xf32>
    %247 = vector.shape_cast %246 : vector<1x1x32x16xf32> to vector<32x16xf32>
    %cst_174 = arith.constant dense<0.000000e+00> : vector<16x16xf32>
    %248 = tpu.matmul %195, %247, %cst_174 {dimension_numbers = #tpu.dot_dimension_numbers<[1], [0], [0], [1], [0, 0, 1, 1], [], []>} : vector<16x32xf32>, vector<32x16xf32>, vector<16x16xf32> -> vector<16x16xf32>
    %c1_175 = arith.constant 1 : index
    %c1_176 = arith.constant 1 : index
    %c0_177 = arith.constant 0 : index
    %c0_178 = arith.constant 0 : index
    %249 = vector.load %arg7[%c1_175, %c1_176, %c0_177, %c0_178] : memref<2x2x1x16xf32, #tpu.memory_space<vmem>>, vector<1x1x1x16xf32>
    %250 = vector.shape_cast %249 : vector<1x1x1x16xf32> to vector<1x16xf32>
    %251 = vector.broadcast %250 : vector<1x16xf32> to vector<16x16xf32>
    %252 = arith.addf %248, %251 : vector<16x16xf32>
    %cst_179 = arith.constant 2.500000e-01 : f32
    %253 = vector.broadcast %cst_179 : f32 to vector<16x16xf32>
    %254 = arith.mulf %252, %253 : vector<16x16xf32>
    %c1_180 = arith.constant 1 : index
    %c1_181 = arith.constant 1 : index
    %c0_182 = arith.constant 0 : index
    %c0_183 = arith.constant 0 : index
    %255 = vector.load %arg5[%c1_180, %c1_181, %c0_182, %c0_183] : memref<2x2x32x16xf32, #tpu.memory_space<vmem>>, vector<1x1x32x16xf32>
    %256 = vector.shape_cast %255 : vector<1x1x32x16xf32> to vector<32x16xf32>
    %cst_184 = arith.constant dense<0.000000e+00> : vector<16x16xf32>
    %257 = tpu.matmul %171, %256, %cst_184 {dimension_numbers = #tpu.dot_dimension_numbers<[1], [0], [0], [1], [0, 0, 1, 1], [], []>} : vector<16x32xf32>, vector<32x16xf32>, vector<16x16xf32> -> vector<16x16xf32>
    %c1_185 = arith.constant 1 : index
    %c1_186 = arith.constant 1 : index
    %c0_187 = arith.constant 0 : index
    %c0_188 = arith.constant 0 : index
    %258 = vector.load %arg8[%c1_185, %c1_186, %c0_187, %c0_188] : memref<2x2x1x16xf32, #tpu.memory_space<vmem>>, vector<1x1x1x16xf32>
    %259 = vector.shape_cast %258 : vector<1x1x1x16xf32> to vector<1x16xf32>
    %260 = vector.broadcast %259 : vector<1x16xf32> to vector<16x16xf32>
    %261 = arith.addf %257, %260 : vector<16x16xf32>
    %c1_189 = arith.constant 1 : index
    %c1_190 = arith.constant 1 : index
    %c0_191 = arith.constant 0 : index
    %c0_192 = arith.constant 0 : index
    %262 = vector.load %arg6[%c1_189, %c1_190, %c0_191, %c0_192] : memref<2x2x32x16xf32, #tpu.memory_space<vmem>>, vector<1x1x32x16xf32>
    %263 = vector.shape_cast %262 : vector<1x1x32x16xf32> to vector<32x16xf32>
    %cst_193 = arith.constant dense<0.000000e+00> : vector<16x16xf32>
    %264 = tpu.matmul %171, %263, %cst_193 {dimension_numbers = #tpu.dot_dimension_numbers<[1], [0], [0], [1], [0, 0, 1, 1], [], []>} : vector<16x32xf32>, vector<32x16xf32>, vector<16x16xf32> -> vector<16x16xf32>
    %c1_194 = arith.constant 1 : index
    %c1_195 = arith.constant 1 : index
    %c0_196 = arith.constant 0 : index
    %c0_197 = arith.constant 0 : index
    %265 = vector.load %arg9[%c1_194, %c1_195, %c0_196, %c0_197] : memref<2x2x1x16xf32, #tpu.memory_space<vmem>>, vector<1x1x1x16xf32>
    %266 = vector.shape_cast %265 : vector<1x1x1x16xf32> to vector<1x16xf32>
    %267 = vector.broadcast %266 : vector<1x16xf32> to vector<16x16xf32>
    %268 = arith.addf %264, %267 : vector<16x16xf32>
    %269 = vector.shape_cast %254 : vector<16x16xf32> to vector<2x8x16xf32>
    %270 = vector.shape_cast %261 : vector<16x16xf32> to vector<2x8x16xf32>
    "tpu.trace_start"() <{level = 10 : i32, message = "bqd,bkd->bqk"}> : () -> ()
    %cst_198 = arith.constant dense<0.000000e+00> : vector<2x8x8xf32>
    %271 = tpu.matmul %269, %270, %cst_198 {dimension_numbers = #tpu.dot_dimension_numbers<[2], [2], [1], [1], [0, 0, 0, 1, 1, 1], [0], [0]>} : vector<2x8x16xf32>, vector<2x8x16xf32>, vector<2x8x8xf32> -> vector<2x8x8xf32>
    "tpu.trace_stop"() : () -> ()
    %272 = vector.broadcast %8 : vector<1x8x8xf32> to vector<2x8x8xf32>
    %273 = arith.addf %271, %272 : vector<2x8x8xf32>
    %cst_199 = arith.constant dense<0xFF800000> : vector<2x8xf32>
    %274 = vector.multi_reduction <maximumf>, %273, %cst_199 [2] : vector<2x8x8xf32> to vector<2x8xf32>
    %275 = vector.shape_cast %274 : vector<2x8xf32> to vector<2x8x1xf32>
    %276 = vector.broadcast %275 : vector<2x8x1xf32> to vector<2x8x8xf32>
    %277 = arith.subf %273, %276 : vector<2x8x8xf32>
    %278 = math.exp %277 : vector<2x8x8xf32>
    %cst_200 = arith.constant dense<0.000000e+00> : vector<2x8xf32>
    %279 = vector.multi_reduction <add>, %278, %cst_200 [2] : vector<2x8x8xf32> to vector<2x8xf32>
    %280 = vector.shape_cast %279 : vector<2x8xf32> to vector<2x8x1xf32>
    %281 = tpu.reciprocal %280 {approx = true} : vector<2x8x1xf32> -> vector<2x8x1xf32>
    %282 = vector.broadcast %281 : vector<2x8x1xf32> to vector<2x8x8xf32>
    %283 = arith.mulf %278, %282 : vector<2x8x8xf32>
    %284 = vector.shape_cast %268 : vector<16x16xf32> to vector<2x8x16xf32>
    "tpu.trace_start"() <{level = 10 : i32, message = "bqk,bkd->bqd"}> : () -> ()
    %cst_201 = arith.constant dense<0.000000e+00> : vector<2x8x16xf32>
    %285 = tpu.matmul %283, %284, %cst_201 {dimension_numbers = #tpu.dot_dimension_numbers<[2], [1], [1], [2], [0, 0, 0, 1, 1, 2], [0], [0]>} : vector<2x8x8xf32>, vector<2x8x16xf32>, vector<2x8x16xf32> -> vector<2x8x16xf32>
    "tpu.trace_stop"() : () -> ()
    %286 = vector.shape_cast %285 : vector<2x8x16xf32> to vector<16x16xf32>
    %c1_202 = arith.constant 1 : index
    %c1_203 = arith.constant 1 : index
    %c0_204 = arith.constant 0 : index
    %c0_205 = arith.constant 0 : index
    %287 = vector.load %arg10[%c1_202, %c1_203, %c0_204, %c0_205] : memref<2x2x16x32xf32, #tpu.memory_space<vmem>>, vector<1x1x16x32xf32>
    %288 = vector.shape_cast %287 : vector<1x1x16x32xf32> to vector<16x32xf32>
    %cst_206 = arith.constant dense<0.000000e+00> : vector<16x32xf32>
    %289 = tpu.matmul %286, %288, %cst_206 {dimension_numbers = #tpu.dot_dimension_numbers<[1], [0], [0], [1], [0, 0, 1, 1], [], []>} : vector<16x16xf32>, vector<16x32xf32>, vector<16x32xf32> -> vector<16x32xf32>
    %290 = arith.addf %245, %289 : vector<16x32xf32>
    %291 = arith.addf %195, %290 : vector<16x32xf32>
    %c1_207 = arith.constant 1 : index
    %c0_208 = arith.constant 0 : index
    %c0_209 = arith.constant 0 : index
    %292 = vector.load %arg12[%c1_207, %c0_208, %c0_209] : memref<2x1x32xf32, #tpu.memory_space<vmem>>, vector<1x1x32xf32>
    %293 = vector.shape_cast %292 : vector<1x1x32xf32> to vector<1x32xf32>
    %c1_210 = arith.constant 1 : index
    %c0_211 = arith.constant 0 : index
    %c0_212 = arith.constant 0 : index
    %294 = vector.load %arg13[%c1_210, %c0_211, %c0_212] : memref<2x1x32xf32, #tpu.memory_space<vmem>>, vector<1x1x32xf32>
    %295 = vector.shape_cast %294 : vector<1x1x32xf32> to vector<1x32xf32>
    %cst_213 = arith.constant dense<0.000000e+00> : vector<16xf32>
    %296 = vector.multi_reduction <add>, %291, %cst_213 [1] : vector<16x32xf32> to vector<16xf32>
    %297 = vector.shape_cast %296 : vector<16xf32> to vector<16x1xf32>
    %cst_214 = arith.constant 3.200000e+01 : f32
    %298 = vector.broadcast %cst_214 : f32 to vector<16x1xf32>
    %299 = arith.divf %297, %298 : vector<16x1xf32>
    %300 = vector.broadcast %299 : vector<16x1xf32> to vector<16x32xf32>
    %301 = arith.subf %291, %300 : vector<16x32xf32>
    %302 = arith.mulf %301, %301 : vector<16x32xf32>
    %cst_215 = arith.constant dense<0.000000e+00> : vector<16xf32>
    %303 = vector.multi_reduction <add>, %302, %cst_215 [1] : vector<16x32xf32> to vector<16xf32>
    %304 = vector.shape_cast %303 : vector<16xf32> to vector<16x1xf32>
    %cst_216 = arith.constant 3.200000e+01 : f32
    %305 = vector.broadcast %cst_216 : f32 to vector<16x1xf32>
    %306 = arith.divf %304, %305 : vector<16x1xf32>
    %cst_217 = arith.constant 9.99999993E-9 : f32
    %307 = vector.broadcast %cst_217 : f32 to vector<16x1xf32>
    %308 = arith.addf %306, %307 : vector<16x1xf32>
    %309 = math.rsqrt %308 : vector<16x1xf32>
    %310 = vector.broadcast %309 : vector<16x1xf32> to vector<16x32xf32>
    %311 = arith.mulf %301, %310 : vector<16x32xf32>
    %312 = vector.broadcast %293 : vector<1x32xf32> to vector<16x32xf32>
    %313 = arith.mulf %311, %312 : vector<16x32xf32>
    %314 = vector.broadcast %295 : vector<1x32xf32> to vector<16x32xf32>
    %315 = arith.addf %313, %314 : vector<16x32xf32>
    %c1_218 = arith.constant 1 : index
    %c0_219 = arith.constant 0 : index
    %c0_220 = arith.constant 0 : index
    %316 = vector.load %arg14[%c1_218, %c0_219, %c0_220] : memref<2x32x32xf32, #tpu.memory_space<vmem>>, vector<1x32x32xf32>
    %317 = vector.shape_cast %316 : vector<1x32x32xf32> to vector<32x32xf32>
    %cst_221 = arith.constant dense<0.000000e+00> : vector<16x32xf32>
    %318 = tpu.matmul %315, %317, %cst_221 {dimension_numbers = #tpu.dot_dimension_numbers<[1], [0], [0], [1], [0, 0, 1, 1], [], []>} : vector<16x32xf32>, vector<32x32xf32>, vector<16x32xf32> -> vector<16x32xf32>
    %c1_222 = arith.constant 1 : index
    %c0_223 = arith.constant 0 : index
    %c0_224 = arith.constant 0 : index
    %319 = vector.load %arg15[%c1_222, %c0_223, %c0_224] : memref<2x1x32xf32, #tpu.memory_space<vmem>>, vector<1x1x32xf32>
    %320 = vector.shape_cast %319 : vector<1x1x32xf32> to vector<1x32xf32>
    %321 = vector.broadcast %320 : vector<1x32xf32> to vector<16x32xf32>
    %322 = arith.addf %318, %321 : vector<16x32xf32>
    %cst_225 = arith.constant 0.000000e+00 : f32
    %323 = vector.broadcast %cst_225 : f32 to vector<16x32xf32>
    %324 = arith.maximumf %322, %323 : vector<16x32xf32>
    %c1_226 = arith.constant 1 : index
    %c0_227 = arith.constant 0 : index
    %c0_228 = arith.constant 0 : index
    %325 = vector.load %arg16[%c1_226, %c0_227, %c0_228] : memref<2x32x32xf32, #tpu.memory_space<vmem>>, vector<1x32x32xf32>
    %326 = vector.shape_cast %325 : vector<1x32x32xf32> to vector<32x32xf32>
    %cst_229 = arith.constant dense<0.000000e+00> : vector<16x32xf32>
    %327 = tpu.matmul %324, %326, %cst_229 {dimension_numbers = #tpu.dot_dimension_numbers<[1], [0], [0], [1], [0, 0, 1, 1], [], []>} : vector<16x32xf32>, vector<32x32xf32>, vector<16x32xf32> -> vector<16x32xf32>
    %c1_230 = arith.constant 1 : index
    %c0_231 = arith.constant 0 : index
    %c0_232 = arith.constant 0 : index
    %328 = vector.load %arg17[%c1_230, %c0_231, %c0_232] : memref<2x1x32xf32, #tpu.memory_space<vmem>>, vector<1x1x32xf32>
    %329 = vector.shape_cast %328 : vector<1x1x32xf32> to vector<1x32xf32>
    %330 = vector.broadcast %329 : vector<1x32xf32> to vector<16x32xf32>
    %331 = arith.addf %327, %330 : vector<16x32xf32>
    %332 = arith.addf %331, %315 : vector<16x32xf32>
    %333 = vector.broadcast %1 : vector<16x1xf32> to vector<16x32xf32>
    %334 = arith.mulf %332, %333 : vector<16x32xf32>
    %c0_233 = arith.constant 0 : index
    %c0_234 = arith.constant 0 : index
    %335 = vector.load %arg18[%c0_233, %c0_234] : memref<1x32xf32, #tpu.memory_space<vmem>>, vector<1x32xf32>
    %c0_235 = arith.constant 0 : index
    %c0_236 = arith.constant 0 : index
    %336 = vector.load %arg19[%c0_235, %c0_236] : memref<1x32xf32, #tpu.memory_space<vmem>>, vector<1x32xf32>
    %cst_237 = arith.constant dense<0.000000e+00> : vector<16xf32>
    %337 = vector.multi_reduction <add>, %334, %cst_237 [1] : vector<16x32xf32> to vector<16xf32>
    %338 = vector.shape_cast %337 : vector<16xf32> to vector<16x1xf32>
    %cst_238 = arith.constant 3.200000e+01 : f32
    %339 = vector.broadcast %cst_238 : f32 to vector<16x1xf32>
    %340 = arith.divf %338, %339 : vector<16x1xf32>
    %341 = vector.broadcast %340 : vector<16x1xf32> to vector<16x32xf32>
    %342 = arith.subf %334, %341 : vector<16x32xf32>
    %343 = arith.mulf %342, %342 : vector<16x32xf32>
    %cst_239 = arith.constant dense<0.000000e+00> : vector<16xf32>
    %344 = vector.multi_reduction <add>, %343, %cst_239 [1] : vector<16x32xf32> to vector<16xf32>
    %345 = vector.shape_cast %344 : vector<16xf32> to vector<16x1xf32>
    %cst_240 = arith.constant 3.200000e+01 : f32
    %346 = vector.broadcast %cst_240 : f32 to vector<16x1xf32>
    %347 = arith.divf %345, %346 : vector<16x1xf32>
    %cst_241 = arith.constant 9.99999993E-9 : f32
    %348 = vector.broadcast %cst_241 : f32 to vector<16x1xf32>
    %349 = arith.addf %347, %348 : vector<16x1xf32>
    %350 = math.rsqrt %349 : vector<16x1xf32>
    %351 = vector.broadcast %350 : vector<16x1xf32> to vector<16x32xf32>
    %352 = arith.mulf %342, %351 : vector<16x32xf32>
    %353 = vector.broadcast %335 : vector<1x32xf32> to vector<16x32xf32>
    %354 = arith.mulf %352, %353 : vector<16x32xf32>
    %355 = vector.broadcast %336 : vector<1x32xf32> to vector<16x32xf32>
    %356 = arith.addf %354, %355 : vector<16x32xf32>
    %c0_242 = arith.constant 0 : index
    %c0_243 = arith.constant 0 : index
    %c0_244 = arith.constant 0 : index
    %357 = vector.load %arg20[%c0_242, %c0_243, %c0_244] : memref<16x4x32xf32, #tpu.memory_space<vmem>>, vector<16x4x32xf32>
    %358 = vector.shape_cast %356 : vector<16x32xf32> to vector<16x1x32xf32>
    %359 = vector.broadcast %358 : vector<16x1x32xf32> to vector<16x4x32xf32>
    %360 = arith.mulf %359, %357 : vector<16x4x32xf32>
    %cst_245 = arith.constant dense<0.000000e+00> : vector<16x4xf32>
    %361 = vector.multi_reduction <add>, %360, %cst_245 [2] : vector<16x4x32xf32> to vector<16x4xf32>
    %c0_246 = arith.constant 0 : index
    %c0_247 = arith.constant 0 : index
    %362 = vector.load %arg21[%c0_246, %c0_247] : memref<16x4xf32, #tpu.memory_space<vmem>>, vector<16x4xf32>
    tpu.vector_store %arg21[%c0_246, %c0_247], %361 {strides = array<i32>} : memref<16x4xf32, #tpu.memory_space<vmem>>, vector<16x4xf32>,
    return
  }
}

</mosaic_0001>

<llo_original>
// kernel: sasrec_forward.1
$region0: #{sasrec_forward.1}
  #allocation0 [shape = 'u32[]', space=smem, size = 0x4, offset = 0x4, fixed_abs, tag = 'smem constant byte address 0x4 - core index']
  #allocation1 [shape = 'u32[144,128]{1,0:T(1,128)}', space=vmem, size = 0x12000, scoped, tag = 'internal scratch']
  %s0 = inlined_call_operand.vmem [shape: f32[16,32], index: 0, kind: input, shape index: {}]
  %s1 = inlined_call_operand.vmem [shape: f32[16,1], index: 1, kind: input, shape index: {}]
  %s2 = inlined_call_operand.vmem [shape: f32[2,1,32], index: 2, kind: input, shape index: {}]
  %s3 = inlined_call_operand.vmem [shape: f32[2,1,32], index: 3, kind: input, shape index: {}]
  %s4 = inlined_call_operand.vmem [shape: f32[2,2,32,16], index: 4, kind: input, shape index: {}]
  %s5 = inlined_call_operand.vmem [shape: f32[2,2,32,16], index: 5, kind: input, shape index: {}]
  %s6 = inlined_call_operand.vmem [shape: f32[2,2,32,16], index: 6, kind: input, shape index: {}]
  %s7 = inlined_call_operand.vmem [shape: f32[2,2,1,16], index: 7, kind: input, shape index: {}]
  %s8 = inlined_call_operand.vmem [shape: f32[2,2,1,16], index: 8, kind: input, shape index: {}]
  %s9 = inlined_call_operand.vmem [shape: f32[2,2,1,16], index: 9, kind: input, shape index: {}]
  %s10 = inlined_call_operand.vmem [shape: f32[2,2,16,32], index: 10, kind: input, shape index: {}]
  %s11 = inlined_call_operand.vmem [shape: f32[2,1,32], index: 11, kind: input, shape index: {}]
  %s12 = inlined_call_operand.vmem [shape: f32[2,1,32], index: 12, kind: input, shape index: {}]
  %s13 = inlined_call_operand.vmem [shape: f32[2,1,32], index: 13, kind: input, shape index: {}]
  %s14 = inlined_call_operand.vmem [shape: f32[2,32,32], index: 14, kind: input, shape index: {}]
  %s15 = inlined_call_operand.vmem [shape: f32[2,1,32], index: 15, kind: input, shape index: {}]
  %s16 = inlined_call_operand.vmem [shape: f32[2,32,32], index: 16, kind: input, shape index: {}]
  %s17 = inlined_call_operand.vmem [shape: f32[2,1,32], index: 17, kind: input, shape index: {}]
  %s18 = inlined_call_operand.vmem [shape: f32[1,32], index: 18, kind: input, shape index: {}]
  %s19 = inlined_call_operand.vmem [shape: f32[1,32], index: 19, kind: input, shape index: {}]
  %s20 = inlined_call_operand.vmem [shape: f32[16,4,32], index: 20, kind: input, shape index: {}]
  %s21 = inlined_call_operand.vmem [shape: f32[16,4], index: 21, kind: output, shape index: {}]
  %s22 = sld [smem:[#allocation0]]
  $region94: #{sasrec_forward.1} parent=0
    _
  %s24 = ssub.s32 1, %s22
  %s25 = scalar_select 0, %s24, %s22
  // Predicated region
  $region2: #{sasrec_forward.1} parent=0 // pred_check
    _
  $region3: #{sasrec_forward.1} parent=0 // pred_check_branch
    %27 = sbr.rel (0) target = $region5
  $region4: #{sasrec_forward.1} parent=0 // pred_region
    _
  $region5: #{sasrec_forward.1} parent=0 // pred_fallthru
    _
  // Predicated region
  $region6: #{sasrec_forward.1} parent=0 // pred_check
    _
  $region7: #{sasrec_forward.1} parent=0 // pred_check_branch
    %29 = sbr.rel (0) target = $region9
  $region8: #{sasrec_forward.1} parent=0 // pred_region
    _
  $region9: #{sasrec_forward.1} parent=0 // pred_fallthru
    _
  // Predicated region
  $region10: #{sasrec_forward.1} parent=0 // pred_check
    _
  $region11: #{sasrec_forward.1} parent=0 // pred_check_branch
    %31 = sbr.rel (0) target = $region13
  $region12: #{sasrec_forward.1} parent=0 // pred_region
    _
  $region13: #{sasrec_forward.1} parent=0 // pred_fallthru
    _
  // Predicated region
  $region14: #{sasrec_forward.1} parent=0 // pred_check
    _
  $region15: #{sasrec_forward.1} parent=0 // pred_check_branch
    %33 = sbr.rel (0) target = $region17
  $region16: #{sasrec_forward.1} parent=0 // pred_region
    _
  $region17: #{sasrec_forward.1} parent=0 // pred_fallthru
    _
  // Predicated region
  $region18: #{sasrec_forward.1} parent=0 // pred_check
    _
  $region19: #{sasrec_forward.1} parent=0 // pred_check_branch
    %35 = sbr.rel (0) target = $region21
  $region20: #{sasrec_forward.1} parent=0 // pred_region
    _
  $region21: #{sasrec_forward.1} parent=0 // pred_fallthru
    _
  // Predicated region
  $region22: #{sasrec_forward.1} parent=0 // pred_check
    _
  $region23: #{sasrec_forward.1} parent=0 // pred_check_branch
    %37 = sbr.rel (0) target = $region25
  $region24: #{sasrec_forward.1} parent=0 // pred_region
    _
  $region25: #{sasrec_forward.1} parent=0 // pred_fallthru
    _
  // Predicated region
  $region26: #{sasrec_forward.1} parent=0 // pred_check
    _
  $region27: #{sasrec_forward.1} parent=0 // pred_check_branch
    %39 = sbr.rel (0) target = $region29
  $region28: #{sasrec_forward.1} parent=0 // pred_region
    _
  $region29: #{sasrec_forward.1} parent=0 // pred_fallthru
    _
  // Predicated region
  $region30: #{sasrec_forward.1} parent=0 // pred_check
    _
  $region31: #{sasrec_forward.1} parent=0 // pred_check_branch
    %41 = sbr.rel (0) target = $region33
  $region32: #{sasrec_forward.1} parent=0 // pred_region
    _
  $region33: #{sasrec_forward.1} parent=0 // pred_fallthru
    _
  // Predicated region
  $region34: #{sasrec_forward.1} parent=0 // pred_check
    _
  $region35: #{sasrec_forward.1} parent=0 // pred_check_branch
    %43 = sbr.rel (0) target = $region37
  $region36: #{sasrec_forward.1} parent=0 // pred_region
    _
  $region37: #{sasrec_forward.1} parent=0 // pred_fallthru
    _
  // Predicated region
  $region38: #{sasrec_forward.1} parent=0 // pred_check
    _
  $region39: #{sasrec_forward.1} parent=0 // pred_check_branch
    %45 = sbr.rel (0) target = $region41
  $region40: #{sasrec_forward.1} parent=0 // pred_region
    _
  $region41: #{sasrec_forward.1} parent=0 // pred_fallthru
    _
  // Predicated region
  $region42: #{sasrec_forward.1} parent=0 // pred_check
    _
  $region43: #{sasrec_forward.1} parent=0 // pred_check_branch
    %47 = sbr.rel (0) target = $region45
  $region44: #{sasrec_forward.1} parent=0 // pred_region
    _
  $region45: #{sasrec_forward.1} parent=0 // pred_fallthru
    _
  // Predicated region
  $region46: #{sasrec_forward.1} parent=0 // pred_check
    _
  $region47: #{sasrec_forward.1} parent=0 // pred_check_branch
    %49 = sbr.rel (0) target = $region49
  $region48: #{sasrec_forward.1} parent=0 // pred_region
    _
  $region49: #{sasrec_forward.1} parent=0 // pred_fallthru
    _
  // Predicated region
  $region50: #{sasrec_forward.1} parent=0 // pred_check
    _
  $region51: #{sasrec_forward.1} parent=0 // pred_check_branch
    %51 = sbr.rel (0) target = $region53
  $region52: #{sasrec_forward.1} parent=0 // pred_region
    _
  $region53: #{sasrec_forward.1} parent=0 // pred_fallthru
    _
  // Predicated region
  $region54: #{sasrec_forward.1} parent=0 // pred_check
    _
  $region55: #{sasrec_forward.1} parent=0 // pred_check_branch
    %53 = sbr.rel (0) target = $region57
  $region56: #{sasrec_forward.1} parent=0 // pred_region
    _
  $region57: #{sasrec_forward.1} parent=0 // pred_fallthru
    _
  // Predicated region
  $region58: #{sasrec_forward.1} parent=0 // pred_check
    _
  $region59: #{sasrec_forward.1} parent=0 // pred_check_branch
    %55 = sbr.rel (0) target = $region61
  $region60: #{sasrec_forward.1} parent=0 // pred_region
    _
  $region61: #{sasrec_forward.1} parent=0 // pred_fallthru
    _
  // Predicated region
  $region62: #{sasrec_forward.1} parent=0 // pred_check
    _
  $region63: #{sasrec_forward.1} parent=0 // pred_check_branch
    %57 = sbr.rel (0) target = $region65
  $region64: #{sasrec_forward.1} parent=0 // pred_region
    _
  $region65: #{sasrec_forward.1} parent=0 // pred_fallthru
    _
  // Predicated region
  $region66: #{sasrec_forward.1} parent=0 // pred_check
    _
  $region67: #{sasrec_forward.1} parent=0 // pred_check_branch
    %59 = sbr.rel (0) target = $region69
  $region68: #{sasrec_forward.1} parent=0 // pred_region
    _
  $region69: #{sasrec_forward.1} parent=0 // pred_fallthru
    _
  // Predicated region
  $region70: #{sasrec_forward.1} parent=0 // pred_check
    _
  $region71: #{sasrec_forward.1} parent=0 // pred_check_branch
    %61 = sbr.rel (0) target = $region73
  $region72: #{sasrec_forward.1} parent=0 // pred_region
    _
  $region73: #{sasrec_forward.1} parent=0 // pred_fallthru
    _
  // Predicated region
  $region74: #{sasrec_forward.1} parent=0 // pred_check
    _
  $region75: #{sasrec_forward.1} parent=0 // pred_check_branch
    %63 = sbr.rel (0) target = $region77
  $region76: #{sasrec_forward.1} parent=0 // pred_region
    _
  $region77: #{sasrec_forward.1} parent=0 // pred_fallthru
    _
  // Predicated region
  $region78: #{sasrec_forward.1} parent=0 // pred_check
    _
  $region79: #{sasrec_forward.1} parent=0 // pred_check_branch
    %65 = sbr.rel (0) target = $region81
  $region80: #{sasrec_forward.1} parent=0 // pred_region
    _
  $region81: #{sasrec_forward.1} parent=0 // pred_fallthru
    _
  // Predicated region
  $region82: #{sasrec_forward.1} parent=0 // pred_check
    _
  $region83: #{sasrec_forward.1} parent=0 // pred_check_branch
    %67 = sbr.rel (0) target = $region85
  $region84: #{sasrec_forward.1} parent=0 // pred_region
    _
  $region85: #{sasrec_forward.1} parent=0 // pred_fallthru
    _
  %v68 = vld [vmem:[%s0] sm:$0xff]
  %v69 = vld [vmem:[%s0 + $0x8] sm:$0xff]
  %v70 = vld [vmem:[%s1] sm:$0xff]
  %v71 = vld [vmem:[%s1 + $0x8] sm:$0xff]
  %v72 = vlaneseq
  %v73 = vshrl.u32 %v72, 7
  %v74 = vlaneseq
  %v75 = vand.u32 %v74, 127
  %vm76 = vcmp.le.s32.totalorder %v75, %v73
  %v77 = vsel %vm76, 0.0, -1e+30
  %v78 = vld [vmem:[%s2] sm:$0x1]
  %v79 = vld [vmem:[%s3] sm:$0x1]
  %vm80 = vcmask 261120
  %v81 = vsel %vm80, %v68, 0.0
  %82 = vadd.xlane.f32.xlu0 %v81
  %v83 = vpop.xlane.xlu0 %82
  %v84 = vsel %vm80, %v69, 0.0
  %85 = vadd.xlane.f32.xlu0 %v84
  %v86 = vpop.xlane.xlu0 %85
  %v87 = vrcp.pop 32.0
  %v88 = vmul.f32 %v83, %v87
  %v89 = vmul.f32 %v86, %v87
  %v90 = vsub.f32 %v68, %v88
  %v91 = vsub.f32 %v69, %v89
  %v92 = vmul.f32 %v90, %v90
  %v93 = vmul.f32 %v91, %v91
  %v94 = vsel %vm80, %v92, 0.0
  %95 = vadd.xlane.f32.xlu0 %v94
  %v96 = vpop.xlane.xlu0 %95
  %v97 = vsel %vm80, %v93, 0.0
  %98 = vadd.xlane.f32.xlu0 %v97
  %v99 = vpop.xlane.xlu0 %98
  %v100 = vmul.f32 %v96, %v87
  %v101 = vmul.f32 %v99, %v87
  %v102 = vadd.f32 %v100, 1e-08
  %v103 = vadd.f32 %v101, 1e-08
  %v104 = vrsqrt.pop %v102
  %v105 = vrsqrt.pop %v103
  %v106 = vmul.f32 %v90, %v104
  %v107 = vmul.f32 %v91, %v105
  %v109 = vlaneseq
  %v110 = vshrl.u32 %v109, 7
  %v111 = vsub.s32 0, %v110
  %v112 = vrot.slane %v78, %v111
  %v114 = vmul.f32 %v106, %v112
  %v115 = vmul.f32 %v107, %v112
  %v117 = vlaneseq
  %v118 = vshrl.u32 %v117, 7
  %v119 = vsub.s32 0, %v118
  %v120 = vrot.slane %v79, %v119
  %v122 = vadd.f32 %v114, %v120
  %v123 = vadd.f32 %v115, %v120
  %v124 = vld [vmem:[%s11] sm:$0x1]
  %v126 = vlaneseq
  %v127 = vshrl.u32 %v126, 7
  %v128 = vsub.s32 0, %v127
  %v129 = vrot.slane %v124, %v128
  %v131 = vadd.f32 %v129, 0.0
  %v132 = vld [vmem:[%s4] sm:$0xff]
  %v133 = vld [vmem:[%s4 + $0x8] sm:$0xff]
  %v134 = vld [vmem:[%s4 + $0x10] sm:$0xff]
  %v135 = vld [vmem:[%s4 + $0x18] sm:$0xff]
  %v136 = vld [vmem:[%s7] sm:$0x1]
  %v138 = vlaneseq
  %v139 = vshrl.u32 %v138, 7
  %v140 = vsub.s32 0, %v139
  %v141 = vrot.slane %v136, %v140
  %v144 = vsel %vm80, %v122, 0
  %v147 = vsel %vm80, %v123, 0
  %149 = vmatprep.subr.mxu0 0.0
  %150 = vmatpush1.msra.mxu0 %v132
  %151 = vmatprep.subr.mxu0 0.0
  %152 = vmatpush1.msra.mxu0 %v133
  %153 = vmatprep.subr.mxu0 0.0
  %154 = vmatpush1.msra.mxu0 %v134
  %155 = vmatprep.subr.mxu0 0.0
  %156 = vmatpush1.msra.mxu0 %v135
  %157 = vmatprep.subr.mxu0 0.0
  %158 = vmatpush1.msra.mxu0 0.0
  %159 = vmatprep.subr.mxu0 0.0
  %160 = vmatpush1.msra.mxu0 0.0
  %161 = vmatprep.subr.mxu0 0.0
  %162 = vmatpush1.msra.mxu0 0.0
  %163 = vmatprep.subr.mxu0 0.0
  %164 = vmatpush1.msra.mxu0 0.0
  %165 = vmatprep.subr.mxu0 0.0
  %166 = vmatpush1.msra.mxu0 0.0
  %167 = vmatprep.subr.mxu0 0.0
  %168 = vmatpush1.msra.mxu0 0.0
  %169 = vmatprep.subr.mxu0 0.0
  %170 = vmatpush1.msra.mxu0 0.0
  %171 = vmatprep.subr.mxu0 0.0
  %172 = vmatpush1.msra.mxu0 0.0
  %173 = vmatprep.subr.mxu0 0.0
  %174 = vmatpush1.msra.mxu0 0.0
  %175 = vmatprep.subr.mxu0 0.0
  %176 = vmatpush1.msra.mxu0 0.0
  %177 = vmatprep.subr.mxu0 0.0
  %178 = vmatpush1.msra.mxu0 0.0
  %179 = vmatprep.subr.mxu0 0.0
  %180 = vmatpush1.msra.mxu0 0.0
  %181 = vmatprep.subr.mxu0 0.0
  %182 = vmatpush1.msra.mxu0 0.0
  %183 = vmatprep.subr.mxu0 0.0
  %184 = vmatpush1.msra.mxu0 0.0
  %185 = vmatprep.subr.mxu0 0.0
  %186 = vmatpush1.msra.mxu0 0.0
  %187 = vmatprep.subr.mxu0 0.0
  %188 = vmatpush1.msra.mxu0 0.0
  %189 = vmatprep.subr.mxu0 0.0
  %190 = vmatpush1.msra.mxu0 0.0
  %191 = vmatprep.subr.mxu0 0.0
  %192 = vmatpush1.msra.mxu0 0.0
  %193 = vmatprep.subr.mxu0 0.0
  %194 = vmatpush1.msra.mxu0 0.0
  %195 = vmatprep.subr.mxu0 0.0
  %196 = vmatpush1.msra.mxu0 0.0
  %197 = vmatprep.subr.mxu0 0.0
  %198 = vmatpush1.msra.mxu0 0.0
  %199 = vmatprep.subr.mxu0 0.0
  %200 = vmatpush1.msra.mxu0 0.0
  %201 = vmatprep.subr.mxu0 0.0
  %202 = vmatpush1.msra.mxu0 0.0
  %203 = vmatprep.subr.mxu0 0.0
  %204 = vmatpush1.msra.mxu0 0.0
  %205 = vmatprep.subr.mxu0 0.0
  %206 = vmatpush1.msra.mxu0 0.0
  %207 = vmatprep.subr.mxu0 0.0
  %208 = vmatpush1.msra.mxu0 0.0
  %209 = vmatprep.subr.mxu0 0.0
  %210 = vmatpush1.msra.mxu0 0.0
  %211 = vmatprep.subr.mxu0 0.0
  %212 = vmatpush1.msra.mxu0 0.0
  %213 = vmatprep.mubr.f32.mxu0 0.0
  %214 = vmatmul.mubr.f32.gmra.mrb[0].mxu0 %v144
  %v215 = vpop.f32.mrb[0].mxu0
  %v216 = vadd.f32 %v141, %v215
  %v217 = vpop.f32.mrb[0].mxu0
  %218 = vmatprep.mubr.f32.mxu0 0.0
  %219 = vmatmul.mubr.f32.gmra.mrb[0].mxu0 %v147
  %v220 = vpop.f32.mrb[0].mxu0
  %v221 = vadd.f32 %v141, %v220
  %v222 = vpop.f32.mrb[0].mxu0
  %223 = vdwg.mxu0
  %v224 = vmul.f32 %v216, 0.25
  %v225 = vmul.f32 %v221, 0.25
  %v226 = vld [vmem:[%s5] sm:$0xff]
  %v227 = vld [vmem:[%s5 + $0x8] sm:$0xff]
  %v228 = vld [vmem:[%s5 + $0x10] sm:$0xff]
  %v229 = vld [vmem:[%s5 + $0x18] sm:$0xff]
  %v230 = vld [vmem:[%s8] sm:$0x1]
  %v232 = vlaneseq
  %v233 = vshrl.u32 %v232, 7
  %v234 = vsub.s32 0, %v233
  %v235 = vrot.slane %v230, %v234
  %v238 = vsel %vm80, %v68, 0
  %v241 = vsel %vm80, %v69, 0
  %243 = vmatprep.subr.mxu0 0.0
  %244 = vmatpush1.msra.mxu0 %v226
  %245 = vmatprep.subr.mxu0 0.0
  %246 = vmatpush1.msra.mxu0 %v227
  %247 = vmatprep.subr.mxu0 0.0
  %248 = vmatpush1.msra.mxu0 %v228
  %249 = vmatprep.subr.mxu0 0.0
  %250 = vmatpush1.msra.mxu0 %v229
  %251 = vmatprep.subr.mxu0 0.0
  %252 = vmatpush1.msra.mxu0 0.0
  %253 = vmatprep.subr.mxu0 0.0
  %254 = vmatpush1.msra.mxu0 0.0
  %255 = vmatprep.subr.mxu0 0.0
  %256 = vmatpush1.msra.mxu0 0.0
  %257 = vmatprep.subr.mxu0 0.0
  %258 = vmatpush1.msra.mxu0 0.0
  %259 = vmatprep.subr.mxu0 0.0
  %260 = vmatpush1.msra.mxu0 0.0
  %261 = vmatprep.subr.mxu0 0.0
  %262 = vmatpush1.msra.mxu0 0.0
  %263 = vmatprep.subr.mxu0 0.0
  %264 = vmatpush1.msra.mxu0 0.0
  %265 = vmatprep.subr.mxu0 0.0
  %266 = vmatpush1.msra.mxu0 0.0
  %267 = vmatprep.subr.mxu0 0.0
  %268 = vmatpush1.msra.mxu0 0.0
  %269 = vmatprep.subr.mxu0 0.0
  %270 = vmatpush1.msra.mxu0 0.0
  %271 = vmatprep.subr.mxu0 0.0
  %272 = vmatpush1.msra.mxu0 0.0
  %273 = vmatprep.subr.mxu0 0.0
  %274 = vmatpush1.msra.mxu0 0.0
  %275 = vmatprep.subr.mxu0 0.0
  %276 = vmatpush1.msra.mxu0 0.0
  %277 = vmatprep.subr.mxu0 0.0
  %278 = vmatpush1.msra.mxu0 0.0
  %279 = vmatprep.subr.mxu0 0.0
  %280 = vmatpush1.msra.mxu0 0.0
  %281 = vmatprep.subr.mxu0 0.0
  %282 = vmatpush1.msra.mxu0 0.0
  %283 = vmatprep.subr.mxu0 0.0
  %284 = vmatpush1.msra.mxu0 0.0
  %285 = vmatprep.subr.mxu0 0.0
  %286 = vmatpush1.msra.mxu0 0.0
  %287 = vmatprep.subr.mxu0 0.0
  %288 = vmatpush1.msra.mxu0 0.0
  %289 = vmatprep.subr.mxu0 0.0
  %290 = vmatpush1.msra.mxu0 0.0
  %291 = vmatprep.subr.mxu0 0.0
  %292 = vmatpush1.msra.mxu0 0.0
  %293 = vmatprep.subr.mxu0 0.0
  %294 = vmatpush1.msra.mxu0 0.0
  %295 = vmatprep.subr.mxu0 0.0
  %296 = vmatpush1.msra.mxu0 0.0
  %297 = vmatprep.subr.mxu0 0.0
  %298 = vmatpush1.msra.mxu0 0.0
  %299 = vmatprep.subr.mxu0 0.0
  %300 = vmatpush1.msra.mxu0 0.0
  %301 = vmatprep.subr.mxu0 0.0
  %302 = vmatpush1.msra.mxu0 0.0
  %303 = vmatprep.subr.mxu0 0.0
  %304 = vmatpush1.msra.mxu0 0.0
  %305 = vmatprep.subr.mxu0 0.0
  %306 = vmatpush1.msra.mxu0 0.0
  %307 = vmatprep.mubr.f32.mxu0 0.0
  %308 = vmatmul.mubr.f32.gmra.mrb[0].mxu0 %v238
  %v309 = vpop.f32.mrb[0].mxu0
  %v310 = vadd.f32 %v235, %v309
  %v311 = vpop.f32.mrb[0].mxu0
  %312 = vmatprep.mubr.f32.mxu0 0.0
  %313 = vmatmul.mubr.f32.gmra.mrb[0].mxu0 %v241
  %v314 = vpop.f32.mrb[0].mxu0
  %v315 = vadd.f32 %v235, %v314
  %v316 = vpop.f32.mrb[0].mxu0
  %317 = vdwg.mxu0
  %v318 = vld [vmem:[%s6] sm:$0xff]
  %v319 = vld [vmem:[%s6 + $0x8] sm:$0xff]
  %v320 = vld [vmem:[%s6 + $0x10] sm:$0xff]
  %v321 = vld [vmem:[%s6 + $0x18] sm:$0xff]
  %v322 = vld [vmem:[%s9] sm:$0x1]
  %v324 = vlaneseq
  %v325 = vshrl.u32 %v324, 7
  %v326 = vsub.s32 0, %v325
  %v327 = vrot.slane %v322, %v326
  %329 = vmatprep.subr.mxu0 0.0
  %330 = vmatpush1.msra.mxu0 %v318
  %331 = vmatprep.subr.mxu0 0.0
  %332 = vmatpush1.msra.mxu0 %v319
  %333 = vmatprep.subr.mxu0 0.0
  %334 = vmatpush1.msra.mxu0 %v320
  %335 = vmatprep.subr.mxu0 0.0
  %336 = vmatpush1.msra.mxu0 %v321
  %337 = vmatprep.subr.mxu0 0.0
  %338 = vmatpush1.msra.mxu0 0.0
  %339 = vmatprep.subr.mxu0 0.0
  %340 = vmatpush1.msra.mxu0 0.0
  %341 = vmatprep.subr.mxu0 0.0
  %342 = vmatpush1.msra.mxu0 0.0
  %343 = vmatprep.subr.mxu0 0.0
  %344 = vmatpush1.msra.mxu0 0.0
  %345 = vmatprep.subr.mxu0 0.0
  %346 = vmatpush1.msra.mxu0 0.0
  %347 = vmatprep.subr.mxu0 0.0
  %348 = vmatpush1.msra.mxu0 0.0
  %349 = vmatprep.subr.mxu0 0.0
  %350 = vmatpush1.msra.mxu0 0.0
  %351 = vmatprep.subr.mxu0 0.0
  %352 = vmatpush1.msra.mxu0 0.0
  %353 = vmatprep.subr.mxu0 0.0
  %354 = vmatpush1.msra.mxu0 0.0
  %355 = vmatprep.subr.mxu0 0.0
  %356 = vmatpush1.msra.mxu0 0.0
  %357 = vmatprep.subr.mxu0 0.0
  %358 = vmatpush1.msra.mxu0 0.0
  %359 = vmatprep.subr.mxu0 0.0
  %360 = vmatpush1.msra.mxu0 0.0
  %361 = vmatprep.subr.mxu0 0.0
  %362 = vmatpush1.msra.mxu0 0.0
  %363 = vmatprep.subr.mxu0 0.0
  %364 = vmatpush1.msra.mxu0 0.0
  %365 = vmatprep.subr.mxu0 0.0
  %366 = vmatpush1.msra.mxu0 0.0
  %367 = vmatprep.subr.mxu0 0.0
  %368 = vmatpush1.msra.mxu0 0.0
  %369 = vmatprep.subr.mxu0 0.0
  %370 = vmatpush1.msra.mxu0 0.0
  %371 = vmatprep.subr.mxu0 0.0
  %372 = vmatpush1.msra.mxu0 0.0
  %373 = vmatprep.subr.mxu0 0.0
  %374 = vmatpush1.msra.mxu0 0.0
  %375 = vmatprep.subr.mxu0 0.0
  %376 = vmatpush1.msra.mxu0 0.0
  %377 = vmatprep.subr.mxu0 0.0
  %378 = vmatpush1.msra.mxu0 0.0
  %379 = vmatprep.subr.mxu0 0.0
  %380 = vmatpush1.msra.mxu0 0.0
  %381 = vmatprep.subr.mxu0 0.0
  %382 = vmatpush1.msra.mxu0 0.0
  %383 = vmatprep.subr.mxu0 0.0
  %384 = vmatpush1.msra.mxu0 0.0
  %385 = vmatprep.subr.mxu0 0.0
  %386 = vmatpush1.msra.mxu0 0.0
  %387 = vmatprep.subr.mxu0 0.0
  %388 = vmatpush1.msra.mxu0 0.0
  %389 = vmatprep.subr.mxu0 0.0
  %390 = vmatpush1.msra.mxu0 0.0
  %391 = vmatprep.subr.mxu0 0.0
  %392 = vmatpush1.msra.mxu0 0.0
  %393 = vmatprep.mubr.f32.mxu0 0.0
  %394 = vmatmul.mubr.f32.gmra.mrb[0].mxu0 %v238
  %v395 = vpop.f32.mrb[0].mxu0
  %v396 = vadd.f32 %v327, %v395
  %v397 = vpop.f32.mrb[0].mxu0
  %398 = vmatprep.mubr.f32.mxu0 0.0
  %399 = vmatmul.mubr.f32.gmra.mrb[0].mxu0 %v241
  %v400 = vpop.f32.mrb[0].mxu0
  %v401 = vadd.f32 %v327, %v400
  %v402 = vpop.f32.mrb[0].mxu0
  %403 = vdwg.mxu0
  %vm404 = vcmask 130048
  %v406 = vsel %vm404, %v224, 0
  %v409 = vsel %vm404, %v310, 0
  %411 = vmatprep.subr.mxu0 0.0
  %412 = vmatpush1.xpose.msra.mxu0 %v409
  %413 = vmatprep.subr.mxu0 0.0
  %414 = vmatpush1.xpose.msra.mxu0 0.0
  %415 = vmatprep.subr.mxu0 0.0
  %416 = vmatpush1.xpose.msra.mxu0 0.0
  %417 = vmatprep.subr.mxu0 0.0
  %418 = vmatpush1.xpose.msra.mxu0 0.0
  %419 = vmatprep.subr.mxu0 0.0
  %420 = vmatpush1.xpose.msra.mxu0 0.0
  %421 = vmatprep.subr.mxu0 0.0
  %422 = vmatpush1.xpose.msra.mxu0 0.0
  %423 = vmatprep.subr.mxu0 0.0
  %424 = vmatpush1.xpose.msra.mxu0 0.0
  %425 = vmatprep.subr.mxu0 0.0
  %426 = vmatpush1.xpose.msra.mxu0 0.0
  %427 = vmatprep.subr.mxu0 0.0
  %428 = vmatpush1.xpose.msra.mxu0 0.0
  %429 = vmatprep.subr.mxu0 0.0
  %430 = vmatpush1.xpose.msra.mxu0 0.0
  %431 = vmatprep.subr.mxu0 0.0
  %432 = vmatpush1.xpose.msra.mxu0 0.0
  %433 = vmatprep.subr.mxu0 0.0
  %434 = vmatpush1.xpose.msra.mxu0 0.0
  %435 = vmatprep.subr.mxu0 0.0
  %436 = vmatpush1.xpose.msra.mxu0 0.0
  %437 = vmatprep.subr.mxu0 0.0
  %438 = vmatpush1.xpose.msra.mxu0 0.0
  %439 = vmatprep.subr.mxu0 0.0
  %440 = vmatpush1.xpose.msra.mxu0 0.0
  %441 = vmatprep.subr.mxu0 0.0
  %442 = vmatpush1.xpose.msra.mxu0 0.0
  %443 = vmatprep.subr.mxu0 0.0
  %444 = vmatpush1.xpose.msra.mxu0 0.0
  %445 = vmatprep.subr.mxu0 0.0
  %446 = vmatpush1.xpose.msra.mxu0 0.0
  %447 = vmatprep.subr.mxu0 0.0
  %448 = vmatpush1.xpose.msra.mxu0 0.0
  %449 = vmatprep.subr.mxu0 0.0
  %450 = vmatpush1.xpose.msra.mxu0 0.0
  %451 = vmatprep.subr.mxu0 0.0
  %452 = vmatpush1.xpose.msra.mxu0 0.0
  %453 = vmatprep.subr.mxu0 0.0
  %454 = vmatpush1.xpose.msra.mxu0 0.0
  %455 = vmatprep.subr.mxu0 0.0
  %456 = vmatpush1.xpose.msra.mxu0 0.0
  %457 = vmatprep.subr.mxu0 0.0
  %458 = vmatpush1.xpose.msra.mxu0 0.0
  %459 = vmatprep.subr.mxu0 0.0
  %460 = vmatpush1.xpose.msra.mxu0 0.0
  %461 = vmatprep.subr.mxu0 0.0
  %462 = vmatpush1.xpose.msra.mxu0 0.0
  %463 = vmatprep.subr.mxu0 0.0
  %464 = vmatpush1.xpose.msra.mxu0 0.0
  %465 = vmatprep.subr.mxu0 0.0
  %466 = vmatpush1.xpose.msra.mxu0 0.0
  %467 = vmatprep.subr.mxu0 0.0
  %468 = vmatpush1.xpose.msra.mxu0 0.0
  %469 = vmatprep.subr.mxu0 0.0
  %470 = vmatpush1.xpose.msra.mxu0 0.0
  %471 = vmatprep.subr.mxu0 0.0
  %472 = vmatpush1.xpose.msra.mxu0 0.0
  %473 = vmatprep.subr.mxu0 0.0
  %474 = vmatpush1.xpose.msra.mxu0 0.0
  %475 = vmatprep.mubr.f32.mxu0 0.0
  %476 = vmatmul.mubr.f32.gmra.mrb[0].mxu0 %v406
  %v477 = vpop.f32.mrb[0].mxu0
  %v478 = vadd.f32 %v77, %v477
  %v479 = vpop.f32.mrb[0].mxu0
  %480 = vdwg.mxu0
  %v482 = vsel %vm404, %v225, 0
  %v485 = vsel %vm404, %v315, 0
  %487 = vmatprep.subr.mxu0 0.0
  %488 = vmatpush1.xpose.msra.mxu0 %v485
  %489 = vmatprep.subr.mxu0 0.0
  %490 = vmatpush1.xpose.msra.mxu0 0.0
  %491 = vmatprep.subr.mxu0 0.0
  %492 = vmatpush1.xpose.msra.mxu0 0.0
  %493 = vmatprep.subr.mxu0 0.0
  %494 = vmatpush1.xpose.msra.mxu0 0.0
  %495 = vmatprep.subr.mxu0 0.0
  %496 = vmatpush1.xpose.msra.mxu0 0.0
  %497 = vmatprep.subr.mxu0 0.0
  %498 = vmatpush1.xpose.msra.mxu0 0.0
  %499 = vmatprep.subr.mxu0 0.0
  %500 = vmatpush1.xpose.msra.mxu0 0.0
  %501 = vmatprep.subr.mxu0 0.0
  %502 = vmatpush1.xpose.msra.mxu0 0.0
  %503 = vmatprep.subr.mxu0 0.0
  %504 = vmatpush1.xpose.msra.mxu0 0.0
  %505 = vmatprep.subr.mxu0 0.0
  %506 = vmatpush1.xpose.msra.mxu0 0.0
  %507 = vmatprep.subr.mxu0 0.0
  %508 = vmatpush1.xpose.msra.mxu0 0.0
  %509 = vmatprep.subr.mxu0 0.0
  %510 = vmatpush1.xpose.msra.mxu0 0.0
  %511 = vmatprep.subr.mxu0 0.0
  %512 = vmatpush1.xpose.msra.mxu0 0.0
  %513 = vmatprep.subr.mxu0 0.0
  %514 = vmatpush1.xpose.msra.mxu0 0.0
  %515 = vmatprep.subr.mxu0 0.0
  %516 = vmatpush1.xpose.msra.mxu0 0.0
  %517 = vmatprep.subr.mxu0 0.0
  %518 = vmatpush1.xpose.msra.mxu0 0.0
  %519 = vmatprep.subr.mxu0 0.0
  %520 = vmatpush1.xpose.msra.mxu0 0.0
  %521 = vmatprep.subr.mxu0 0.0
  %522 = vmatpush1.xpose.msra.mxu0 0.0
  %523 = vmatprep.subr.mxu0 0.0
  %524 = vmatpush1.xpose.msra.mxu0 0.0
  %525 = vmatprep.subr.mxu0 0.0
  %526 = vmatpush1.xpose.msra.mxu0 0.0
  %527 = vmatprep.subr.mxu0 0.0
  %528 = vmatpush1.xpose.msra.mxu0 0.0
  %529 = vmatprep.subr.mxu0 0.0
  %530 = vmatpush1.xpose.msra.mxu0 0.0
  %531 = vmatprep.subr.mxu0 0.0
  %532 = vmatpush1.xpose.msra.mxu0 0.0
  %533 = vmatprep.subr.mxu0 0.0
  %534 = vmatpush1.xpose.msra.mxu0 0.0
  %535 = vmatprep.subr.mxu0 0.0
  %536 = vmatpush1.xpose.msra.mxu0 0.0
  %537 = vmatprep.subr.mxu0 0.0
  %538 = vmatpush1.xpose.msra.mxu0 0.0
  %539 = vmatprep.subr.mxu0 0.0
  %540 = vmatpush1.xpose.msra.mxu0 0.0
  %541 = vmatprep.subr.mxu0 0.0
  %542 = vmatpush1.xpose.msra.mxu0 0.0
  %543 = vmatprep.subr.mxu0 0.0
  %544 = vmatpush1.xpose.msra.mxu0 0.0
  %545 = vmatprep.subr.mxu0 0.0
  %546 = vmatpush1.xpose.msra.mxu0 0.0
  %547 = vmatprep.subr.mxu0 0.0
  %548 = vmatpush1.xpose.msra.mxu0 0.0
  %549 = vmatprep.subr.mxu0 0.0
  %550 = vmatpush1.xpose.msra.mxu0 0.0
  %551 = vmatprep.mubr.f32.mxu0 0.0
  %552 = vmatmul.mubr.f32.gmra.mrb[0].mxu0 %v482
  %v553 = vpop.f32.mrb[0].mxu0
  %v554 = vadd.f32 %v77, %v553
  %v555 = vpop.f32.mrb[0].mxu0
  %556 = vdwg.mxu0
  %vm557 = vcmask 64512
  %v558 = vsel %vm557, %v478, -inf
  %559 = vmax.xlane.f32.xlu0 %v558
  %v560 = vpop.xlane.xlu0 %559
  %v561 = vsel %vm557, %v554, -inf
  %562 = vmax.xlane.f32.xlu0 %v561
  %v563 = vpop.xlane.xlu0 %562
  %v564 = vsub.f32 %v478, %v560
  %v565 = vsub.f32 %v554, %v563
  %v566 = vmul.f32 %v564, 1.442695
  %v567 = vpow.pop %v566
  %v568 = vmul.f32 %v565, 1.442695
  %v569 = vpow.pop %v568
  %v570 = vsel %vm557, %v567, 0.0
  %571 = vadd.xlane.f32.xlu0 %v570
  %v572 = vpop.xlane.xlu0 %571
  %v573 = vsel %vm557, %v569, 0.0
  %574 = vadd.xlane.f32.xlu0 %v573
  %v575 = vpop.xlane.xlu0 %574
  %v576 = vrcp.pop %v572
  %v577 = vrcp.pop %v575
  %v578 = vmul.f32 %v567, %v576
  %v579 = vmul.f32 %v569, %v577
  %v581 = vsel %vm557, %v578, 0
  %583 = vmatprep.subr.mxu0 0.0
  %584 = vmatpush1.msra.mxu0 %v396
  %585 = vmatprep.subr.mxu0 0.0
  %586 = vmatpush1.msra.mxu0 0.0
  %587 = vmatprep.subr.mxu0 0.0
  %588 = vmatpush1.msra.mxu0 0.0
  %589 = vmatprep.subr.mxu0 0.0
  %590 = vmatpush1.msra.mxu0 0.0
  %591 = vmatprep.subr.mxu0 0.0
  %592 = vmatpush1.msra.mxu0 0.0
  %593 = vmatprep.subr.mxu0 0.0
  %594 = vmatpush1.msra.mxu0 0.0
  %595 = vmatprep.subr.mxu0 0.0
  %596 = vmatpush1.msra.mxu0 0.0
  %597 = vmatprep.subr.mxu0 0.0
  %598 = vmatpush1.msra.mxu0 0.0
  %599 = vmatprep.subr.mxu0 0.0
  %600 = vmatpush1.msra.mxu0 0.0
  %601 = vmatprep.subr.mxu0 0.0
  %602 = vmatpush1.msra.mxu0 0.0
  %603 = vmatprep.subr.mxu0 0.0
  %604 = vmatpush1.msra.mxu0 0.0
  %605 = vmatprep.subr.mxu0 0.0
  %606 = vmatpush1.msra.mxu0 0.0
  %607 = vmatprep.subr.mxu0 0.0
  %608 = vmatpush1.msra.mxu0 0.0
  %609 = vmatprep.subr.mxu0 0.0
  %610 = vmatpush1.msra.mxu0 0.0
  %611 = vmatprep.subr.mxu0 0.0
  %612 = vmatpush1.msra.mxu0 0.0
  %613 = vmatprep.subr.mxu0 0.0
  %614 = vmatpush1.msra.mxu0 0.0
  %615 = vmatprep.subr.mxu0 0.0
  %616 = vmatpush1.msra.mxu0 0.0
  %617 = vmatprep.subr.mxu0 0.0
  %618 = vmatpush1.msra.mxu0 0.0
  %619 = vmatprep.subr.mxu0 0.0
  %620 = vmatpush1.msra.mxu0 0.0
  %621 = vmatprep.subr.mxu0 0.0
  %622 = vmatpush1.msra.mxu0 0.0
  %623 = vmatprep.subr.mxu0 0.0
  %624 = vmatpush1.msra.mxu0 0.0
  %625 = vmatprep.subr.mxu0 0.0
  %626 = vmatpush1.msra.mxu0 0.0
  %627 = vmatprep.subr.mxu0 0.0
  %628 = vmatpush1.msra.mxu0 0.0
  %629 = vmatprep.subr.mxu0 0.0
  %630 = vmatpush1.msra.mxu0 0.0
  %631 = vmatprep.subr.mxu0 0.0
  %632 = vmatpush1.msra.mxu0 0.0
  %633 = vmatprep.subr.mxu0 0.0
  %634 = vmatpush1.msra.mxu0 0.0
  %635 = vmatprep.subr.mxu0 0.0
  %636 = vmatpush1.msra.mxu0 0.0
  %637 = vmatprep.subr.mxu0 0.0
  %638 = vmatpush1.msra.mxu0 0.0
  %639 = vmatprep.subr.mxu0 0.0
  %640 = vmatpush1.msra.mxu0 0.0
  %641 = vmatprep.subr.mxu0 0.0
  %642 = vmatpush1.msra.mxu0 0.0
  %643 = vmatprep.subr.mxu0 0.0
  %644 = vmatpush1.msra.mxu0 0.0
  %645 = vmatprep.subr.mxu0 0.0
  %646 = vmatpush1.msra.mxu0 0.0
  %647 = vmatprep.mubr.f32.mxu0 0.0
  %648 = vmatmul.mubr.f32.gmra.mrb[0].mxu0 %v581
  %v649 = vpop.f32.mrb[0].mxu0
  %v650 = vadd.f32 0.0, %v649
  %v651 = vpop.f32.mrb[0].mxu0
  %652 = vdwg.mxu0
  %v654 = vsel %vm557, %v579, 0
  %656 = vmatprep.subr.mxu0 0.0
  %657 = vmatpush1.msra.mxu0 %v401
  %658 = vmatprep.subr.mxu0 0.0
  %659 = vmatpush1.msra.mxu0 0.0
  %660 = vmatprep.subr.mxu0 0.0
  %661 = vmatpush1.msra.mxu0 0.0
  %662 = vmatprep.subr.mxu0 0.0
  %663 = vmatpush1.msra.mxu0 0.0
  %664 = vmatprep.subr.mxu0 0.0
  %665 = vmatpush1.msra.mxu0 0.0
  %666 = vmatprep.subr.mxu0 0.0
  %667 = vmatpush1.msra.mxu0 0.0
  %668 = vmatprep.subr.mxu0 0.0
  %669 = vmatpush1.msra.mxu0 0.0
  %670 = vmatprep.subr.mxu0 0.0
  %671 = vmatpush1.msra.mxu0 0.0
  %672 = vmatprep.subr.mxu0 0.0
  %673 = vmatpush1.msra.mxu0 0.0
  %674 = vmatprep.subr.mxu0 0.0
  %675 = vmatpush1.msra.mxu0 0.0
  %676 = vmatprep.subr.mxu0 0.0
  %677 = vmatpush1.msra.mxu0 0.0
  %678 = vmatprep.subr.mxu0 0.0
  %679 = vmatpush1.msra.mxu0 0.0
  %680 = vmatprep.subr.mxu0 0.0
  %681 = vmatpush1.msra.mxu0 0.0
  %682 = vmatprep.subr.mxu0 0.0
  %683 = vmatpush1.msra.mxu0 0.0
  %684 = vmatprep.subr.mxu0 0.0
  %685 = vmatpush1.msra.mxu0 0.0
  %686 = vmatprep.subr.mxu0 0.0
  %687 = vmatpush1.msra.mxu0 0.0
  %688 = vmatprep.subr.mxu0 0.0
  %689 = vmatpush1.msra.mxu0 0.0
  %690 = vmatprep.subr.mxu0 0.0
  %691 = vmatpush1.msra.mxu0 0.0
  %692 = vmatprep.subr.mxu0 0.0
  %693 = vmatpush1.msra.mxu0 0.0
  %694 = vmatprep.subr.mxu0 0.0
  %695 = vmatpush1.msra.mxu0 0.0
  %696 = vmatprep.subr.mxu0 0.0
  %697 = vmatpush1.msra.mxu0 0.0
  %698 = vmatprep.subr.mxu0 0.0
  %699 = vmatpush1.msra.mxu0 0.0
  %700 = vmatprep.subr.mxu0 0.0
  %701 = vmatpush1.msra.mxu0 0.0
  %702 = vmatprep.subr.mxu0 0.0
  %703 = vmatpush1.msra.mxu0 0.0
  %704 = vmatprep.subr.mxu0 0.0
  %705 = vmatpush1.msra.mxu0 0.0
  %706 = vmatprep.subr.mxu0 0.0
  %707 = vmatpush1.msra.mxu0 0.0
  %708 = vmatprep.subr.mxu0 0.0
  %709 = vmatpush1.msra.mxu0 0.0
  %710 = vmatprep.subr.mxu0 0.0
  %711 = vmatpush1.msra.mxu0 0.0
  %712 = vmatprep.subr.mxu0 0.0
  %713 = vmatpush1.msra.mxu0 0.0
  %714 = vmatprep.subr.mxu0 0.0
  %715 = vmatpush1.msra.mxu0 0.0
  %716 = vmatprep.subr.mxu0 0.0
  %717 = vmatpush1.msra.mxu0 0.0
  %718 = vmatprep.subr.mxu0 0.0
  %719 = vmatpush1.msra.mxu0 0.0
  %720 = vmatprep.mubr.f32.mxu0 0.0
  %721 = vmatmul.mubr.f32.gmra.mrb[0].mxu0 %v654
  %v722 = vpop.f32.mrb[0].mxu0
  %v723 = vadd.f32 0.0, %v722
  %v724 = vpop.f32.mrb[0].mxu0
  %725 = vdwg.mxu0
  %v726 = vld [vmem:[%s10] sm:$0xff]
  %v727 = vld [vmem:[%s10 + $0x8] sm:$0xff]
  %v729 = vsel %vm404, %v650, 0
  %v732 = vsel %vm404, %v723, 0
  %734 = vmatprep.subr.mxu0 0.0
  %735 = vmatpush1.msra.mxu0 %v726
  %736 = vmatprep.subr.mxu0 0.0
  %737 = vmatpush1.msra.mxu0 %v727
  %738 = vmatprep.subr.mxu0 0.0
  %739 = vmatpush1.msra.mxu0 0.0
  %740 = vmatprep.subr.mxu0 0.0
  %741 = vmatpush1.msra.mxu0 0.0
  %742 = vmatprep.subr.mxu0 0.0
  %743 = vmatpush1.msra.mxu0 0.0
  %744 = vmatprep.subr.mxu0 0.0
  %745 = vmatpush1.msra.mxu0 0.0
  %746 = vmatprep.subr.mxu0 0.0
  %747 = vmatpush1.msra.mxu0 0.0
  %748 = vmatprep.subr.mxu0 0.0
  %749 = vmatpush1.msra.mxu0 0.0
  %750 = vmatprep.subr.mxu0 0.0
  %751 = vmatpush1.msra.mxu0 0.0
  %752 = vmatprep.subr.mxu0 0.0
  %753 = vmatpush1.msra.mxu0 0.0
  %754 = vmatprep.subr.mxu0 0.0
  %755 = vmatpush1.msra.mxu0 0.0
  %756 = vmatprep.subr.mxu0 0.0
  %757 = vmatpush1.msra.mxu0 0.0
  %758 = vmatprep.subr.mxu0 0.0
  %759 = vmatpush1.msra.mxu0 0.0
  %760 = vmatprep.subr.mxu0 0.0
  %761 = vmatpush1.msra.mxu0 0.0
  %762 = vmatprep.subr.mxu0 0.0
  %763 = vmatpush1.msra.mxu0 0.0
  %764 = vmatprep.subr.mxu0 0.0
  %765 = vmatpush1.msra.mxu0 0.0
  %766 = vmatprep.subr.mxu0 0.0
  %767 = vmatpush1.msra.mxu0 0.0
  %768 = vmatprep.subr.mxu0 0.0
  %769 = vmatpush1.msra.mxu0 0.0
  %770 = vmatprep.subr.mxu0 0.0
  %771 = vmatpush1.msra.mxu0 0.0
  %772 = vmatprep.subr.mxu0 0.0
  %773 = vmatpush1.msra.mxu0 0.0
  %774 = vmatprep.subr.mxu0 0.0
  %775 = vmatpush1.msra.mxu0 0.0
  %776 = vmatprep.subr.mxu0 0.0
  %777 = vmatpush1.msra.mxu0 0.0
  %778 = vmatprep.subr.mxu0 0.0
  %779 = vmatpush1.msra.mxu0 0.0
  %780 = vmatprep.subr.mxu0 0.0
  %781 = vmatpush1.msra.mxu0 0.0
  %782 = vmatprep.subr.mxu0 0.0
  %783 = vmatpush1.msra.mxu0 0.0
  %784 = vmatprep.subr.mxu0 0.0
  %785 = vmatpush1.msra.mxu0 0.0
  %786 = vmatprep.subr.mxu0 0.0
  %787 = vmatpush1.msra.mxu0 0.0
  %788 = vmatprep.subr.mxu0 0.0
  %789 = vmatpush1.msra.mxu0 0.0
  %790 = vmatprep.subr.mxu0 0.0
  %791 = vmatpush1.msra.mxu0 0.0
  %792 = vmatprep.subr.mxu0 0.0
  %793 = vmatpush1.msra.mxu0 0.0
  %794 = vmatprep.subr.mxu0 0.0
  %795 = vmatpush1.msra.mxu0 0.0
  %796 = vmatprep.subr.mxu0 0.0
  %797 = vmatpush1.msra.mxu0 0.0
  %798 = vmatprep.mubr.f32.mxu0 0.0
  %799 = vmatmul.mubr.f32.gmra.mrb[0].mxu0 %v729
  %v800 = vpop.f32.mrb[0].mxu0
  %v801 = vadd.f32 0.0, %v800
  %v802 = vpop.f32.mrb[0].mxu0
  %803 = vmatprep.mubr.f32.mxu0 0.0
  %804 = vmatmul.mubr.f32.gmra.mrb[0].mxu0 %v732
  %v805 = vpop.f32.mrb[0].mxu0
  %v806 = vadd.f32 0.0, %v805
  %v807 = vpop.f32.mrb[0].mxu0
  %808 = vdwg.mxu0
  %v809 = vadd.f32 %v131, %v801
  %v810 = vadd.f32 %v131, %v806
  %s811 = scalar_lea.vmem %s4, 32
  %v812 = vld [vmem:[%s811] sm:$0xff]
  %v813 = vld [vmem:[%s811 + $0x8] sm:$0xff]
  %v814 = vld [vmem:[%s811 + $0x10] sm:$0xff]
  %v815 = vld [vmem:[%s811 + $0x18] sm:$0xff]
  %s816 = scalar_lea.vmem %s7, 1
  %v817 = vld [vmem:[%s816] sm:$0x1]
  %v819 = vlaneseq
  %v820 = vshrl.u32 %v819, 7
  %v821 = vsub.s32 0, %v820
  %v822 = vrot.slane %v817, %v821
  %824 = vmatprep.subr.mxu0 0.0
  %825 = vmatpush1.msra.mxu0 %v812
  %826 = vmatprep.subr.mxu0 0.0
  %827 = vmatpush1.msra.mxu0 %v813
  %828 = vmatprep.subr.mxu0 0.0
  %829 = vmatpush1.msra.mxu0 %v814
  %830 = vmatprep.subr.mxu0 0.0
  %831 = vmatpush1.msra.mxu0 %v815
  %832 = vmatprep.subr.mxu0 0.0
  %833 = vmatpush1.msra.mxu0 0.0
  %834 = vmatprep.subr.mxu0 0.0
  %835 = vmatpush1.msra.mxu0 0.0
  %836 = vmatprep.subr.mxu0 0.0
  %837 = vmatpush1.msra.mxu0 0.0
  %838 = vmatprep.subr.mxu0 0.0
  %839 = vmatpush1.msra.mxu0 0.0
  %840 = vmatprep.subr.mxu0 0.0
  %841 = vmatpush1.msra.mxu0 0.0
  %842 = vmatprep.subr.mxu0 0.0
  %843 = vmatpush1.msra.mxu0 0.0
  %844 = vmatprep.subr.mxu0 0.0
  %845 = vmatpush1.msra.mxu0 0.0
  %846 = vmatprep.subr.mxu0 0.0
  %847 = vmatpush1.msra.mxu0 0.0
  %848 = vmatprep.subr.mxu0 0.0
  %849 = vmatpush1.msra.mxu0 0.0
  %850 = vmatprep.subr.mxu0 0.0
  %851 = vmatpush1.msra.mxu0 0.0
  %852 = vmatprep.subr.mxu0 0.0
  %853 = vmatpush1.msra.mxu0 0.0
  %854 = vmatprep.subr.mxu0 0.0
  %855 = vmatpush1.msra.mxu0 0.0
  %856 = vmatprep.subr.mxu0 0.0
  %857 = vmatpush1.msra.mxu0 0.0
  %858 = vmatprep.subr.mxu0 0.0
  %859 = vmatpush1.msra.mxu0 0.0
  %860 = vmatprep.subr.mxu0 0.0
  %861 = vmatpush1.msra.mxu0 0.0
  %862 = vmatprep.subr.mxu0 0.0
  %863 = vmatpush1.msra.mxu0 0.0
  %864 = vmatprep.subr.mxu0 0.0
  %865 = vmatpush1.msra.mxu0 0.0
  %866 = vmatprep.subr.mxu0 0.0
  %867 = vmatpush1.msra.mxu0 0.0
  %868 = vmatprep.subr.mxu0 0.0
  %869 = vmatpush1.msra.mxu0 0.0
  %870 = vmatprep.subr.mxu0 0.0
  %871 = vmatpush1.msra.mxu0 0.0
  %872 = vmatprep.subr.mxu0 0.0
  %873 = vmatpush1.msra.mxu0 0.0
  %874 = vmatprep.subr.mxu0 0.0
  %875 = vmatpush1.msra.mxu0 0.0
  %876 = vmatprep.subr.mxu0 0.0
  %877 = vmatpush1.msra.mxu0 0.0
  %878 = vmatprep.subr.mxu0 0.0
  %879 = vmatpush1.msra.mxu0 0.0
  %880 = vmatprep.subr.mxu0 0.0
  %881 = vmatpush1.msra.mxu0 0.0
  %882 = vmatprep.subr.mxu0 0.0
  %883 = vmatpush1.msra.mxu0 0.0
  %884 = vmatprep.subr.mxu0 0.0
  %885 = vmatpush1.msra.mxu0 0.0
  %886 = vmatprep.subr.mxu0 0.0
  %887 = vmatpush1.msra.mxu0 0.0
  %888 = vmatprep.mubr.f32.mxu0 0.0
  %889 = vmatmul.mubr.f32.gmra.mrb[0].mxu0 %v144
  %v890 = vpop.f32.mrb[0].mxu0
  %v891 = vadd.f32 %v822, %v890
  %v892 = vpop.f32.mrb[0].mxu0
  %893 = vmatprep.mubr.f32.mxu0 0.0
  %894 = vmatmul.mubr.f32.gmra.mrb[0].mxu0 %v147
  %v895 = vpop.f32.mrb[0].mxu0
  %v896 = vadd.f32 %v822, %v895
  %v897 = vpop.f32.mrb[0].mxu0
  %898 = vdwg.mxu0
  %v899 = vmul.f32 %v891, 0.25
  %v900 = vmul.f32 %v896, 0.25
  %s901 = scalar_lea.vmem %s5, 32
  %v902 = vld [vmem:[%s901] sm:$0xff]
  %v903 = vld [vmem:[%s901 + $0x8] sm:$0xff]
  %v904 = vld [vmem:[%s901 + $0x10] sm:$0xff]
  %v905 = vld [vmem:[%s901 + $0x18] sm:$0xff]
  %s906 = scalar_lea.vmem %s8, 1
  %v907 = vld [vmem:[%s906] sm:$0x1]
  %v909 = vlaneseq
  %v910 = vshrl.u32 %v909, 7
  %v911 = vsub.s32 0, %v910
  %v912 = vrot.slane %v907, %v911
  %914 = vmatprep.subr.mxu0 0.0
  %915 = vmatpush1.msra.mxu0 %v902
  %916 = vmatprep.subr.mxu0 0.0
  %917 = vmatpush1.msra.mxu0 %v903
  %918 = vmatprep.subr.mxu0 0.0
  %919 = vmatpush1.msra.mxu0 %v904
  %920 = vmatprep.subr.mxu0 0.0
  %921 = vmatpush1.msra.mxu0 %v905
  %922 = vmatprep.subr.mxu0 0.0
  %923 = vmatpush1.msra.mxu0 0.0
  %924 = vmatprep.subr.mxu0 0.0
  %925 = vmatpush1.msra.mxu0 0.0
  %926 = vmatprep.subr.mxu0 0.0
  %927 = vmatpush1.msra.mxu0 0.0
  %928 = vmatprep.subr.mxu0 0.0
  %929 = vmatpush1.msra.mxu0 0.0
  %930 = vmatprep.subr.mxu0 0.0
  %931 = vmatpush1.msra.mxu0 0.0
  %932 = vmatprep.subr.mxu0 0.0
  %933 = vmatpush1.msra.mxu0 0.0
  %934 = vmatprep.subr.mxu0 0.0
  %935 = vmatpush1.msra.mxu0 0.0
  %936 = vmatprep.subr.mxu0 0.0
  %937 = vmatpush1.msra.mxu0 0.0
  %938 = vmatprep.subr.mxu0 0.0
  %939 = vmatpush1.msra.mxu0 0.0
  %940 = vmatprep.subr.mxu0 0.0
  %941 = vmatpush1.msra.mxu0 0.0
  %942 = vmatprep.subr.mxu0 0.0
  %943 = vmatpush1.msra.mxu0 0.0
  %944 = vmatprep.subr.mxu0 0.0
  %945 = vmatpush1.msra.mxu0 0.0
  %946 = vmatprep.subr.mxu0 0.0
  %947 = vmatpush1.msra.mxu0 0.0
  %948 = vmatprep.subr.mxu0 0.0
  %949 = vmatpush1.msra.mxu0 0.0
  %950 = vmatprep.subr.mxu0 0.0
  %951 = vmatpush1.msra.mxu0 0.0
  %952 = vmatprep.subr.mxu0 0.0
  %953 = vmatpush1.msra.mxu0 0.0
  %954 = vmatprep.subr.mxu0 0.0
  %955 = vmatpush1.msra.mxu0 0.0
  %956 = vmatprep.subr.mxu0 0.0
  %957 = vmatpush1.msra.mxu0 0.0
  %958 = vmatprep.subr.mxu0 0.0
  %959 = vmatpush1.msra.mxu0 0.0
  %960 = vmatprep.subr.mxu0 0.0
  %961 = vmatpush1.msra.mxu0 0.0
  %962 = vmatprep.subr.mxu0 0.0
  %963 = vmatpush1.msra.mxu0 0.0
  %964 = vmatprep.subr.mxu0 0.0
  %965 = vmatpush1.msra.mxu0 0.0
  %966 = vmatprep.subr.mxu0 0.0
  %967 = vmatpush1.msra.mxu0 0.0
  %968 = vmatprep.subr.mxu0 0.0
  %969 = vmatpush1.msra.mxu0 0.0
  %970 = vmatprep.subr.mxu0 0.0
  %971 = vmatpush1.msra.mxu0 0.0
  %972 = vmatprep.subr.mxu0 0.0
  %973 = vmatpush1.msra.mxu0 0.0
  %974 = vmatprep.subr.mxu0 0.0
  %975 = vmatpush1.msra.mxu0 0.0
  %976 = vmatprep.subr.mxu0 0.0
  %977 = vmatpush1.msra.mxu0 0.0
  %978 = vmatprep.mubr.f32.mxu0 0.0
  %979 = vmatmul.mubr.f32.gmra.mrb[0].mxu0 %v238
  %v980 = vpop.f32.mrb[0].mxu0
  %v981 = vadd.f32 %v912, %v980
  %v982 = vpop.f32.mrb[0].mxu0
  %983 = vmatprep.mubr.f32.mxu0 0.0
  %984 = vmatmul.mubr.f32.gmra.mrb[0].mxu0 %v241
  %v985 = vpop.f32.mrb[0].mxu0
  %v986 = vadd.f32 %v912, %v985
  %v987 = vpop.f32.mrb[0].mxu0
  %988 = vdwg.mxu0
  %s989 = scalar_lea.vmem %s6, 32
  %v990 = vld [vmem:[%s989] sm:$0xff]
  %v991 = vld [vmem:[%s989 + $0x8] sm:$0xff]
  %v992 = vld [vmem:[%s989 + $0x10] sm:$0xff]
  %v993 = vld [vmem:[%s989 + $0x18] sm:$0xff]
  %s994 = scalar_lea.vmem %s9, 1
  %v995 = vld [vmem:[%s994] sm:$0x1]
  %v997 = vlaneseq
  %v998 = vshrl.u32 %v997, 7
  %v999 = vsub.s32 0, %v998
  %v1000 = vrot.slane %v995, %v999
  %1002 = vmatprep.subr.mxu0 0.0
  %1003 = vmatpush1.msra.mxu0 %v990
  %1004 = vmatprep.subr.mxu0 0.0
  %1005 = vmatpush1.msra.mxu0 %v991
  %1006 = vmatprep.subr.mxu0 0.0
  %1007 = vmatpush1.msra.mxu0 %v992
  %1008 = vmatprep.subr.mxu0 0.0
  %1009 = vmatpush1.msra.mxu0 %v993
  %1010 = vmatprep.subr.mxu0 0.0
  %1011 = vmatpush1.msra.mxu0 0.0
  %1012 = vmatprep.subr.mxu0 0.0
  %1013 = vmatpush1.msra.mxu0 0.0
  %1014 = vmatprep.subr.mxu0 0.0
  %1015 = vmatpush1.msra.mxu0 0.0
  %1016 = vmatprep.subr.mxu0 0.0
  %1017 = vmatpush1.msra.mxu0 0.0
  %1018 = vmatprep.subr.mxu0 0.0
  %1019 = vmatpush1.msra.mxu0 0.0
  %1020 = vmatprep.subr.mxu0 0.0
  %1021 = vmatpush1.msra.mxu0 0.0
  %1022 = vmatprep.subr.mxu0 0.0
  %1023 = vmatpush1.msra.mxu0 0.0
  %1024 = vmatprep.subr.mxu0 0.0
  %1025 = vmatpush1.msra.mxu0 0.0
  %1026 = vmatprep.subr.mxu0 0.0
  %1027 = vmatpush1.msra.mxu0 0.0
  %1028 = vmatprep.subr.mxu0 0.0
  %1029 = vmatpush1.msra.mxu0 0.0
  %1030 = vmatprep.subr.mxu0 0.0
  %1031 = vmatpush1.msra.mxu0 0.0
  %1032 = vmatprep.subr.mxu0 0.0
  %1033 = vmatpush1.msra.mxu0 0.0
  %1034 = vmatprep.subr.mxu0 0.0
  %1035 = vmatpush1.msra.mxu0 0.0
  %1036 = vmatprep.subr.mxu0 0.0
  %1037 = vmatpush1.msra.mxu0 0.0
  %1038 = vmatprep.subr.mxu0 0.0
  %1039 = vmatpush1.msra.mxu0 0.0
  %1040 = vmatprep.subr.mxu0 0.0
  %1041 = vmatpush1.msra.mxu0 0.0
  %1042 = vmatprep.subr.mxu0 0.0
  %1043 = vmatpush1.msra.mxu0 0.0
  %1044 = vmatprep.subr.mxu0 0.0
  %1045 = vmatpush1.msra.mxu0 0.0
  %1046 = vmatprep.subr.mxu0 0.0
  %1047 = vmatpush1.msra.mxu0 0.0
  %1048 = vmatprep.subr.mxu0 0.0
  %1049 = vmatpush1.msra.mxu0 0.0
  %1050 = vmatprep.subr.mxu0 0.0
  %1051 = vmatpush1.msra.mxu0 0.0
  %1052 = vmatprep.subr.mxu0 0.0
  %1053 = vmatpush1.msra.mxu0 0.0
  %1054 = vmatprep.subr.mxu0 0.0
  %1055 = vmatpush1.msra.mxu0 0.0
  %1056 = vmatprep.subr.mxu0 0.0
  %1057 = vmatpush1.msra.mxu0 0.0
  %1058 = vmatprep.subr.mxu0 0.0
  %1059 = vmatpush1.msra.mxu0 0.0
  %1060 = vmatprep.subr.mxu0 0.0
  %1061 = vmatpush1.msra.mxu0 0.0
  %1062 = vmatprep.subr.mxu0 0.0
  %1063 = vmatpush1.msra.mxu0 0.0
  %1064 = vmatprep.subr.mxu0 0.0
  %1065 = vmatpush1.msra.mxu0 0.0
  %1066 = vmatprep.mubr.f32.mxu0 0.0
  %1067 = vmatmul.mubr.f32.gmra.mrb[0].mxu0 %v238
  %v1068 = vpop.f32.mrb[0].mxu0
  %v1069 = vadd.f32 %v1000, %v1068
  %v1070 = vpop.f32.mrb[0].mxu0
  %1071 = vmatprep.mubr.f32.mxu0 0.0
  %1072 = vmatmul.mubr.f32.gmra.mrb[0].mxu0 %v241
  %v1073 = vpop.f32.mrb[0].mxu0
  %v1074 = vadd.f32 %v1000, %v1073
  %v1075 = vpop.f32.mrb[0].mxu0
  %1076 = vdwg.mxu0
  %v1078 = vsel %vm404, %v899, 0
  %v1081 = vsel %vm404, %v981, 0
  %1083 = vmatprep.subr.mxu0 0.0
  %1084 = vmatpush1.xpose.msra.mxu0 %v1081
  %1085 = vmatprep.subr.mxu0 0.0
  %1086 = vmatpush1.xpose.msra.mxu0 0.0
  %1087 = vmatprep.subr.mxu0 0.0
  %1088 = vmatpush1.xpose.msra.mxu0 0.0
  %1089 = vmatprep.subr.mxu0 0.0
  %1090 = vmatpush1.xpose.msra.mxu0 0.0
  %1091 = vmatprep.subr.mxu0 0.0
  %1092 = vmatpush1.xpose.msra.mxu0 0.0
  %1093 = vmatprep.subr.mxu0 0.0
  %1094 = vmatpush1.xpose.msra.mxu0 0.0
  %1095 = vmatprep.subr.mxu0 0.0
  %1096 = vmatpush1.xpose.msra.mxu0 0.0
  %1097 = vmatprep.subr.mxu0 0.0
  %1098 = vmatpush1.xpose.msra.mxu0 0.0
  %1099 = vmatprep.subr.mxu0 0.0
  %1100 = vmatpush1.xpose.msra.mxu0 0.0
  %1101 = vmatprep.subr.mxu0 0.0
  %1102 = vmatpush1.xpose.msra.mxu0 0.0
  %1103 = vmatprep.subr.mxu0 0.0
  %1104 = vmatpush1.xpose.msra.mxu0 0.0
  %1105 = vmatprep.subr.mxu0 0.0
  %1106 = vmatpush1.xpose.msra.mxu0 0.0
  %1107 = vmatprep.subr.mxu0 0.0
  %1108 = vmatpush1.xpose.msra.mxu0 0.0
  %1109 = vmatprep.subr.mxu0 0.0
  %1110 = vmatpush1.xpose.msra.mxu0 0.0
  %1111 = vmatprep.subr.mxu0 0.0
  %1112 = vmatpush1.xpose.msra.mxu0 0.0
  %1113 = vmatprep.subr.mxu0 0.0
  %1114 = vmatpush1.xpose.msra.mxu0 0.0
  %1115 = vmatprep.subr.mxu0 0.0
  %1116 = vmatpush1.xpose.msra.mxu0 0.0
  %1117 = vmatprep.subr.mxu0 0.0
  %1118 = vmatpush1.xpose.msra.mxu0 0.0
  %1119 = vmatprep.subr.mxu0 0.0
  %1120 = vmatpush1.xpose.msra.mxu0 0.0
  %1121 = vmatprep.subr.mxu0 0.0
  %1122 = vmatpush1.xpose.msra.mxu0 0.0
  %1123 = vmatprep.subr.mxu0 0.0
  %1124 = vmatpush1.xpose.msra.mxu0 0.0
  %1125 = vmatprep.subr.mxu0 0.0
  %1126 = vmatpush1.xpose.msra.mxu0 0.0
  %1127 = vmatprep.subr.mxu0 0.0
  %1128 = vmatpush1.xpose.msra.mxu0 0.0
  %1129 = vmatprep.subr.mxu0 0.0
  %1130 = vmatpush1.xpose.msra.mxu0 0.0
  %1131 = vmatprep.subr.mxu0 0.0
  %1132 = vmatpush1.xpose.msra.mxu0 0.0
  %1133 = vmatprep.subr.mxu0 0.0
  %1134 = vmatpush1.xpose.msra.mxu0 0.0
  %1135 = vmatprep.subr.mxu0 0.0
  %1136 = vmatpush1.xpose.msra.mxu0 0.0
  %1137 = vmatprep.subr.mxu0 0.0
  %1138 = vmatpush1.xpose.msra.mxu0 0.0
  %1139 = vmatprep.subr.mxu0 0.0
  %1140 = vmatpush1.xpose.msra.mxu0 0.0
  %1141 = vmatprep.subr.mxu0 0.0
  %1142 = vmatpush1.xpose.msra.mxu0 0.0
  %1143 = vmatprep.subr.mxu0 0.0
  %1144 = vmatpush1.xpose.msra.mxu0 0.0
  %1145 = vmatprep.subr.mxu0 0.0
  %1146 = vmatpush1.xpose.msra.mxu0 0.0
  %1147 = vmatprep.mubr.f32.mxu0 0.0
  %1148 = vmatmul.mubr.f32.gmra.mrb[0].mxu0 %v1078
  %v1149 = vpop.f32.mrb[0].mxu0
  %v1150 = vadd.f32 %v77, %v1149
  %v1151 = vpop.f32.mrb[0].mxu0
  %1152 = vdwg.mxu0
  %v1154 = vsel %vm404, %v900, 0
  %v1157 = vsel %vm404, %v986, 0
  %1159 = vmatprep.subr.mxu0 0.0
  %1160 = vmatpush1.xpose.msra.mxu0 %v1157
  %1161 = vmatprep.subr.mxu0 0.0
  %1162 = vmatpush1.xpose.msra.mxu0 0.0
  %1163 = vmatprep.subr.mxu0 0.0
  %1164 = vmatpush1.xpose.msra.mxu0 0.0
  %1165 = vmatprep.subr.mxu0 0.0
  %1166 = vmatpush1.xpose.msra.mxu0 0.0
  %1167 = vmatprep.subr.mxu0 0.0
  %1168 = vmatpush1.xpose.msra.mxu0 0.0
  %1169 = vmatprep.subr.mxu0 0.0
  %1170 = vmatpush1.xpose.msra.mxu0 0.0
  %1171 = vmatprep.subr.mxu0 0.0
  %1172 = vmatpush1.xpose.msra.mxu0 0.0
  %1173 = vmatprep.subr.mxu0 0.0
  %1174 = vmatpush1.xpose.msra.mxu0 0.0
  %1175 = vmatprep.subr.mxu0 0.0
  %1176 = vmatpush1.xpose.msra.mxu0 0.0
  %1177 = vmatprep.subr.mxu0 0.0
  %1178 = vmatpush1.xpose.msra.mxu0 0.0
  %1179 = vmatprep.subr.mxu0 0.0
  %1180 = vmatpush1.xpose.msra.mxu0 0.0
  %1181 = vmatprep.subr.mxu0 0.0
  %1182 = vmatpush1.xpose.msra.mxu0 0.0
  %1183 = vmatprep.subr.mxu0 0.0
  %1184 = vmatpush1.xpose.msra.mxu0 0.0
  %1185 = vmatprep.subr.mxu0 0.0
  %1186 = vmatpush1.xpose.msra.mxu0 0.0
  %1187 = vmatprep.subr.mxu0 0.0
  %1188 = vmatpush1.xpose.msra.mxu0 0.0
  %1189 = vmatprep.subr.mxu0 0.0
  %1190 = vmatpush1.xpose.msra.mxu0 0.0
  %1191 = vmatprep.subr.mxu0 0.0
  %1192 = vmatpush1.xpose.msra.mxu0 0.0
  %1193 = vmatprep.subr.mxu0 0.0
  %1194 = vmatpush1.xpose.msra.mxu0 0.0
  %1195 = vmatprep.subr.mxu0 0.0
  %1196 = vmatpush1.xpose.msra.mxu0 0.0
  %1197 = vmatprep.subr.mxu0 0.0
  %1198 = vmatpush1.xpose.msra.mxu0 0.0
  %1199 = vmatprep.subr.mxu0 0.0
  %1200 = vmatpush1.xpose.msra.mxu0 0.0
  %1201 = vmatprep.subr.mxu0 0.0
  %1202 = vmatpush1.xpose.msra.mxu0 0.0
  %1203 = vmatprep.subr.mxu0 0.0
  %1204 = vmatpush1.xpose.msra.mxu0 0.0
  %1205 = vmatprep.subr.mxu0 0.0
  %1206 = vmatpush1.xpose.msra.mxu0 0.0
  %1207 = vmatprep.subr.mxu0 0.0
  %1208 = vmatpush1.xpose.msra.mxu0 0.0
  %1209 = vmatprep.subr.mxu0 0.0
  %1210 = vmatpush1.xpose.msra.mxu0 0.0
  %1211 = vmatprep.subr.mxu0 0.0
  %1212 = vmatpush1.xpose.msra.mxu0 0.0
  %1213 = vmatprep.subr.mxu0 0.0
  %1214 = vmatpush1.xpose.msra.mxu0 0.0
  %1215 = vmatprep.subr.mxu0 0.0
  %1216 = vmatpush1.xpose.msra.mxu0 0.0
  %1217 = vmatprep.subr.mxu0 0.0
  %1218 = vmatpush1.xpose.msra.mxu0 0.0
  %1219 = vmatprep.subr.mxu0 0.0
  %1220 = vmatpush1.xpose.msra.mxu0 0.0
  %1221 = vmatprep.subr.mxu0 0.0
  %1222 = vmatpush1.xpose.msra.mxu0 0.0
  %1223 = vmatprep.mubr.f32.mxu0 0.0
  %1224 = vmatmul.mubr.f32.gmra.mrb[0].mxu0 %v1154
  %v1225 = vpop.f32.mrb[0].mxu0
  %v1226 = vadd.f32 %v77, %v1225
  %v1227 = vpop.f32.mrb[0].mxu0
  %1228 = vdwg.mxu0
  %v1229 = vsel %vm557, %v1150, -inf
  %1230 = vmax.xlane.f32.xlu0 %v1229
  %v1231 = vpop.xlane.xlu0 %1230
  %v1232 = vsel %vm557, %v1226, -inf
  %1233 = vmax.xlane.f32.xlu0 %v1232
  %v1234 = vpop.xlane.xlu0 %1233
  %v1235 = vsub.f32 %v1150, %v1231
  %v1236 = vsub.f32 %v1226, %v1234
  %v1237 = vmul.f32 %v1235, 1.442695
  %v1238 = vpow.pop %v1237
  %v1239 = vmul.f32 %v1236, 1.442695
  %v1240 = vpow.pop %v1239
  %v1241 = vsel %vm557, %v1238, 0.0
  %1242 = vadd.xlane.f32.xlu0 %v1241
  %v1243 = vpop.xlane.xlu0 %1242
  %v1244 = vsel %vm557, %v1240, 0.0
  %1245 = vadd.xlane.f32.xlu0 %v1244
  %v1246 = vpop.xlane.xlu0 %1245
  %v1247 = vrcp.pop %v1243
  %v1248 = vrcp.pop %v1246
  %v1249 = vmul.f32 %v1238, %v1247
  %v1250 = vmul.f32 %v1240, %v1248
  %v1252 = vsel %vm557, %v1249, 0
  %1254 = vmatprep.subr.mxu0 0.0
  %1255 = vmatpush1.msra.mxu0 %v1069
  %1256 = vmatprep.subr.mxu0 0.0
  %1257 = vmatpush1.msra.mxu0 0.0
  %1258 = vmatprep.subr.mxu0 0.0
  %1259 = vmatpush1.msra.mxu0 0.0
  %1260 = vmatprep.subr.mxu0 0.0
  %1261 = vmatpush1.msra.mxu0 0.0
  %1262 = vmatprep.subr.mxu0 0.0
  %1263 = vmatpush1.msra.mxu0 0.0
  %1264 = vmatprep.subr.mxu0 0.0
  %1265 = vmatpush1.msra.mxu0 0.0
  %1266 = vmatprep.subr.mxu0 0.0
  %1267 = vmatpush1.msra.mxu0 0.0
  %1268 = vmatprep.subr.mxu0 0.0
  %1269 = vmatpush1.msra.mxu0 0.0
  %1270 = vmatprep.subr.mxu0 0.0
  %1271 = vmatpush1.msra.mxu0 0.0
  %1272 = vmatprep.subr.mxu0 0.0
  %1273 = vmatpush1.msra.mxu0 0.0
  %1274 = vmatprep.subr.mxu0 0.0
  %1275 = vmatpush1.msra.mxu0 0.0
  %1276 = vmatprep.subr.mxu0 0.0
  %1277 = vmatpush1.msra.mxu0 0.0
  %1278 = vmatprep.subr.mxu0 0.0
  %1279 = vmatpush1.msra.mxu0 0.0
  %1280 = vmatprep.subr.mxu0 0.0
  %1281 = vmatpush1.msra.mxu0 0.0
  %1282 = vmatprep.subr.mxu0 0.0
  %1283 = vmatpush1.msra.mxu0 0.0
  %1284 = vmatprep.subr.mxu0 0.0
  %1285 = vmatpush1.msra.mxu0 0.0
  %1286 = vmatprep.subr.mxu0 0.0
  %1287 = vmatpush1.msra.mxu0 0.0
  %1288 = vmatprep.subr.mxu0 0.0
  %1289 = vmatpush1.msra.mxu0 0.0
  %1290 = vmatprep.subr.mxu0 0.0
  %1291 = vmatpush1.msra.mxu0 0.0
  %1292 = vmatprep.subr.mxu0 0.0
  %1293 = vmatpush1.msra.mxu0 0.0
  %1294 = vmatprep.subr.mxu0 0.0
  %1295 = vmatpush1.msra.mxu0 0.0
  %1296 = vmatprep.subr.mxu0 0.0
  %1297 = vmatpush1.msra.mxu0 0.0
  %1298 = vmatprep.subr.mxu0 0.0
  %1299 = vmatpush1.msra.mxu0 0.0
  %1300 = vmatprep.subr.mxu0 0.0
  %1301 = vmatpush1.msra.mxu0 0.0
  %1302 = vmatprep.subr.mxu0 0.0
  %1303 = vmatpush1.msra.mxu0 0.0
  %1304 = vmatprep.subr.mxu0 0.0
  %1305 = vmatpush1.msra.mxu0 0.0
  %1306 = vmatprep.subr.mxu0 0.0
  %1307 = vmatpush1.msra.mxu0 0.0
  %1308 = vmatprep.subr.mxu0 0.0
  %1309 = vmatpush1.msra.mxu0 0.0
  %1310 = vmatprep.subr.mxu0 0.0
  %1311 = vmatpush1.msra.mxu0 0.0
  %1312 = vmatprep.subr.mxu0 0.0
  %1313 = vmatpush1.msra.mxu0 0.0
  %1314 = vmatprep.subr.mxu0 0.0
  %1315 = vmatpush1.msra.mxu0 0.0
  %1316 = vmatprep.subr.mxu0 0.0
  %1317 = vmatpush1.msra.mxu0 0.0
  %1318 = vmatprep.mubr.f32.mxu0 0.0
  %1319 = vmatmul.mubr.f32.gmra.mrb[0].mxu0 %v1252
  %v1320 = vpop.f32.mrb[0].mxu0
  %v1321 = vadd.f32 0.0, %v1320
  %v1322 = vpop.f32.mrb[0].mxu0
  %1323 = vdwg.mxu0
  %v1325 = vsel %vm557, %v1250, 0
  %1327 = vmatprep.subr.mxu0 0.0
  %1328 = vmatpush1.msra.mxu0 %v1074
  %1329 = vmatprep.subr.mxu0 0.0
  %1330 = vmatpush1.msra.mxu0 0.0
  %1331 = vmatprep.subr.mxu0 0.0
  %1332 = vmatpush1.msra.mxu0 0.0
  %1333 = vmatprep.subr.mxu0 0.0
  %1334 = vmatpush1.msra.mxu0 0.0
  %1335 = vmatprep.subr.mxu0 0.0
  %1336 = vmatpush1.msra.mxu0 0.0
  %1337 = vmatprep.subr.mxu0 0.0
  %1338 = vmatpush1.msra.mxu0 0.0
  %1339 = vmatprep.subr.mxu0 0.0
  %1340 = vmatpush1.msra.mxu0 0.0
  %1341 = vmatprep.subr.mxu0 0.0
  %1342 = vmatpush1.msra.mxu0 0.0
  %1343 = vmatprep.subr.mxu0 0.0
  %1344 = vmatpush1.msra.mxu0 0.0
  %1345 = vmatprep.subr.mxu0 0.0
  %1346 = vmatpush1.msra.mxu0 0.0
  %1347 = vmatprep.subr.mxu0 0.0
  %1348 = vmatpush1.msra.mxu0 0.0
  %1349 = vmatprep.subr.mxu0 0.0
  %1350 = vmatpush1.msra.mxu0 0.0
  %1351 = vmatprep.subr.mxu0 0.0
  %1352 = vmatpush1.msra.mxu0 0.0
  %1353 = vmatprep.subr.mxu0 0.0
  %1354 = vmatpush1.msra.mxu0 0.0
  %1355 = vmatprep.subr.mxu0 0.0
  %1356 = vmatpush1.msra.mxu0 0.0
  %1357 = vmatprep.subr.mxu0 0.0
  %1358 = vmatpush1.msra.mxu0 0.0
  %1359 = vmatprep.subr.mxu0 0.0
  %1360 = vmatpush1.msra.mxu0 0.0
  %1361 = vmatprep.subr.mxu0 0.0
  %1362 = vmatpush1.msra.mxu0 0.0
  %1363 = vmatprep.subr.mxu0 0.0
  %1364 = vmatpush1.msra.mxu0 0.0
  %1365 = vmatprep.subr.mxu0 0.0
  %1366 = vmatpush1.msra.mxu0 0.0
  %1367 = vmatprep.subr.mxu0 0.0
  %1368 = vmatpush1.msra.mxu0 0.0
  %1369 = vmatprep.subr.mxu0 0.0
  %1370 = vmatpush1.msra.mxu0 0.0
  %1371 = vmatprep.subr.mxu0 0.0
  %1372 = vmatpush1.msra.mxu0 0.0
  %1373 = vmatprep.subr.mxu0 0.0
  %1374 = vmatpush1.msra.mxu0 0.0
  %1375 = vmatprep.subr.mxu0 0.0
  %1376 = vmatpush1.msra.mxu0 0.0
  %1377 = vmatprep.subr.mxu0 0.0
  %1378 = vmatpush1.msra.mxu0 0.0
  %1379 = vmatprep.subr.mxu0 0.0
  %1380 = vmatpush1.msra.mxu0 0.0
  %1381 = vmatprep.subr.mxu0 0.0
  %1382 = vmatpush1.msra.mxu0 0.0
  %1383 = vmatprep.subr.mxu0 0.0
  %1384 = vmatpush1.msra.mxu0 0.0
  %1385 = vmatprep.subr.mxu0 0.0
  %1386 = vmatpush1.msra.mxu0 0.0
  %1387 = vmatprep.subr.mxu0 0.0
  %1388 = vmatpush1.msra.mxu0 0.0
  %1389 = vmatprep.subr.mxu0 0.0
  %1390 = vmatpush1.msra.mxu0 0.0
  %1391 = vmatprep.mubr.f32.mxu0 0.0
  %1392 = vmatmul.mubr.f32.gmra.mrb[0].mxu0 %v1325
  %v1393 = vpop.f32.mrb[0].mxu0
  %v1394 = vadd.f32 0.0, %v1393
  %v1395 = vpop.f32.mrb[0].mxu0
  %1396 = vdwg.mxu0
  %s1397 = scalar_lea.vmem %s10, 16
  %v1398 = vld [vmem:[%s1397] sm:$0xff]
  %v1399 = vld [vmem:[%s1397 + $0x8] sm:$0xff]
  %v1401 = vsel %vm404, %v1321, 0
  %v1404 = vsel %vm404, %v1394, 0
  %1406 = vmatprep.subr.mxu0 0.0
  %1407 = vmatpush1.msra.mxu0 %v1398
  %1408 = vmatprep.subr.mxu0 0.0
  %1409 = vmatpush1.msra.mxu0 %v1399
  %1410 = vmatprep.subr.mxu0 0.0
  %1411 = vmatpush1.msra.mxu0 0.0
  %1412 = vmatprep.subr.mxu0 0.0
  %1413 = vmatpush1.msra.mxu0 0.0
  %1414 = vmatprep.subr.mxu0 0.0
  %1415 = vmatpush1.msra.mxu0 0.0
  %1416 = vmatprep.subr.mxu0 0.0
  %1417 = vmatpush1.msra.mxu0 0.0
  %1418 = vmatprep.subr.mxu0 0.0
  %1419 = vmatpush1.msra.mxu0 0.0
  %1420 = vmatprep.subr.mxu0 0.0
  %1421 = vmatpush1.msra.mxu0 0.0
  %1422 = vmatprep.subr.mxu0 0.0
  %1423 = vmatpush1.msra.mxu0 0.0
  %1424 = vmatprep.subr.mxu0 0.0
  %1425 = vmatpush1.msra.mxu0 0.0
  %1426 = vmatprep.subr.mxu0 0.0
  %1427 = vmatpush1.msra.mxu0 0.0
  %1428 = vmatprep.subr.mxu0 0.0
  %1429 = vmatpush1.msra.mxu0 0.0
  %1430 = vmatprep.subr.mxu0 0.0
  %1431 = vmatpush1.msra.mxu0 0.0
  %1432 = vmatprep.subr.mxu0 0.0
  %1433 = vmatpush1.msra.mxu0 0.0
  %1434 = vmatprep.subr.mxu0 0.0
  %1435 = vmatpush1.msra.mxu0 0.0
  %1436 = vmatprep.subr.mxu0 0.0
  %1437 = vmatpush1.msra.mxu0 0.0
  %1438 = vmatprep.subr.mxu0 0.0
  %1439 = vmatpush1.msra.mxu0 0.0
  %1440 = vmatprep.subr.mxu0 0.0
  %1441 = vmatpush1.msra.mxu0 0.0
  %1442 = vmatprep.subr.mxu0 0.0
  %1443 = vmatpush1.msra.mxu0 0.0
  %1444 = vmatprep.subr.mxu0 0.0
  %1445 = vmatpush1.msra.mxu0 0.0
  %1446 = vmatprep.subr.mxu0 0.0
  %1447 = vmatpush1.msra.mxu0 0.0
  %1448 = vmatprep.subr.mxu0 0.0
  %1449 = vmatpush1.msra.mxu0 0.0
  %1450 = vmatprep.subr.mxu0 0.0
  %1451 = vmatpush1.msra.mxu0 0.0
  %1452 = vmatprep.subr.mxu0 0.0
  %1453 = vmatpush1.msra.mxu0 0.0
  %1454 = vmatprep.subr.mxu0 0.0
  %1455 = vmatpush1.msra.mxu0 0.0
  %1456 = vmatprep.subr.mxu0 0.0
  %1457 = vmatpush1.msra.mxu0 0.0
  %1458 = vmatprep.subr.mxu0 0.0
  %1459 = vmatpush1.msra.mxu0 0.0
  %1460 = vmatprep.subr.mxu0 0.0
  %1461 = vmatpush1.msra.mxu0 0.0
  %1462 = vmatprep.subr.mxu0 0.0
  %1463 = vmatpush1.msra.mxu0 0.0
  %1464 = vmatprep.subr.mxu0 0.0
  %1465 = vmatpush1.msra.mxu0 0.0
  %1466 = vmatprep.subr.mxu0 0.0
  %1467 = vmatpush1.msra.mxu0 0.0
  %1468 = vmatprep.subr.mxu0 0.0
  %1469 = vmatpush1.msra.mxu0 0.0
  %1470 = vmatprep.mubr.f32.mxu0 0.0
  %1471 = vmatmul.mubr.f32.gmra.mrb[0].mxu0 %v1401
  %v1472 = vpop.f32.mrb[0].mxu0
  %v1473 = vadd.f32 0.0, %v1472
  %v1474 = vpop.f32.mrb[0].mxu0
  %1475 = vmatprep.mubr.f32.mxu0 0.0
  %1476 = vmatmul.mubr.f32.gmra.mrb[0].mxu0 %v1404
  %v1477 = vpop.f32.mrb[0].mxu0
  %v1478 = vadd.f32 0.0, %v1477
  %v1479 = vpop.f32.mrb[0].mxu0
  %1480 = vdwg.mxu0
  %v1481 = vadd.f32 %v809, %v1473
  %v1482 = vadd.f32 %v810, %v1478
  %v1483 = vadd.f32 %v122, %v1481
  %v1484 = vadd.f32 %v123, %v1482
  %v1485 = vld [vmem:[%s12] sm:$0x1]
  %v1486 = vld [vmem:[%s13] sm:$0x1]
  %v1487 = vsel %vm80, %v1483, 0.0
  %1488 = vadd.xlane.f32.xlu0 %v1487
  %v1489 = vpop.xlane.xlu0 %1488
  %v1490 = vsel %vm80, %v1484, 0.0
  %1491 = vadd.xlane.f32.xlu0 %v1490
  %v1492 = vpop.xlane.xlu0 %1491
  %v1493 = vmul.f32 %v1489, %v87
  %v1494 = vmul.f32 %v1492, %v87
  %v1495 = vsub.f32 %v1483, %v1493
  %v1496 = vsub.f32 %v1484, %v1494
  %v1497 = vmul.f32 %v1495, %v1495
  %v1498 = vmul.f32 %v1496, %v1496
  %v1499 = vsel %vm80, %v1497, 0.0
  %1500 = vadd.xlane.f32.xlu0 %v1499
  %v1501 = vpop.xlane.xlu0 %1500
  %v1502 = vsel %vm80, %v1498, 0.0
  %1503 = vadd.xlane.f32.xlu0 %v1502
  %v1504 = vpop.xlane.xlu0 %1503
  %v1505 = vmul.f32 %v1501, %v87
  %v1506 = vmul.f32 %v1504, %v87
  %v1507 = vadd.f32 %v1505, 1e-08
  %v1508 = vadd.f32 %v1506, 1e-08
  %v1509 = vrsqrt.pop %v1507
  %v1510 = vrsqrt.pop %v1508
  %v1511 = vmul.f32 %v1495, %v1509
  %v1512 = vmul.f32 %v1496, %v1510
  %v1514 = vlaneseq
  %v1515 = vshrl.u32 %v1514, 7
  %v1516 = vsub.s32 0, %v1515
  %v1517 = vrot.slane %v1485, %v1516
  %v1519 = vmul.f32 %v1511, %v1517
  %v1520 = vmul.f32 %v1512, %v1517
  %v1522 = vlaneseq
  %v1523 = vshrl.u32 %v1522, 7
  %v1524 = vsub.s32 0, %v1523
  %v1525 = vrot.slane %v1486, %v1524
  %v1527 = vadd.f32 %v1519, %v1525
  %v1528 = vadd.f32 %v1520, %v1525
  %v1529 = vld [vmem:[%s14] sm:$0xff]
  %v1530 = vld [vmem:[%s14 + $0x8] sm:$0xff]
  %v1531 = vld [vmem:[%s14 + $0x10] sm:$0xff]
  %v1532 = vld [vmem:[%s14 + $0x18] sm:$0xff]
  %v1533 = vld [vmem:[%s15] sm:$0x1]
  %v1535 = vlaneseq
  %v1536 = vshrl.u32 %v1535, 7
  %v1537 = vsub.s32 0, %v1536
  %v1538 = vrot.slane %v1533, %v1537
  %v1541 = vsel %vm80, %v1527, 0
  %v1544 = vsel %vm80, %v1528, 0
  %1546 = vmatprep.subr.mxu0 0.0
  %1547 = vmatpush1.msra.mxu0 %v1529
  %1548 = vmatprep.subr.mxu0 0.0
  %1549 = vmatpush1.msra.mxu0 %v1530
  %1550 = vmatprep.subr.mxu0 0.0
  %1551 = vmatpush1.msra.mxu0 %v1531
  %1552 = vmatprep.subr.mxu0 0.0
  %1553 = vmatpush1.msra.mxu0 %v1532
  %1554 = vmatprep.subr.mxu0 0.0
  %1555 = vmatpush1.msra.mxu0 0.0
  %1556 = vmatprep.subr.mxu0 0.0
  %1557 = vmatpush1.msra.mxu0 0.0
  %1558 = vmatprep.subr.mxu0 0.0
  %1559 = vmatpush1.msra.mxu0 0.0
  %1560 = vmatprep.subr.mxu0 0.0
  %1561 = vmatpush1.msra.mxu0 0.0
  %1562 = vmatprep.subr.mxu0 0.0
  %1563 = vmatpush1.msra.mxu0 0.0
  %1564 = vmatprep.subr.mxu0 0.0
  %1565 = vmatpush1.msra.mxu0 0.0
  %1566 = vmatprep.subr.mxu0 0.0
  %1567 = vmatpush1.msra.mxu0 0.0
  %1568 = vmatprep.subr.mxu0 0.0
  %1569 = vmatpush1.msra.mxu0 0.0
  %1570 = vmatprep.subr.mxu0 0.0
  %1571 = vmatpush1.msra.mxu0 0.0
  %1572 = vmatprep.subr.mxu0 0.0
  %1573 = vmatpush1.msra.mxu0 0.0
  %1574 = vmatprep.subr.mxu0 0.0
  %1575 = vmatpush1.msra.mxu0 0.0
  %1576 = vmatprep.subr.mxu0 0.0
  %1577 = vmatpush1.msra.mxu0 0.0
  %1578 = vmatprep.subr.mxu0 0.0
  %1579 = vmatpush1.msra.mxu0 0.0
  %1580 = vmatprep.subr.mxu0 0.0
  %1581 = vmatpush1.msra.mxu0 0.0
  %1582 = vmatprep.subr.mxu0 0.0
  %1583 = vmatpush1.msra.mxu0 0.0
  %1584 = vmatprep.subr.mxu0 0.0
  %1585 = vmatpush1.msra.mxu0 0.0
  %1586 = vmatprep.subr.mxu0 0.0
  %1587 = vmatpush1.msra.mxu0 0.0
  %1588 = vmatprep.subr.mxu0 0.0
  %1589 = vmatpush1.msra.mxu0 0.0
  %1590 = vmatprep.subr.mxu0 0.0
  %1591 = vmatpush1.msra.mxu0 0.0
  %1592 = vmatprep.subr.mxu0 0.0
  %1593 = vmatpush1.msra.mxu0 0.0
  %1594 = vmatprep.subr.mxu0 0.0
  %1595 = vmatpush1.msra.mxu0 0.0
  %1596 = vmatprep.subr.mxu0 0.0
  %1597 = vmatpush1.msra.mxu0 0.0
  %1598 = vmatprep.subr.mxu0 0.0
  %1599 = vmatpush1.msra.mxu0 0.0
  %1600 = vmatprep.subr.mxu0 0.0
  %1601 = vmatpush1.msra.mxu0 0.0
  %1602 = vmatprep.subr.mxu0 0.0
  %1603 = vmatpush1.msra.mxu0 0.0
  %1604 = vmatprep.subr.mxu0 0.0
  %1605 = vmatpush1.msra.mxu0 0.0
  %1606 = vmatprep.subr.mxu0 0.0
  %1607 = vmatpush1.msra.mxu0 0.0
  %1608 = vmatprep.subr.mxu0 0.0
  %1609 = vmatpush1.msra.mxu0 0.0
  %1610 = vmatprep.mubr.f32.mxu0 0.0
  %1611 = vmatmul.mubr.f32.gmra.mrb[0].mxu0 %v1541
  %v1612 = vpop.f32.mrb[0].mxu0
  %v1613 = vadd.f32 %v1538, %v1612
  %v1614 = vpop.f32.mrb[0].mxu0
  %1615 = vmatprep.mubr.f32.mxu0 0.0
  %1616 = vmatmul.mubr.f32.gmra.mrb[0].mxu0 %v1544
  %v1617 = vpop.f32.mrb[0].mxu0
  %v1618 = vadd.f32 %v1538, %v1617
  %v1619 = vpop.f32.mrb[0].mxu0
  %1620 = vdwg.mxu0
  %v1621 = vmax.f32 %v1613, 0.0
  %v1622 = vmax.f32 %v1618, 0.0
  %v1623 = vld [vmem:[%s16] sm:$0xff]
  %v1624 = vld [vmem:[%s16 + $0x8] sm:$0xff]
  %v1625 = vld [vmem:[%s16 + $0x10] sm:$0xff]
  %v1626 = vld [vmem:[%s16 + $0x18] sm:$0xff]
  %v1627 = vld [vmem:[%s17] sm:$0x1]
  %v1629 = vlaneseq
  %v1630 = vshrl.u32 %v1629, 7
  %v1631 = vsub.s32 0, %v1630
  %v1632 = vrot.slane %v1627, %v1631
  %v1635 = vsel %vm80, %v1621, 0
  %v1638 = vsel %vm80, %v1622, 0
  %1640 = vmatprep.subr.mxu0 0.0
  %1641 = vmatpush1.msra.mxu0 %v1623
  %1642 = vmatprep.subr.mxu0 0.0
  %1643 = vmatpush1.msra.mxu0 %v1624
  %1644 = vmatprep.subr.mxu0 0.0
  %1645 = vmatpush1.msra.mxu0 %v1625
  %1646 = vmatprep.subr.mxu0 0.0
  %1647 = vmatpush1.msra.mxu0 %v1626
  %1648 = vmatprep.subr.mxu0 0.0
  %1649 = vmatpush1.msra.mxu0 0.0
  %1650 = vmatprep.subr.mxu0 0.0
  %1651 = vmatpush1.msra.mxu0 0.0
  %1652 = vmatprep.subr.mxu0 0.0
  %1653 = vmatpush1.msra.mxu0 0.0
  %1654 = vmatprep.subr.mxu0 0.0
  %1655 = vmatpush1.msra.mxu0 0.0
  %1656 = vmatprep.subr.mxu0 0.0
  %1657 = vmatpush1.msra.mxu0 0.0
  %1658 = vmatprep.subr.mxu0 0.0
  %1659 = vmatpush1.msra.mxu0 0.0
  %1660 = vmatprep.subr.mxu0 0.0
  %1661 = vmatpush1.msra.mxu0 0.0
  %1662 = vmatprep.subr.mxu0 0.0
  %1663 = vmatpush1.msra.mxu0 0.0
  %1664 = vmatprep.subr.mxu0 0.0
  %1665 = vmatpush1.msra.mxu0 0.0
  %1666 = vmatprep.subr.mxu0 0.0
  %1667 = vmatpush1.msra.mxu0 0.0
  %1668 = vmatprep.subr.mxu0 0.0
  %1669 = vmatpush1.msra.mxu0 0.0
  %1670 = vmatprep.subr.mxu0 0.0
  %1671 = vmatpush1.msra.mxu0 0.0
  %1672 = vmatprep.subr.mxu0 0.0
  %1673 = vmatpush1.msra.mxu0 0.0
  %1674 = vmatprep.subr.mxu0 0.0
  %1675 = vmatpush1.msra.mxu0 0.0
  %1676 = vmatprep.subr.mxu0 0.0
  %1677 = vmatpush1.msra.mxu0 0.0
  %1678 = vmatprep.subr.mxu0 0.0
  %1679 = vmatpush1.msra.mxu0 0.0
  %1680 = vmatprep.subr.mxu0 0.0
  %1681 = vmatpush1.msra.mxu0 0.0
  %1682 = vmatprep.subr.mxu0 0.0
  %1683 = vmatpush1.msra.mxu0 0.0
  %1684 = vmatprep.subr.mxu0 0.0
  %1685 = vmatpush1.msra.mxu0 0.0
  %1686 = vmatprep.subr.mxu0 0.0
  %1687 = vmatpush1.msra.mxu0 0.0
  %1688 = vmatprep.subr.mxu0 0.0
  %1689 = vmatpush1.msra.mxu0 0.0
  %1690 = vmatprep.subr.mxu0 0.0
  %1691 = vmatpush1.msra.mxu0 0.0
  %1692 = vmatprep.subr.mxu0 0.0
  %1693 = vmatpush1.msra.mxu0 0.0
  %1694 = vmatprep.subr.mxu0 0.0
  %1695 = vmatpush1.msra.mxu0 0.0
  %1696 = vmatprep.subr.mxu0 0.0
  %1697 = vmatpush1.msra.mxu0 0.0
  %1698 = vmatprep.subr.mxu0 0.0
  %1699 = vmatpush1.msra.mxu0 0.0
  %1700 = vmatprep.subr.mxu0 0.0
  %1701 = vmatpush1.msra.mxu0 0.0
  %1702 = vmatprep.subr.mxu0 0.0
  %1703 = vmatpush1.msra.mxu0 0.0
  %1704 = vmatprep.mubr.f32.mxu0 0.0
  %1705 = vmatmul.mubr.f32.gmra.mrb[0].mxu0 %v1635
  %v1706 = vpop.f32.mrb[0].mxu0
  %v1707 = vadd.f32 %v1632, %v1706
  %v1708 = vpop.f32.mrb[0].mxu0
  %1709 = vmatprep.mubr.f32.mxu0 0.0
  %1710 = vmatmul.mubr.f32.gmra.mrb[0].mxu0 %v1638
  %v1711 = vpop.f32.mrb[0].mxu0
  %v1712 = vadd.f32 %v1632, %v1711
  %v1713 = vpop.f32.mrb[0].mxu0
  %1714 = vdwg.mxu0
  %v1715 = vadd.f32 %v1707, %v1527
  %v1716 = vadd.f32 %v1712, %v1528
  %1718 = vset.pattern.permute.xlu0 0
  %1719 = vperm.xlu0 %1718, %v70
  %v1720 = vpop.permute.xlu0 %1719
  %1723 = vset.pattern.permute.xlu0 0
  %1724 = vperm.xlu0 %1723, %v71
  %v1725 = vpop.permute.xlu0 %1724
  %v1727 = vmul.f32 %v1715, %v1720
  %v1728 = vmul.f32 %v1716, %v1725
  %s1729 = scalar_lea.vmem %s2, 1
  %v1730 = vld [vmem:[%s1729] sm:$0x1]
  %s1731 = scalar_lea.vmem %s3, 1
  %v1732 = vld [vmem:[%s1731] sm:$0x1]
  %v1733 = vsel %vm80, %v1727, 0.0
  %1734 = vadd.xlane.f32.xlu0 %v1733
  %v1735 = vpop.xlane.xlu0 %1734
  %v1736 = vsel %vm80, %v1728, 0.0
  %1737 = vadd.xlane.f32.xlu0 %v1736
  %v1738 = vpop.xlane.xlu0 %1737
  %v1739 = vmul.f32 %v1735, %v87
  %v1740 = vmul.f32 %v1738, %v87
  %v1741 = vsub.f32 %v1727, %v1739
  %v1742 = vsub.f32 %v1728, %v1740
  %v1743 = vmul.f32 %v1741, %v1741
  %v1744 = vmul.f32 %v1742, %v1742
  %v1745 = vsel %vm80, %v1743, 0.0
  %1746 = vadd.xlane.f32.xlu0 %v1745
  %v1747 = vpop.xlane.xlu0 %1746
  %v1748 = vsel %vm80, %v1744, 0.0
  %1749 = vadd.xlane.f32.xlu0 %v1748
  %v1750 = vpop.xlane.xlu0 %1749
  %v1751 = vmul.f32 %v1747, %v87
  %v1752 = vmul.f32 %v1750, %v87
  %v1753 = vadd.f32 %v1751, 1e-08
  %v1754 = vadd.f32 %v1752, 1e-08
  %v1755 = vrsqrt.pop %v1753
  %v1756 = vrsqrt.pop %v1754
  %v1757 = vmul.f32 %v1741, %v1755
  %v1758 = vmul.f32 %v1742, %v1756
  %v1760 = vlaneseq
  %v1761 = vshrl.u32 %v1760, 7
  %v1762 = vsub.s32 0, %v1761
  %v1763 = vrot.slane %v1730, %v1762
  %v1765 = vmul.f32 %v1757, %v1763
  %v1766 = vmul.f32 %v1758, %v1763
  %v1768 = vlaneseq
  %v1769 = vshrl.u32 %v1768, 7
  %v1770 = vsub.s32 0, %v1769
  %v1771 = vrot.slane %v1732, %v1770
  %v1773 = vadd.f32 %v1765, %v1771
  %v1774 = vadd.f32 %v1766, %v1771
  %s1775 = scalar_lea.vmem %s11, 1
  %v1776 = vld [vmem:[%s1775] sm:$0x1]
  %v1778 = vlaneseq
  %v1779 = vshrl.u32 %v1778, 7
  %v1780 = vsub.s32 0, %v1779
  %v1781 = vrot.slane %v1776, %v1780
  %v1783 = vadd.f32 %v1781, 0.0
  %s1784 = scalar_lea.vmem %s4, 64
  %v1785 = vld [vmem:[%s1784] sm:$0xff]
  %v1786 = vld [vmem:[%s1784 + $0x8] sm:$0xff]
  %v1787 = vld [vmem:[%s1784 + $0x10] sm:$0xff]
  %v1788 = vld [vmem:[%s1784 + $0x18] sm:$0xff]
  %s1789 = scalar_lea.vmem %s7, 2
  %v1790 = vld [vmem:[%s1789] sm:$0x1]
  %v1792 = vlaneseq
  %v1793 = vshrl.u32 %v1792, 7
  %v1794 = vsub.s32 0, %v1793
  %v1795 = vrot.slane %v1790, %v1794
  %v1798 = vsel %vm80, %v1773, 0
  %v1801 = vsel %vm80, %v1774, 0
  %1803 = vmatprep.subr.mxu0 0.0
  %1804 = vmatpush1.msra.mxu0 %v1785
  %1805 = vmatprep.subr.mxu0 0.0
  %1806 = vmatpush1.msra.mxu0 %v1786
  %1807 = vmatprep.subr.mxu0 0.0
  %1808 = vmatpush1.msra.mxu0 %v1787
  %1809 = vmatprep.subr.mxu0 0.0
  %1810 = vmatpush1.msra.mxu0 %v1788
  %1811 = vmatprep.subr.mxu0 0.0
  %1812 = vmatpush1.msra.mxu0 0.0
  %1813 = vmatprep.subr.mxu0 0.0
  %1814 = vmatpush1.msra.mxu0 0.0
  %1815 = vmatprep.subr.mxu0 0.0
  %1816 = vmatpush1.msra.mxu0 0.0
  %1817 = vmatprep.subr.mxu0 0.0
  %1818 = vmatpush1.msra.mxu0 0.0
  %1819 = vmatprep.subr.mxu0 0.0
  %1820 = vmatpush1.msra.mxu0 0.0
  %1821 = vmatprep.subr.mxu0 0.0
  %1822 = vmatpush1.msra.mxu0 0.0
  %1823 = vmatprep.subr.mxu0 0.0
  %1824 = vmatpush1.msra.mxu0 0.0
  %1825 = vmatprep.subr.mxu0 0.0
  %1826 = vmatpush1.msra.mxu0 0.0
  %1827 = vmatprep.subr.mxu0 0.0
  %1828 = vmatpush1.msra.mxu0 0.0
  %1829 = vmatprep.subr.mxu0 0.0
  %1830 = vmatpush1.msra.mxu0 0.0
  %1831 = vmatprep.subr.mxu0 0.0
  %1832 = vmatpush1.msra.mxu0 0.0
  %1833 = vmatprep.subr.mxu0 0.0
  %1834 = vmatpush1.msra.mxu0 0.0
  %1835 = vmatprep.subr.mxu0 0.0
  %1836 = vmatpush1.msra.mxu0 0.0
  %1837 = vmatprep.subr.mxu0 0.0
  %1838 = vmatpush1.msra.mxu0 0.0
  %1839 = vmatprep.subr.mxu0 0.0
  %1840 = vmatpush1.msra.mxu0 0.0
  %1841 = vmatprep.subr.mxu0 0.0
  %1842 = vmatpush1.msra.mxu0 0.0
  %1843 = vmatprep.subr.mxu0 0.0
  %1844 = vmatpush1.msra.mxu0 0.0
  %1845 = vmatprep.subr.mxu0 0.0
  %1846 = vmatpush1.msra.mxu0 0.0
  %1847 = vmatprep.subr.mxu0 0.0
  %1848 = vmatpush1.msra.mxu0 0.0
  %1849 = vmatprep.subr.mxu0 0.0
  %1850 = vmatpush1.msra.mxu0 0.0
  %1851 = vmatprep.subr.mxu0 0.0
  %1852 = vmatpush1.msra.mxu0 0.0
  %1853 = vmatprep.subr.mxu0 0.0
  %1854 = vmatpush1.msra.mxu0 0.0
  %1855 = vmatprep.subr.mxu0 0.0
  %1856 = vmatpush1.msra.mxu0 0.0
  %1857 = vmatprep.subr.mxu0 0.0
  %1858 = vmatpush1.msra.mxu0 0.0
  %1859 = vmatprep.subr.mxu0 0.0
  %1860 = vmatpush1.msra.mxu0 0.0
  %1861 = vmatprep.subr.mxu0 0.0
  %1862 = vmatpush1.msra.mxu0 0.0
  %1863 = vmatprep.subr.mxu0 0.0
  %1864 = vmatpush1.msra.mxu0 0.0
  %1865 = vmatprep.subr.mxu0 0.0
  %1866 = vmatpush1.msra.mxu0 0.0
  %1867 = vmatprep.mubr.f32.mxu0 0.0
  %1868 = vmatmul.mubr.f32.gmra.mrb[0].mxu0 %v1798
  %v1869 = vpop.f32.mrb[0].mxu0
  %v1870 = vadd.f32 %v1795, %v1869
  %v1871 = vpop.f32.mrb[0].mxu0
  %1872 = vmatprep.mubr.f32.mxu0 0.0
  %1873 = vmatmul.mubr.f32.gmra.mrb[0].mxu0 %v1801
  %v1874 = vpop.f32.mrb[0].mxu0
  %v1875 = vadd.f32 %v1795, %v1874
  %v1876 = vpop.f32.mrb[0].mxu0
  %1877 = vdwg.mxu0
  %v1878 = vmul.f32 %v1870, 0.25
  %v1879 = vmul.f32 %v1875, 0.25
  %s1880 = scalar_lea.vmem %s5, 64
  %v1881 = vld [vmem:[%s1880] sm:$0xff]
  %v1882 = vld [vmem:[%s1880 + $0x8] sm:$0xff]
  %v1883 = vld [vmem:[%s1880 + $0x10] sm:$0xff]
  %v1884 = vld [vmem:[%s1880 + $0x18] sm:$0xff]
  %s1885 = scalar_lea.vmem %s8, 2
  %v1886 = vld [vmem:[%s1885] sm:$0x1]
  %v1888 = vlaneseq
  %v1889 = vshrl.u32 %v1888, 7
  %v1890 = vsub.s32 0, %v1889
  %v1891 = vrot.slane %v1886, %v1890
  %v1894 = vsel %vm80, %v1727, 0
  %v1897 = vsel %vm80, %v1728, 0
  %1899 = vmatprep.subr.mxu0 0.0
  %1900 = vmatpush1.msra.mxu0 %v1881
  %1901 = vmatprep.subr.mxu0 0.0
  %1902 = vmatpush1.msra.mxu0 %v1882
  %1903 = vmatprep.subr.mxu0 0.0
  %1904 = vmatpush1.msra.mxu0 %v1883
  %1905 = vmatprep.subr.mxu0 0.0
  %1906 = vmatpush1.msra.mxu0 %v1884
  %1907 = vmatprep.subr.mxu0 0.0
  %1908 = vmatpush1.msra.mxu0 0.0
  %1909 = vmatprep.subr.mxu0 0.0
  %1910 = vmatpush1.msra.mxu0 0.0
  %1911 = vmatprep.subr.mxu0 0.0
  %1912 = vmatpush1.msra.mxu0 0.0
  %1913 = vmatprep.subr.mxu0 0.0
  %1914 = vmatpush1.msra.mxu0 0.0
  %1915 = vmatprep.subr.mxu0 0.0
  %1916 = vmatpush1.msra.mxu0 0.0
  %1917 = vmatprep.subr.mxu0 0.0
  %1918 = vmatpush1.msra.mxu0 0.0
  %1919 = vmatprep.subr.mxu0 0.0
  %1920 = vmatpush1.msra.mxu0 0.0
  %1921 = vmatprep.subr.mxu0 0.0
  %1922 = vmatpush1.msra.mxu0 0.0
  %1923 = vmatprep.subr.mxu0 0.0
  %1924 = vmatpush1.msra.mxu0 0.0
  %1925 = vmatprep.subr.mxu0 0.0
  %1926 = vmatpush1.msra.mxu0 0.0
  %1927 = vmatprep.subr.mxu0 0.0
  %1928 = vmatpush1.msra.mxu0 0.0
  %1929 = vmatprep.subr.mxu0 0.0
  %1930 = vmatpush1.msra.mxu0 0.0
  %1931 = vmatprep.subr.mxu0 0.0
  %1932 = vmatpush1.msra.mxu0 0.0
  %1933 = vmatprep.subr.mxu0 0.0
  %1934 = vmatpush1.msra.mxu0 0.0
  %1935 = vmatprep.subr.mxu0 0.0
  %1936 = vmatpush1.msra.mxu0 0.0
  %1937 = vmatprep.subr.mxu0 0.0
  %1938 = vmatpush1.msra.mxu0 0.0
  %1939 = vmatprep.subr.mxu0 0.0
  %1940 = vmatpush1.msra.mxu0 0.0
  %1941 = vmatprep.subr.mxu0 0.0
  %1942 = vmatpush1.msra.mxu0 0.0
  %1943 = vmatprep.subr.mxu0 0.0
  %1944 = vmatpush1.msra.mxu0 0.0
  %1945 = vmatprep.subr.mxu0 0.0
  %1946 = vmatpush1.msra.mxu0 0.0
  %1947 = vmatprep.subr.mxu0 0.0
  %1948 = vmatpush1.msra.mxu0 0.0
  %1949 = vmatprep.subr.mxu0 0.0
  %1950 = vmatpush1.msra.mxu0 0.0
  %1951 = vmatprep.subr.mxu0 0.0
  %1952 = vmatpush1.msra.mxu0 0.0
  %1953 = vmatprep.subr.mxu0 0.0
  %1954 = vmatpush1.msra.mxu0 0.0
  %1955 = vmatprep.subr.mxu0 0.0
  %1956 = vmatpush1.msra.mxu0 0.0
  %1957 = vmatprep.subr.mxu0 0.0
  %1958 = vmatpush1.msra.mxu0 0.0
  %1959 = vmatprep.subr.mxu0 0.0
  %1960 = vmatpush1.msra.mxu0 0.0
  %1961 = vmatprep.subr.mxu0 0.0
  %1962 = vmatpush1.msra.mxu0 0.0
  %1963 = vmatprep.mubr.f32.mxu0 0.0
  %1964 = vmatmul.mubr.f32.gmra.mrb[0].mxu0 %v1894
  %v1965 = vpop.f32.mrb[0].mxu0
  %v1966 = vadd.f32 %v1891, %v1965
  %v1967 = vpop.f32.mrb[0].mxu0
  %1968 = vmatprep.mubr.f32.mxu0 0.0
  %1969 = vmatmul.mubr.f32.gmra.mrb[0].mxu0 %v1897
  %v1970 = vpop.f32.mrb[0].mxu0
  %v1971 = vadd.f32 %v1891, %v1970
  %v1972 = vpop.f32.mrb[0].mxu0
  %1973 = vdwg.mxu0
  %s1974 = scalar_lea.vmem %s6, 64
  %v1975 = vld [vmem:[%s1974] sm:$0xff]
  %v1976 = vld [vmem:[%s1974 + $0x8] sm:$0xff]
  %v1977 = vld [vmem:[%s1974 + $0x10] sm:$0xff]
  %v1978 = vld [vmem:[%s1974 + $0x18] sm:$0xff]
  %s1979 = scalar_lea.vmem %s9, 2
  %v1980 = vld [vmem:[%s1979] sm:$0x1]
  %v1982 = vlaneseq
  %v1983 = vshrl.u32 %v1982, 7
  %v1984 = vsub.s32 0, %v1983
  %v1985 = vrot.slane %v1980, %v1984
  %1987 = vmatprep.subr.mxu0 0.0
  %1988 = vmatpush1.msra.mxu0 %v1975
  %1989 = vmatprep.subr.mxu0 0.0
  %1990 = vmatpush1.msra.mxu0 %v1976
  %1991 = vmatprep.subr.mxu0 0.0
  %1992 = vmatpush1.msra.mxu0 %v1977
  %1993 = vmatprep.subr.mxu0 0.0
  %1994 = vmatpush1.msra.mxu0 %v1978
  %1995 = vmatprep.subr.mxu0 0.0
  %1996 = vmatpush1.msra.mxu0 0.0
  %1997 = vmatprep.subr.mxu0 0.0
  %1998 = vmatpush1.msra.mxu0 0.0
  %1999 = vmatprep.subr.mxu0 0.0
  %2000 = vmatpush1.msra.mxu0 0.0
  %2001 = vmatprep.subr.mxu0 0.0
  %2002 = vmatpush1.msra.mxu0 0.0
  %2003 = vmatprep.subr.mxu0 0.0
  %2004 = vmatpush1.msra.mxu0 0.0
  %2005 = vmatprep.subr.mxu0 0.0
  %2006 = vmatpush1.msra.mxu0 0.0
  %2007 = vmatprep.subr.mxu0 0.0
  %2008 = vmatpush1.msra.mxu0 0.0
  %2009 = vmatprep.subr.mxu0 0.0
  %2010 = vmatpush1.msra.mxu0 0.0
  %2011 = vmatprep.subr.mxu0 0.0
  %2012 = vmatpush1.msra.mxu0 0.0
  %2013 = vmatprep.subr.mxu0 0.0
  %2014 = vmatpush1.msra.mxu0 0.0
  %2015 = vmatprep.subr.mxu0 0.0
  %2016 = vmatpush1.msra.mxu0 0.0
  %2017 = vmatprep.subr.mxu0 0.0
  %2018 = vmatpush1.msra.mxu0 0.0
  %2019 = vmatprep.subr.mxu0 0.0
  %2020 = vmatpush1.msra.mxu0 0.0
  %2021 = vmatprep.subr.mxu0 0.0
  %2022 = vmatpush1.msra.mxu0 0.0
  %2023 = vmatprep.subr.mxu0 0.0
  %2024 = vmatpush1.msra.mxu0 0.0
  %2025 = vmatprep.subr.mxu0 0.0
  %2026 = vmatpush1.msra.mxu0 0.0
  %2027 = vmatprep.subr.mxu0 0.0
  %2028 = vmatpush1.msra.mxu0 0.0
  %2029 = vmatprep.subr.mxu0 0.0
  %2030 = vmatpush1.msra.mxu0 0.0
  %2031 = vmatprep.subr.mxu0 0.0
  %2032 = vmatpush1.msra.mxu0 0.0
  %2033 = vmatprep.subr.mxu0 0.0
  %2034 = vmatpush1.msra.mxu0 0.0
  %2035 = vmatprep.subr.mxu0 0.0
  %2036 = vmatpush1.msra.mxu0 0.0
  %2037 = vmatprep.subr.mxu0 0.0
  %2038 = vmatpush1.msra.mxu0 0.0
  %2039 = vmatprep.subr.mxu0 0.0
  %2040 = vmatpush1.msra.mxu0 0.0
  %2041 = vmatprep.subr.mxu0 0.0
  %2042 = vmatpush1.msra.mxu0 0.0
  %2043 = vmatprep.subr.mxu0 0.0
  %2044 = vmatpush1.msra.mxu0 0.0
  %2045 = vmatprep.subr.mxu0 0.0
  %2046 = vmatpush1.msra.mxu0 0.0
  %2047 = vmatprep.subr.mxu0 0.0
  %2048 = vmatpush1.msra.mxu0 0.0
  %2049 = vmatprep.subr.mxu0 0.0
  %2050 = vmatpush1.msra.mxu0 0.0
  %2051 = vmatprep.mubr.f32.mxu0 0.0
  %2052 = vmatmul.mubr.f32.gmra.mrb[0].mxu0 %v1894
  %v2053 = vpop.f32.mrb[0].mxu0
  %v2054 = vadd.f32 %v1985, %v2053
  %v2055 = vpop.f32.mrb[0].mxu0
  %2056 = vmatprep.mubr.f32.mxu0 0.0
  %2057 = vmatmul.mubr.f32.gmra.mrb[0].mxu0 %v1897
  %v2058 = vpop.f32.mrb[0].mxu0
  %v2059 = vadd.f32 %v1985, %v2058
  %v2060 = vpop.f32.mrb[0].mxu0
  %2061 = vdwg.mxu0
  %v2063 = vsel %vm404, %v1878, 0
  %v2066 = vsel %vm404, %v1966, 0
  %2068 = vmatprep.subr.mxu0 0.0
  %2069 = vmatpush1.xpose.msra.mxu0 %v2066
  %2070 = vmatprep.subr.mxu0 0.0
  %2071 = vmatpush1.xpose.msra.mxu0 0.0
  %2072 = vmatprep.subr.mxu0 0.0
  %2073 = vmatpush1.xpose.msra.mxu0 0.0
  %2074 = vmatprep.subr.mxu0 0.0
  %2075 = vmatpush1.xpose.msra.mxu0 0.0
  %2076 = vmatprep.subr.mxu0 0.0
  %2077 = vmatpush1.xpose.msra.mxu0 0.0
  %2078 = vmatprep.subr.mxu0 0.0
  %2079 = vmatpush1.xpose.msra.mxu0 0.0
  %2080 = vmatprep.subr.mxu0 0.0
  %2081 = vmatpush1.xpose.msra.mxu0 0.0
  %2082 = vmatprep.subr.mxu0 0.0
  %2083 = vmatpush1.xpose.msra.mxu0 0.0
  %2084 = vmatprep.subr.mxu0 0.0
  %2085 = vmatpush1.xpose.msra.mxu0 0.0
  %2086 = vmatprep.subr.mxu0 0.0
  %2087 = vmatpush1.xpose.msra.mxu0 0.0
  %2088 = vmatprep.subr.mxu0 0.0
  %2089 = vmatpush1.xpose.msra.mxu0 0.0
  %2090 = vmatprep.subr.mxu0 0.0
  %2091 = vmatpush1.xpose.msra.mxu0 0.0
  %2092 = vmatprep.subr.mxu0 0.0
  %2093 = vmatpush1.xpose.msra.mxu0 0.0
  %2094 = vmatprep.subr.mxu0 0.0
  %2095 = vmatpush1.xpose.msra.mxu0 0.0
  %2096 = vmatprep.subr.mxu0 0.0
  %2097 = vmatpush1.xpose.msra.mxu0 0.0
  %2098 = vmatprep.subr.mxu0 0.0
  %2099 = vmatpush1.xpose.msra.mxu0 0.0
  %2100 = vmatprep.subr.mxu0 0.0
  %2101 = vmatpush1.xpose.msra.mxu0 0.0
  %2102 = vmatprep.subr.mxu0 0.0
  %2103 = vmatpush1.xpose.msra.mxu0 0.0
  %2104 = vmatprep.subr.mxu0 0.0
  %2105 = vmatpush1.xpose.msra.mxu0 0.0
  %2106 = vmatprep.subr.mxu0 0.0
  %2107 = vmatpush1.xpose.msra.mxu0 0.0
  %2108 = vmatprep.subr.mxu0 0.0
  %2109 = vmatpush1.xpose.msra.mxu0 0.0
  %2110 = vmatprep.subr.mxu0 0.0
  %2111 = vmatpush1.xpose.msra.mxu0 0.0
  %2112 = vmatprep.subr.mxu0 0.0
  %2113 = vmatpush1.xpose.msra.mxu0 0.0
  %2114 = vmatprep.subr.mxu0 0.0
  %2115 = vmatpush1.xpose.msra.mxu0 0.0
  %2116 = vmatprep.subr.mxu0 0.0
  %2117 = vmatpush1.xpose.msra.mxu0 0.0
  %2118 = vmatprep.subr.mxu0 0.0
  %2119 = vmatpush1.xpose.msra.mxu0 0.0
  %2120 = vmatprep.subr.mxu0 0.0
  %2121 = vmatpush1.xpose.msra.mxu0 0.0
  %2122 = vmatprep.subr.mxu0 0.0
  %2123 = vmatpush1.xpose.msra.mxu0 0.0
  %2124 = vmatprep.subr.mxu0 0.0
  %2125 = vmatpush1.xpose.msra.mxu0 0.0
  %2126 = vmatprep.subr.mxu0 0.0
  %2127 = vmatpush1.xpose.msra.mxu0 0.0
  %2128 = vmatprep.subr.mxu0 0.0
  %2129 = vmatpush1.xpose.msra.mxu0 0.0
  %2130 = vmatprep.subr.mxu0 0.0
  %2131 = vmatpush1.xpose.msra.mxu0 0.0
  %2132 = vmatprep.mubr.f32.mxu0 0.0
  %2133 = vmatmul.mubr.f32.gmra.mrb[0].mxu0 %v2063
  %v2134 = vpop.f32.mrb[0].mxu0
  %v2135 = vadd.f32 %v77, %v2134
  %v2136 = vpop.f32.mrb[0].mxu0
  %2137 = vdwg.mxu0
  %v2139 = vsel %vm404, %v1879, 0
  %v2142 = vsel %vm404, %v1971, 0
  %2144 = vmatprep.subr.mxu0 0.0
  %2145 = vmatpush1.xpose.msra.mxu0 %v2142
  %2146 = vmatprep.subr.mxu0 0.0
  %2147 = vmatpush1.xpose.msra.mxu0 0.0
  %2148 = vmatprep.subr.mxu0 0.0
  %2149 = vmatpush1.xpose.msra.mxu0 0.0
  %2150 = vmatprep.subr.mxu0 0.0
  %2151 = vmatpush1.xpose.msra.mxu0 0.0
  %2152 = vmatprep.subr.mxu0 0.0
  %2153 = vmatpush1.xpose.msra.mxu0 0.0
  %2154 = vmatprep.subr.mxu0 0.0
  %2155 = vmatpush1.xpose.msra.mxu0 0.0
  %2156 = vmatprep.subr.mxu0 0.0
  %2157 = vmatpush1.xpose.msra.mxu0 0.0
  %2158 = vmatprep.subr.mxu0 0.0
  %2159 = vmatpush1.xpose.msra.mxu0 0.0
  %2160 = vmatprep.subr.mxu0 0.0
  %2161 = vmatpush1.xpose.msra.mxu0 0.0
  %2162 = vmatprep.subr.mxu0 0.0
  %2163 = vmatpush1.xpose.msra.mxu0 0.0
  %2164 = vmatprep.subr.mxu0 0.0
  %2165 = vmatpush1.xpose.msra.mxu0 0.0
  %2166 = vmatprep.subr.mxu0 0.0
  %2167 = vmatpush1.xpose.msra.mxu0 0.0
  %2168 = vmatprep.subr.mxu0 0.0
  %2169 = vmatpush1.xpose.msra.mxu0 0.0
  %2170 = vmatprep.subr.mxu0 0.0
  %2171 = vmatpush1.xpose.msra.mxu0 0.0
  %2172 = vmatprep.subr.mxu0 0.0
  %2173 = vmatpush1.xpose.msra.mxu0 0.0
  %2174 = vmatprep.subr.mxu0 0.0
  %2175 = vmatpush1.xpose.msra.mxu0 0.0
  %2176 = vmatprep.subr.mxu0 0.0
  %2177 = vmatpush1.xpose.msra.mxu0 0.0
  %2178 = vmatprep.subr.mxu0 0.0
  %2179 = vmatpush1.xpose.msra.mxu0 0.0
  %2180 = vmatprep.subr.mxu0 0.0
  %2181 = vmatpush1.xpose.msra.mxu0 0.0
  %2182 = vmatprep.subr.mxu0 0.0
  %2183 = vmatpush1.xpose.msra.mxu0 0.0
  %2184 = vmatprep.subr.mxu0 0.0
  %2185 = vmatpush1.xpose.msra.mxu0 0.0
  %2186 = vmatprep.subr.mxu0 0.0
  %2187 = vmatpush1.xpose.msra.mxu0 0.0
  %2188 = vmatprep.subr.mxu0 0.0
  %2189 = vmatpush1.xpose.msra.mxu0 0.0
  %2190 = vmatprep.subr.mxu0 0.0
  %2191 = vmatpush1.xpose.msra.mxu0 0.0
  %2192 = vmatprep.subr.mxu0 0.0
  %2193 = vmatpush1.xpose.msra.mxu0 0.0
  %2194 = vmatprep.subr.mxu0 0.0
  %2195 = vmatpush1.xpose.msra.mxu0 0.0
  %2196 = vmatprep.subr.mxu0 0.0
  %2197 = vmatpush1.xpose.msra.mxu0 0.0
  %2198 = vmatprep.subr.mxu0 0.0
  %2199 = vmatpush1.xpose.msra.mxu0 0.0
  %2200 = vmatprep.subr.mxu0 0.0
  %2201 = vmatpush1.xpose.msra.mxu0 0.0
  %2202 = vmatprep.subr.mxu0 0.0
  %2203 = vmatpush1.xpose.msra.mxu0 0.0
  %2204 = vmatprep.subr.mxu0 0.0
  %2205 = vmatpush1.xpose.msra.mxu0 0.0
  %2206 = vmatprep.subr.mxu0 0.0
  %2207 = vmatpush1.xpose.msra.mxu0 0.0
  %2208 = vmatprep.mubr.f32.mxu0 0.0
  %2209 = vmatmul.mubr.f32.gmra.mrb[0].mxu0 %v2139
  %v2210 = vpop.f32.mrb[0].mxu0
  %v2211 = vadd.f32 %v77, %v2210
  %v2212 = vpop.f32.mrb[0].mxu0
  %2213 = vdwg.mxu0
  %v2214 = vsel %vm557, %v2135, -inf
  %2215 = vmax.xlane.f32.xlu0 %v2214
  %v2216 = vpop.xlane.xlu0 %2215
  %v2217 = vsel %vm557, %v2211, -inf
  %2218 = vmax.xlane.f32.xlu0 %v2217
  %v2219 = vpop.xlane.xlu0 %2218
  %v2220 = vsub.f32 %v2135, %v2216
  %v2221 = vsub.f32 %v2211, %v2219
  %v2222 = vmul.f32 %v2220, 1.442695
  %v2223 = vpow.pop %v2222
  %v2224 = vmul.f32 %v2221, 1.442695
  %v2225 = vpow.pop %v2224
  %v2226 = vsel %vm557, %v2223, 0.0
  %2227 = vadd.xlane.f32.xlu0 %v2226
  %v2228 = vpop.xlane.xlu0 %2227
  %v2229 = vsel %vm557, %v2225, 0.0
  %2230 = vadd.xlane.f32.xlu0 %v2229
  %v2231 = vpop.xlane.xlu0 %2230
  %v2232 = vrcp.pop %v2228
  %v2233 = vrcp.pop %v2231
  %v2234 = vmul.f32 %v2223, %v2232
  %v2235 = vmul.f32 %v2225, %v2233
  %v2237 = vsel %vm557, %v2234, 0
  %2239 = vmatprep.subr.mxu0 0.0
  %2240 = vmatpush1.msra.mxu0 %v2054
  %2241 = vmatprep.subr.mxu0 0.0
  %2242 = vmatpush1.msra.mxu0 0.0
  %2243 = vmatprep.subr.mxu0 0.0
  %2244 = vmatpush1.msra.mxu0 0.0
  %2245 = vmatprep.subr.mxu0 0.0
  %2246 = vmatpush1.msra.mxu0 0.0
  %2247 = vmatprep.subr.mxu0 0.0
  %2248 = vmatpush1.msra.mxu0 0.0
  %2249 = vmatprep.subr.mxu0 0.0
  %2250 = vmatpush1.msra.mxu0 0.0
  %2251 = vmatprep.subr.mxu0 0.0
  %2252 = vmatpush1.msra.mxu0 0.0
  %2253 = vmatprep.subr.mxu0 0.0
  %2254 = vmatpush1.msra.mxu0 0.0
  %2255 = vmatprep.subr.mxu0 0.0
  %2256 = vmatpush1.msra.mxu0 0.0
  %2257 = vmatprep.subr.mxu0 0.0
  %2258 = vmatpush1.msra.mxu0 0.0
  %2259 = vmatprep.subr.mxu0 0.0
  %2260 = vmatpush1.msra.mxu0 0.0
  %2261 = vmatprep.subr.mxu0 0.0
  %2262 = vmatpush1.msra.mxu0 0.0
  %2263 = vmatprep.subr.mxu0 0.0
  %2264 = vmatpush1.msra.mxu0 0.0
  %2265 = vmatprep.subr.mxu0 0.0
  %2266 = vmatpush1.msra.mxu0 0.0
  %2267 = vmatprep.subr.mxu0 0.0
  %2268 = vmatpush1.msra.mxu0 0.0
  %2269 = vmatprep.subr.mxu0 0.0
  %2270 = vmatpush1.msra.mxu0 0.0
  %2271 = vmatprep.subr.mxu0 0.0
  %2272 = vmatpush1.msra.mxu0 0.0
  %2273 = vmatprep.subr.mxu0 0.0
  %2274 = vmatpush1.msra.mxu0 0.0
  %2275 = vmatprep.subr.mxu0 0.0
  %2276 = vmatpush1.msra.mxu0 0.0
  %2277 = vmatprep.subr.mxu0 0.0
  %2278 = vmatpush1.msra.mxu0 0.0
  %2279 = vmatprep.subr.mxu0 0.0
  %2280 = vmatpush1.msra.mxu0 0.0
  %2281 = vmatprep.subr.mxu0 0.0
  %2282 = vmatpush1.msra.mxu0 0.0
  %2283 = vmatprep.subr.mxu0 0.0
  %2284 = vmatpush1.msra.mxu0 0.0
  %2285 = vmatprep.subr.mxu0 0.0
  %2286 = vmatpush1.msra.mxu0 0.0
  %2287 = vmatprep.subr.mxu0 0.0
  %2288 = vmatpush1.msra.mxu0 0.0
  %2289 = vmatprep.subr.mxu0 0.0
  %2290 = vmatpush1.msra.mxu0 0.0
  %2291 = vmatprep.subr.mxu0 0.0
  %2292 = vmatpush1.msra.mxu0 0.0
  %2293 = vmatprep.subr.mxu0 0.0
  %2294 = vmatpush1.msra.mxu0 0.0
  %2295 = vmatprep.subr.mxu0 0.0
  %2296 = vmatpush1.msra.mxu0 0.0
  %2297 = vmatprep.subr.mxu0 0.0
  %2298 = vmatpush1.msra.mxu0 0.0
  %2299 = vmatprep.subr.mxu0 0.0
  %2300 = vmatpush1.msra.mxu0 0.0
  %2301 = vmatprep.subr.mxu0 0.0
  %2302 = vmatpush1.msra.mxu0 0.0
  %2303 = vmatprep.mubr.f32.mxu0 0.0
  %2304 = vmatmul.mubr.f32.gmra.mrb[0].mxu0 %v2237
  %v2305 = vpop.f32.mrb[0].mxu0
  %v2306 = vadd.f32 0.0, %v2305
  %v2307 = vpop.f32.mrb[0].mxu0
  %2308 = vdwg.mxu0
  %v2310 = vsel %vm557, %v2235, 0
  %2312 = vmatprep.subr.mxu0 0.0
  %2313 = vmatpush1.msra.mxu0 %v2059
  %2314 = vmatprep.subr.mxu0 0.0
  %2315 = vmatpush1.msra.mxu0 0.0
  %2316 = vmatprep.subr.mxu0 0.0
  %2317 = vmatpush1.msra.mxu0 0.0
  %2318 = vmatprep.subr.mxu0 0.0
  %2319 = vmatpush1.msra.mxu0 0.0
  %2320 = vmatprep.subr.mxu0 0.0
  %2321 = vmatpush1.msra.mxu0 0.0
  %2322 = vmatprep.subr.mxu0 0.0
  %2323 = vmatpush1.msra.mxu0 0.0
  %2324 = vmatprep.subr.mxu0 0.0
  %2325 = vmatpush1.msra.mxu0 0.0
  %2326 = vmatprep.subr.mxu0 0.0
  %2327 = vmatpush1.msra.mxu0 0.0
  %2328 = vmatprep.subr.mxu0 0.0
  %2329 = vmatpush1.msra.mxu0 0.0
  %2330 = vmatprep.subr.mxu0 0.0
  %2331 = vmatpush1.msra.mxu0 0.0
  %2332 = vmatprep.subr.mxu0 0.0
  %2333 = vmatpush1.msra.mxu0 0.0
  %2334 = vmatprep.subr.mxu0 0.0
  %2335 = vmatpush1.msra.mxu0 0.0
  %2336 = vmatprep.subr.mxu0 0.0
  %2337 = vmatpush1.msra.mxu0 0.0
  %2338 = vmatprep.subr.mxu0 0.0
  %2339 = vmatpush1.msra.mxu0 0.0
  %2340 = vmatprep.subr.mxu0 0.0
  %2341 = vmatpush1.msra.mxu0 0.0
  %2342 = vmatprep.subr.mxu0 0.0
  %2343 = vmatpush1.msra.mxu0 0.0
  %2344 = vmatprep.subr.mxu0 0.0
  %2345 = vmatpush1.msra.mxu0 0.0
  %2346 = vmatprep.subr.mxu0 0.0
  %2347 = vmatpush1.msra.mxu0 0.0
  %2348 = vmatprep.subr.mxu0 0.0
  %2349 = vmatpush1.msra.mxu0 0.0
  %2350 = vmatprep.subr.mxu0 0.0
  %2351 = vmatpush1.msra.mxu0 0.0
  %2352 = vmatprep.subr.mxu0 0.0
  %2353 = vmatpush1.msra.mxu0 0.0
  %2354 = vmatprep.subr.mxu0 0.0
  %2355 = vmatpush1.msra.mxu0 0.0
  %2356 = vmatprep.subr.mxu0 0.0
  %2357 = vmatpush1.msra.mxu0 0.0
  %2358 = vmatprep.subr.mxu0 0.0
  %2359 = vmatpush1.msra.mxu0 0.0
  %2360 = vmatprep.subr.mxu0 0.0
  %2361 = vmatpush1.msra.mxu0 0.0
  %2362 = vmatprep.subr.mxu0 0.0
  %2363 = vmatpush1.msra.mxu0 0.0
  %2364 = vmatprep.subr.mxu0 0.0
  %2365 = vmatpush1.msra.mxu0 0.0
  %2366 = vmatprep.subr.mxu0 0.0
  %2367 = vmatpush1.msra.mxu0 0.0
  %2368 = vmatprep.subr.mxu0 0.0
  %2369 = vmatpush1.msra.mxu0 0.0
  %2370 = vmatprep.subr.mxu0 0.0
  %2371 = vmatpush1.msra.mxu0 0.0
  %2372 = vmatprep.subr.mxu0 0.0
  %2373 = vmatpush1.msra.mxu0 0.0
  %2374 = vmatprep.subr.mxu0 0.0
  %2375 = vmatpush1.msra.mxu0 0.0
  %2376 = vmatprep.mubr.f32.mxu0 0.0
  %2377 = vmatmul.mubr.f32.gmra.mrb[0].mxu0 %v2310
  %v2378 = vpop.f32.mrb[0].mxu0
  %v2379 = vadd.f32 0.0, %v2378
  %v2380 = vpop.f32.mrb[0].mxu0
  %2381 = vdwg.mxu0
  %s2382 = scalar_lea.vmem %s10, 32
  %v2383 = vld [vmem:[%s2382] sm:$0xff]
  %v2384 = vld [vmem:[%s2382 + $0x8] sm:$0xff]
  %v2386 = vsel %vm404, %v2306, 0
  %v2389 = vsel %vm404, %v2379, 0
  %2391 = vmatprep.subr.mxu0 0.0
  %2392 = vmatpush1.msra.mxu0 %v2383
  %2393 = vmatprep.subr.mxu0 0.0
  %2394 = vmatpush1.msra.mxu0 %v2384
  %2395 = vmatprep.subr.mxu0 0.0
  %2396 = vmatpush1.msra.mxu0 0.0
  %2397 = vmatprep.subr.mxu0 0.0
  %2398 = vmatpush1.msra.mxu0 0.0
  %2399 = vmatprep.subr.mxu0 0.0
  %2400 = vmatpush1.msra.mxu0 0.0
  %2401 = vmatprep.subr.mxu0 0.0
  %2402 = vmatpush1.msra.mxu0 0.0
  %2403 = vmatprep.subr.mxu0 0.0
  %2404 = vmatpush1.msra.mxu0 0.0
  %2405 = vmatprep.subr.mxu0 0.0
  %2406 = vmatpush1.msra.mxu0 0.0
  %2407 = vmatprep.subr.mxu0 0.0
  %2408 = vmatpush1.msra.mxu0 0.0
  %2409 = vmatprep.subr.mxu0 0.0
  %2410 = vmatpush1.msra.mxu0 0.0
  %2411 = vmatprep.subr.mxu0 0.0
  %2412 = vmatpush1.msra.mxu0 0.0
  %2413 = vmatprep.subr.mxu0 0.0
  %2414 = vmatpush1.msra.mxu0 0.0
  %2415 = vmatprep.subr.mxu0 0.0
  %2416 = vmatpush1.msra.mxu0 0.0
  %2417 = vmatprep.subr.mxu0 0.0
  %2418 = vmatpush1.msra.mxu0 0.0
  %2419 = vmatprep.subr.mxu0 0.0
  %2420 = vmatpush1.msra.mxu0 0.0
  %2421 = vmatprep.subr.mxu0 0.0
  %2422 = vmatpush1.msra.mxu0 0.0
  %2423 = vmatprep.subr.mxu0 0.0
  %2424 = vmatpush1.msra.mxu0 0.0
  %2425 = vmatprep.subr.mxu0 0.0
  %2426 = vmatpush1.msra.mxu0 0.0
  %2427 = vmatprep.subr.mxu0 0.0
  %2428 = vmatpush1.msra.mxu0 0.0
  %2429 = vmatprep.subr.mxu0 0.0
  %2430 = vmatpush1.msra.mxu0 0.0
  %2431 = vmatprep.subr.mxu0 0.0
  %2432 = vmatpush1.msra.mxu0 0.0
  %2433 = vmatprep.subr.mxu0 0.0
  %2434 = vmatpush1.msra.mxu0 0.0
  %2435 = vmatprep.subr.mxu0 0.0
  %2436 = vmatpush1.msra.mxu0 0.0
  %2437 = vmatprep.subr.mxu0 0.0
  %2438 = vmatpush1.msra.mxu0 0.0
  %2439 = vmatprep.subr.mxu0 0.0
  %2440 = vmatpush1.msra.mxu0 0.0
  %2441 = vmatprep.subr.mxu0 0.0
  %2442 = vmatpush1.msra.mxu0 0.0
  %2443 = vmatprep.subr.mxu0 0.0
  %2444 = vmatpush1.msra.mxu0 0.0
  %2445 = vmatprep.subr.mxu0 0.0
  %2446 = vmatpush1.msra.mxu0 0.0
  %2447 = vmatprep.subr.mxu0 0.0
  %2448 = vmatpush1.msra.mxu0 0.0
  %2449 = vmatprep.subr.mxu0 0.0
  %2450 = vmatpush1.msra.mxu0 0.0
  %2451 = vmatprep.subr.mxu0 0.0
  %2452 = vmatpush1.msra.mxu0 0.0
  %2453 = vmatprep.subr.mxu0 0.0
  %2454 = vmatpush1.msra.mxu0 0.0
  %2455 = vmatprep.mubr.f32.mxu0 0.0
  %2456 = vmatmul.mubr.f32.gmra.mrb[0].mxu0 %v2386
  %v2457 = vpop.f32.mrb[0].mxu0
  %v2458 = vadd.f32 0.0, %v2457
  %v2459 = vpop.f32.mrb[0].mxu0
  %2460 = vmatprep.mubr.f32.mxu0 0.0
  %2461 = vmatmul.mubr.f32.gmra.mrb[0].mxu0 %v2389
  %v2462 = vpop.f32.mrb[0].mxu0
  %v2463 = vadd.f32 0.0, %v2462
  %v2464 = vpop.f32.mrb[0].mxu0
  %2465 = vdwg.mxu0
  %v2466 = vadd.f32 %v1783, %v2458
  %v2467 = vadd.f32 %v1783, %v2463
  %s2468 = scalar_lea.vmem %s4, 96
  %v2469 = vld [vmem:[%s2468] sm:$0xff]
  %v2470 = vld [vmem:[%s2468 + $0x8] sm:$0xff]
  %v2471 = vld [vmem:[%s2468 + $0x10] sm:$0xff]
  %v2472 = vld [vmem:[%s2468 + $0x18] sm:$0xff]
  %s2473 = scalar_lea.vmem %s7, 3
  %v2474 = vld [vmem:[%s2473] sm:$0x1]
  %v2476 = vlaneseq
  %v2477 = vshrl.u32 %v2476, 7
  %v2478 = vsub.s32 0, %v2477
  %v2479 = vrot.slane %v2474, %v2478
  %2481 = vmatprep.subr.mxu0 0.0
  %2482 = vmatpush1.msra.mxu0 %v2469
  %2483 = vmatprep.subr.mxu0 0.0
  %2484 = vmatpush1.msra.mxu0 %v2470
  %2485 = vmatprep.subr.mxu0 0.0
  %2486 = vmatpush1.msra.mxu0 %v2471
  %2487 = vmatprep.subr.mxu0 0.0
  %2488 = vmatpush1.msra.mxu0 %v2472
  %2489 = vmatprep.subr.mxu0 0.0
  %2490 = vmatpush1.msra.mxu0 0.0
  %2491 = vmatprep.subr.mxu0 0.0
  %2492 = vmatpush1.msra.mxu0 0.0
  %2493 = vmatprep.subr.mxu0 0.0
  %2494 = vmatpush1.msra.mxu0 0.0
  %2495 = vmatprep.subr.mxu0 0.0
  %2496 = vmatpush1.msra.mxu0 0.0
  %2497 = vmatprep.subr.mxu0 0.0
  %2498 = vmatpush1.msra.mxu0 0.0
  %2499 = vmatprep.subr.mxu0 0.0
  %2500 = vmatpush1.msra.mxu0 0.0
  %2501 = vmatprep.subr.mxu0 0.0
  %2502 = vmatpush1.msra.mxu0 0.0
  %2503 = vmatprep.subr.mxu0 0.0
  %2504 = vmatpush1.msra.mxu0 0.0
  %2505 = vmatprep.subr.mxu0 0.0
  %2506 = vmatpush1.msra.mxu0 0.0
  %2507 = vmatprep.subr.mxu0 0.0
  %2508 = vmatpush1.msra.mxu0 0.0
  %2509 = vmatprep.subr.mxu0 0.0
  %2510 = vmatpush1.msra.mxu0 0.0
  %2511 = vmatprep.subr.mxu0 0.0
  %2512 = vmatpush1.msra.mxu0 0.0
  %2513 = vmatprep.subr.mxu0 0.0
  %2514 = vmatpush1.msra.mxu0 0.0
  %2515 = vmatprep.subr.mxu0 0.0
  %2516 = vmatpush1.msra.mxu0 0.0
  %2517 = vmatprep.subr.mxu0 0.0
  %2518 = vmatpush1.msra.mxu0 0.0
  %2519 = vmatprep.subr.mxu0 0.0
  %2520 = vmatpush1.msra.mxu0 0.0
  %2521 = vmatprep.subr.mxu0 0.0
  %2522 = vmatpush1.msra.mxu0 0.0
  %2523 = vmatprep.subr.mxu0 0.0
  %2524 = vmatpush1.msra.mxu0 0.0
  %2525 = vmatprep.subr.mxu0 0.0
  %2526 = vmatpush1.msra.mxu0 0.0
  %2527 = vmatprep.subr.mxu0 0.0
  %2528 = vmatpush1.msra.mxu0 0.0
  %2529 = vmatprep.subr.mxu0 0.0
  %2530 = vmatpush1.msra.mxu0 0.0
  %2531 = vmatprep.subr.mxu0 0.0
  %2532 = vmatpush1.msra.mxu0 0.0
  %2533 = vmatprep.subr.mxu0 0.0
  %2534 = vmatpush1.msra.mxu0 0.0
  %2535 = vmatprep.subr.mxu0 0.0
  %2536 = vmatpush1.msra.mxu0 0.0
  %2537 = vmatprep.subr.mxu0 0.0
  %2538 = vmatpush1.msra.mxu0 0.0
  %2539 = vmatprep.subr.mxu0 0.0
  %2540 = vmatpush1.msra.mxu0 0.0
  %2541 = vmatprep.subr.mxu0 0.0
  %2542 = vmatpush1.msra.mxu0 0.0
  %2543 = vmatprep.subr.mxu0 0.0
  %2544 = vmatpush1.msra.mxu0 0.0
  %2545 = vmatprep.mubr.f32.mxu0 0.0
  %2546 = vmatmul.mubr.f32.gmra.mrb[0].mxu0 %v1798
  %v2547 = vpop.f32.mrb[0].mxu0
  %v2548 = vadd.f32 %v2479, %v2547
  %v2549 = vpop.f32.mrb[0].mxu0
  %2550 = vmatprep.mubr.f32.mxu0 0.0
  %2551 = vmatmul.mubr.f32.gmra.mrb[0].mxu0 %v1801
  %v2552 = vpop.f32.mrb[0].mxu0
  %v2553 = vadd.f32 %v2479, %v2552
  %v2554 = vpop.f32.mrb[0].mxu0
  %2555 = vdwg.mxu0
  %v2556 = vmul.f32 %v2548, 0.25
  %v2557 = vmul.f32 %v2553, 0.25
  %s2558 = scalar_lea.vmem %s5, 96
  %v2559 = vld [vmem:[%s2558] sm:$0xff]
  %v2560 = vld [vmem:[%s2558 + $0x8] sm:$0xff]
  %v2561 = vld [vmem:[%s2558 + $0x10] sm:$0xff]
  %v2562 = vld [vmem:[%s2558 + $0x18] sm:$0xff]
  %s2563 = scalar_lea.vmem %s8, 3
  %v2564 = vld [vmem:[%s2563] sm:$0x1]
  %v2566 = vlaneseq
  %v2567 = vshrl.u32 %v2566, 7
  %v2568 = vsub.s32 0, %v2567
  %v2569 = vrot.slane %v2564, %v2568
  %2571 = vmatprep.subr.mxu0 0.0
  %2572 = vmatpush1.msra.mxu0 %v2559
  %2573 = vmatprep.subr.mxu0 0.0
  %2574 = vmatpush1.msra.mxu0 %v2560
  %2575 = vmatprep.subr.mxu0 0.0
  %2576 = vmatpush1.msra.mxu0 %v2561
  %2577 = vmatprep.subr.mxu0 0.0
  %2578 = vmatpush1.msra.mxu0 %v2562
  %2579 = vmatprep.subr.mxu0 0.0
  %2580 = vmatpush1.msra.mxu0 0.0
  %2581 = vmatprep.subr.mxu0 0.0
  %2582 = vmatpush1.msra.mxu0 0.0
  %2583 = vmatprep.subr.mxu0 0.0
  %2584 = vmatpush1.msra.mxu0 0.0
  %2585 = vmatprep.subr.mxu0 0.0
  %2586 = vmatpush1.msra.mxu0 0.0
  %2587 = vmatprep.subr.mxu0 0.0
  %2588 = vmatpush1.msra.mxu0 0.0
  %2589 = vmatprep.subr.mxu0 0.0
  %2590 = vmatpush1.msra.mxu0 0.0
  %2591 = vmatprep.subr.mxu0 0.0
  %2592 = vmatpush1.msra.mxu0 0.0
  %2593 = vmatprep.subr.mxu0 0.0
  %2594 = vmatpush1.msra.mxu0 0.0
  %2595 = vmatprep.subr.mxu0 0.0
  %2596 = vmatpush1.msra.mxu0 0.0
  %2597 = vmatprep.subr.mxu0 0.0
  %2598 = vmatpush1.msra.mxu0 0.0
  %2599 = vmatprep.subr.mxu0 0.0
  %2600 = vmatpush1.msra.mxu0 0.0
  %2601 = vmatprep.subr.mxu0 0.0
  %2602 = vmatpush1.msra.mxu0 0.0
  %2603 = vmatprep.subr.mxu0 0.0
  %2604 = vmatpush1.msra.mxu0 0.0
  %2605 = vmatprep.subr.mxu0 0.0
  %2606 = vmatpush1.msra.mxu0 0.0
  %2607 = vmatprep.subr.mxu0 0.0
  %2608 = vmatpush1.msra.mxu0 0.0
  %2609 = vmatprep.subr.mxu0 0.0
  %2610 = vmatpush1.msra.mxu0 0.0
  %2611 = vmatprep.subr.mxu0 0.0
  %2612 = vmatpush1.msra.mxu0 0.0
  %2613 = vmatprep.subr.mxu0 0.0
  %2614 = vmatpush1.msra.mxu0 0.0
  %2615 = vmatprep.subr.mxu0 0.0
  %2616 = vmatpush1.msra.mxu0 0.0
  %2617 = vmatprep.subr.mxu0 0.0
  %2618 = vmatpush1.msra.mxu0 0.0
  %2619 = vmatprep.subr.mxu0 0.0
  %2620 = vmatpush1.msra.mxu0 0.0
  %2621 = vmatprep.subr.mxu0 0.0
  %2622 = vmatpush1.msra.mxu0 0.0
  %2623 = vmatprep.subr.mxu0 0.0
  %2624 = vmatpush1.msra.mxu0 0.0
  %2625 = vmatprep.subr.mxu0 0.0
  %2626 = vmatpush1.msra.mxu0 0.0
  %2627 = vmatprep.subr.mxu0 0.0
  %2628 = vmatpush1.msra.mxu0 0.0
  %2629 = vmatprep.subr.mxu0 0.0
  %2630 = vmatpush1.msra.mxu0 0.0
  %2631 = vmatprep.subr.mxu0 0.0
  %2632 = vmatpush1.msra.mxu0 0.0
  %2633 = vmatprep.subr.mxu0 0.0
  %2634 = vmatpush1.msra.mxu0 0.0
  %2635 = vmatprep.mubr.f32.mxu0 0.0
  %2636 = vmatmul.mubr.f32.gmra.mrb[0].mxu0 %v1894
  %v2637 = vpop.f32.mrb[0].mxu0
  %v2638 = vadd.f32 %v2569, %v2637
  %v2639 = vpop.f32.mrb[0].mxu0
  %2640 = vmatprep.mubr.f32.mxu0 0.0
  %2641 = vmatmul.mubr.f32.gmra.mrb[0].mxu0 %v1897
  %v2642 = vpop.f32.mrb[0].mxu0
  %v2643 = vadd.f32 %v2569, %v2642
  %v2644 = vpop.f32.mrb[0].mxu0
  %2645 = vdwg.mxu0
  %s2646 = scalar_lea.vmem %s6, 96
  %v2647 = vld [vmem:[%s2646] sm:$0xff]
  %v2648 = vld [vmem:[%s2646 + $0x8] sm:$0xff]
  %v2649 = vld [vmem:[%s2646 + $0x10] sm:$0xff]
  %v2650 = vld [vmem:[%s2646 + $0x18] sm:$0xff]
  %s2651 = scalar_lea.vmem %s9, 3
  %v2652 = vld [vmem:[%s2651] sm:$0x1]
  %v2654 = vlaneseq
  %v2655 = vshrl.u32 %v2654, 7
  %v2656 = vsub.s32 0, %v2655
  %v2657 = vrot.slane %v2652, %v2656
  %2659 = vmatprep.subr.mxu0 0.0
  %2660 = vmatpush1.msra.mxu0 %v2647
  %2661 = vmatprep.subr.mxu0 0.0
  %2662 = vmatpush1.msra.mxu0 %v2648
  %2663 = vmatprep.subr.mxu0 0.0
  %2664 = vmatpush1.msra.mxu0 %v2649
  %2665 = vmatprep.subr.mxu0 0.0
  %2666 = vmatpush1.msra.mxu0 %v2650
  %2667 = vmatprep.subr.mxu0 0.0
  %2668 = vmatpush1.msra.mxu0 0.0
  %2669 = vmatprep.subr.mxu0 0.0
  %2670 = vmatpush1.msra.mxu0 0.0
  %2671 = vmatprep.subr.mxu0 0.0
  %2672 = vmatpush1.msra.mxu0 0.0
  %2673 = vmatprep.subr.mxu0 0.0
  %2674 = vmatpush1.msra.mxu0 0.0
  %2675 = vmatprep.subr.mxu0 0.0
  %2676 = vmatpush1.msra.mxu0 0.0
  %2677 = vmatprep.subr.mxu0 0.0
  %2678 = vmatpush1.msra.mxu0 0.0
  %2679 = vmatprep.subr.mxu0 0.0
  %2680 = vmatpush1.msra.mxu0 0.0
  %2681 = vmatprep.subr.mxu0 0.0
  %2682 = vmatpush1.msra.mxu0 0.0
  %2683 = vmatprep.subr.mxu0 0.0
  %2684 = vmatpush1.msra.mxu0 0.0
  %2685 = vmatprep.subr.mxu0 0.0
  %2686 = vmatpush1.msra.mxu0 0.0
  %2687 = vmatprep.subr.mxu0 0.0
  %2688 = vmatpush1.msra.mxu0 0.0
  %2689 = vmatprep.subr.mxu0 0.0
  %2690 = vmatpush1.msra.mxu0 0.0
  %2691 = vmatprep.subr.mxu0 0.0
  %2692 = vmatpush1.msra.mxu0 0.0
  %2693 = vmatprep.subr.mxu0 0.0
  %2694 = vmatpush1.msra.mxu0 0.0
  %2695 = vmatprep.subr.mxu0 0.0
  %2696 = vmatpush1.msra.mxu0 0.0
  %2697 = vmatprep.subr.mxu0 0.0
  %2698 = vmatpush1.msra.mxu0 0.0
  %2699 = vmatprep.subr.mxu0 0.0
  %2700 = vmatpush1.msra.mxu0 0.0
  %2701 = vmatprep.subr.mxu0 0.0
  %2702 = vmatpush1.msra.mxu0 0.0
  %2703 = vmatprep.subr.mxu0 0.0
  %2704 = vmatpush1.msra.mxu0 0.0
  %2705 = vmatprep.subr.mxu0 0.0
  %2706 = vmatpush1.msra.mxu0 0.0
  %2707 = vmatprep.subr.mxu0 0.0
  %2708 = vmatpush1.msra.mxu0 0.0
  %2709 = vmatprep.subr.mxu0 0.0
  %2710 = vmatpush1.msra.mxu0 0.0
  %2711 = vmatprep.subr.mxu0 0.0
  %2712 = vmatpush1.msra.mxu0 0.0
  %2713 = vmatprep.subr.mxu0 0.0
  %2714 = vmatpush1.msra.mxu0 0.0
  %2715 = vmatprep.subr.mxu0 0.0
  %2716 = vmatpush1.msra.mxu0 0.0
  %2717 = vmatprep.subr.mxu0 0.0
  %2718 = vmatpush1.msra.mxu0 0.0
  %2719 = vmatprep.subr.mxu0 0.0
  %2720 = vmatpush1.msra.mxu0 0.0
  %2721 = vmatprep.subr.mxu0 0.0
  %2722 = vmatpush1.msra.mxu0 0.0
  %2723 = vmatprep.mubr.f32.mxu0 0.0
  %2724 = vmatmul.mubr.f32.gmra.mrb[0].mxu0 %v1894
  %v2725 = vpop.f32.mrb[0].mxu0
  %v2726 = vadd.f32 %v2657, %v2725
  %v2727 = vpop.f32.mrb[0].mxu0
  %2728 = vmatprep.mubr.f32.mxu0 0.0
  %2729 = vmatmul.mubr.f32.gmra.mrb[0].mxu0 %v1897
  %v2730 = vpop.f32.mrb[0].mxu0
  %v2731 = vadd.f32 %v2657, %v2730
  %v2732 = vpop.f32.mrb[0].mxu0
  %2733 = vdwg.mxu0
  %v2735 = vsel %vm404, %v2556, 0
  %v2738 = vsel %vm404, %v2638, 0
  %2740 = vmatprep.subr.mxu0 0.0
  %2741 = vmatpush1.xpose.msra.mxu0 %v2738
  %2742 = vmatprep.subr.mxu0 0.0
  %2743 = vmatpush1.xpose.msra.mxu0 0.0
  %2744 = vmatprep.subr.mxu0 0.0
  %2745 = vmatpush1.xpose.msra.mxu0 0.0
  %2746 = vmatprep.subr.mxu0 0.0
  %2747 = vmatpush1.xpose.msra.mxu0 0.0
  %2748 = vmatprep.subr.mxu0 0.0
  %2749 = vmatpush1.xpose.msra.mxu0 0.0
  %2750 = vmatprep.subr.mxu0 0.0
  %2751 = vmatpush1.xpose.msra.mxu0 0.0
  %2752 = vmatprep.subr.mxu0 0.0
  %2753 = vmatpush1.xpose.msra.mxu0 0.0
  %2754 = vmatprep.subr.mxu0 0.0
  %2755 = vmatpush1.xpose.msra.mxu0 0.0
  %2756 = vmatprep.subr.mxu0 0.0
  %2757 = vmatpush1.xpose.msra.mxu0 0.0
  %2758 = vmatprep.subr.mxu0 0.0
  %2759 = vmatpush1.xpose.msra.mxu0 0.0
  %2760 = vmatprep.subr.mxu0 0.0
  %2761 = vmatpush1.xpose.msra.mxu0 0.0
  %2762 = vmatprep.subr.mxu0 0.0
  %2763 = vmatpush1.xpose.msra.mxu0 0.0
  %2764 = vmatprep.subr.mxu0 0.0
  %2765 = vmatpush1.xpose.msra.mxu0 0.0
  %2766 = vmatprep.subr.mxu0 0.0
  %2767 = vmatpush1.xpose.msra.mxu0 0.0
  %2768 = vmatprep.subr.mxu0 0.0
  %2769 = vmatpush1.xpose.msra.mxu0 0.0
  %2770 = vmatprep.subr.mxu0 0.0
  %2771 = vmatpush1.xpose.msra.mxu0 0.0
  %2772 = vmatprep.subr.mxu0 0.0
  %2773 = vmatpush1.xpose.msra.mxu0 0.0
  %2774 = vmatprep.subr.mxu0 0.0
  %2775 = vmatpush1.xpose.msra.mxu0 0.0
  %2776 = vmatprep.subr.mxu0 0.0
  %2777 = vmatpush1.xpose.msra.mxu0 0.0
  %2778 = vmatprep.subr.mxu0 0.0
  %2779 = vmatpush1.xpose.msra.mxu0 0.0
  %2780 = vmatprep.subr.mxu0 0.0
  %2781 = vmatpush1.xpose.msra.mxu0 0.0
  %2782 = vmatprep.subr.mxu0 0.0
  %2783 = vmatpush1.xpose.msra.mxu0 0.0
  %2784 = vmatprep.subr.mxu0 0.0
  %2785 = vmatpush1.xpose.msra.mxu0 0.0
  %2786 = vmatprep.subr.mxu0 0.0
  %2787 = vmatpush1.xpose.msra.mxu0 0.0
  %2788 = vmatprep.subr.mxu0 0.0
  %2789 = vmatpush1.xpose.msra.mxu0 0.0
  %2790 = vmatprep.subr.mxu0 0.0
  %2791 = vmatpush1.xpose.msra.mxu0 0.0
  %2792 = vmatprep.subr.mxu0 0.0
  %2793 = vmatpush1.xpose.msra.mxu0 0.0
  %2794 = vmatprep.subr.mxu0 0.0
  %2795 = vmatpush1.xpose.msra.mxu0 0.0
  %2796 = vmatprep.subr.mxu0 0.0
  %2797 = vmatpush1.xpose.msra.mxu0 0.0
  %2798 = vmatprep.subr.mxu0 0.0
  %2799 = vmatpush1.xpose.msra.mxu0 0.0
  %2800 = vmatprep.subr.mxu0 0.0
  %2801 = vmatpush1.xpose.msra.mxu0 0.0
  %2802 = vmatprep.subr.mxu0 0.0
  %2803 = vmatpush1.xpose.msra.mxu0 0.0
  %2804 = vmatprep.mubr.f32.mxu0 0.0
  %2805 = vmatmul.mubr.f32.gmra.mrb[0].mxu0 %v2735
  %v2806 = vpop.f32.mrb[0].mxu0
  %v2807 = vadd.f32 %v77, %v2806
  %v2808 = vpop.f32.mrb[0].mxu0
  %2809 = vdwg.mxu0
  %v2811 = vsel %vm404, %v2557, 0
  %v2814 = vsel %vm404, %v2643, 0
  %2816 = vmatprep.subr.mxu0 0.0
  %2817 = vmatpush1.xpose.msra.mxu0 %v2814
  %2818 = vmatprep.subr.mxu0 0.0
  %2819 = vmatpush1.xpose.msra.mxu0 0.0
  %2820 = vmatprep.subr.mxu0 0.0
  %2821 = vmatpush1.xpose.msra.mxu0 0.0
  %2822 = vmatprep.subr.mxu0 0.0
  %2823 = vmatpush1.xpose.msra.mxu0 0.0
  %2824 = vmatprep.subr.mxu0 0.0
  %2825 = vmatpush1.xpose.msra.mxu0 0.0
  %2826 = vmatprep.subr.mxu0 0.0
  %2827 = vmatpush1.xpose.msra.mxu0 0.0
  %2828 = vmatprep.subr.mxu0 0.0
  %2829 = vmatpush1.xpose.msra.mxu0 0.0
  %2830 = vmatprep.subr.mxu0 0.0
  %2831 = vmatpush1.xpose.msra.mxu0 0.0
  %2832 = vmatprep.subr.mxu0 0.0
  %2833 = vmatpush1.xpose.msra.mxu0 0.0
  %2834 = vmatprep.subr.mxu0 0.0
  %2835 = vmatpush1.xpose.msra.mxu0 0.0
  %2836 = vmatprep.subr.mxu0 0.0
  %2837 = vmatpush1.xpose.msra.mxu0 0.0
  %2838 = vmatprep.subr.mxu0 0.0
  %2839 = vmatpush1.xpose.msra.mxu0 0.0
  %2840 = vmatprep.subr.mxu0 0.0
  %2841 = vmatpush1.xpose.msra.mxu0 0.0
  %2842 = vmatprep.subr.mxu0 0.0
  %2843 = vmatpush1.xpose.msra.mxu0 0.0
  %2844 = vmatprep.subr.mxu0 0.0
  %2845 = vmatpush1.xpose.msra.mxu0 0.0
  %2846 = vmatprep.subr.mxu0 0.0
  %2847 = vmatpush1.xpose.msra.mxu0 0.0
  %2848 = vmatprep.subr.mxu0 0.0
  %2849 = vmatpush1.xpose.msra.mxu0 0.0
  %2850 = vmatprep.subr.mxu0 0.0
  %2851 = vmatpush1.xpose.msra.mxu0 0.0
  %2852 = vmatprep.subr.mxu0 0.0
  %2853 = vmatpush1.xpose.msra.mxu0 0.0
  %2854 = vmatprep.subr.mxu0 0.0
  %2855 = vmatpush1.xpose.msra.mxu0 0.0
  %2856 = vmatprep.subr.mxu0 0.0
  %2857 = vmatpush1.xpose.msra.mxu0 0.0
  %2858 = vmatprep.subr.mxu0 0.0
  %2859 = vmatpush1.xpose.msra.mxu0 0.0
  %2860 = vmatprep.subr.mxu0 0.0
  %2861 = vmatpush1.xpose.msra.mxu0 0.0
  %2862 = vmatprep.subr.mxu0 0.0
  %2863 = vmatpush1.xpose.msra.mxu0 0.0
  %2864 = vmatprep.subr.mxu0 0.0
  %2865 = vmatpush1.xpose.msra.mxu0 0.0
  %2866 = vmatprep.subr.mxu0 0.0
  %2867 = vmatpush1.xpose.msra.mxu0 0.0
  %2868 = vmatprep.subr.mxu0 0.0
  %2869 = vmatpush1.xpose.msra.mxu0 0.0
  %2870 = vmatprep.subr.mxu0 0.0
  %2871 = vmatpush1.xpose.msra.mxu0 0.0
  %2872 = vmatprep.subr.mxu0 0.0
  %2873 = vmatpush1.xpose.msra.mxu0 0.0
  %2874 = vmatprep.subr.mxu0 0.0
  %2875 = vmatpush1.xpose.msra.mxu0 0.0
  %2876 = vmatprep.subr.mxu0 0.0
  %2877 = vmatpush1.xpose.msra.mxu0 0.0
  %2878 = vmatprep.subr.mxu0 0.0
  %2879 = vmatpush1.xpose.msra.mxu0 0.0
  %2880 = vmatprep.mubr.f32.mxu0 0.0
  %2881 = vmatmul.mubr.f32.gmra.mrb[0].mxu0 %v2811
  %v2882 = vpop.f32.mrb[0].mxu0
  %v2883 = vadd.f32 %v77, %v2882
  %v2884 = vpop.f32.mrb[0].mxu0
  %2885 = vdwg.mxu0
  %v2886 = vsel %vm557, %v2807, -inf
  %2887 = vmax.xlane.f32.xlu0 %v2886
  %v2888 = vpop.xlane.xlu0 %2887
  %v2889 = vsel %vm557, %v2883, -inf
  %2890 = vmax.xlane.f32.xlu0 %v2889
  %v2891 = vpop.xlane.xlu0 %2890
  %v2892 = vsub.f32 %v2807, %v2888
  %v2893 = vsub.f32 %v2883, %v2891
  %v2894 = vmul.f32 %v2892, 1.442695
  %v2895 = vpow.pop %v2894
  %v2896 = vmul.f32 %v2893, 1.442695
  %v2897 = vpow.pop %v2896
  %v2898 = vsel %vm557, %v2895, 0.0
  %2899 = vadd.xlane.f32.xlu0 %v2898
  %v2900 = vpop.xlane.xlu0 %2899
  %v2901 = vsel %vm557, %v2897, 0.0
  %2902 = vadd.xlane.f32.xlu0 %v2901
  %v2903 = vpop.xlane.xlu0 %2902
  %v2904 = vrcp.pop %v2900
  %v2905 = vrcp.pop %v2903
  %v2906 = vmul.f32 %v2895, %v2904
  %v2907 = vmul.f32 %v2897, %v2905
  %v2909 = vsel %vm557, %v2906, 0
  %2911 = vmatprep.subr.mxu0 0.0
  %2912 = vmatpush1.msra.mxu0 %v2726
  %2913 = vmatprep.subr.mxu0 0.0
  %2914 = vmatpush1.msra.mxu0 0.0
  %2915 = vmatprep.subr.mxu0 0.0
  %2916 = vmatpush1.msra.mxu0 0.0
  %2917 = vmatprep.subr.mxu0 0.0
  %2918 = vmatpush1.msra.mxu0 0.0
  %2919 = vmatprep.subr.mxu0 0.0
  %2920 = vmatpush1.msra.mxu0 0.0
  %2921 = vmatprep.subr.mxu0 0.0
  %2922 = vmatpush1.msra.mxu0 0.0
  %2923 = vmatprep.subr.mxu0 0.0
  %2924 = vmatpush1.msra.mxu0 0.0
  %2925 = vmatprep.subr.mxu0 0.0
  %2926 = vmatpush1.msra.mxu0 0.0
  %2927 = vmatprep.subr.mxu0 0.0
  %2928 = vmatpush1.msra.mxu0 0.0
  %2929 = vmatprep.subr.mxu0 0.0
  %2930 = vmatpush1.msra.mxu0 0.0
  %2931 = vmatprep.subr.mxu0 0.0
  %2932 = vmatpush1.msra.mxu0 0.0
  %2933 = vmatprep.subr.mxu0 0.0
  %2934 = vmatpush1.msra.mxu0 0.0
  %2935 = vmatprep.subr.mxu0 0.0
  %2936 = vmatpush1.msra.mxu0 0.0
  %2937 = vmatprep.subr.mxu0 0.0
  %2938 = vmatpush1.msra.mxu0 0.0
  %2939 = vmatprep.subr.mxu0 0.0
  %2940 = vmatpush1.msra.mxu0 0.0
  %2941 = vmatprep.subr.mxu0 0.0
  %2942 = vmatpush1.msra.mxu0 0.0
  %2943 = vmatprep.subr.mxu0 0.0
  %2944 = vmatpush1.msra.mxu0 0.0
  %2945 = vmatprep.subr.mxu0 0.0
  %2946 = vmatpush1.msra.mxu0 0.0
  %2947 = vmatprep.subr.mxu0 0.0
  %2948 = vmatpush1.msra.mxu0 0.0
  %2949 = vmatprep.subr.mxu0 0.0
  %2950 = vmatpush1.msra.mxu0 0.0
  %2951 = vmatprep.subr.mxu0 0.0
  %2952 = vmatpush1.msra.mxu0 0.0
  %2953 = vmatprep.subr.mxu0 0.0
  %2954 = vmatpush1.msra.mxu0 0.0
  %2955 = vmatprep.subr.mxu0 0.0
  %2956 = vmatpush1.msra.mxu0 0.0
  %2957 = vmatprep.subr.mxu0 0.0
  %2958 = vmatpush1.msra.mxu0 0.0
  %2959 = vmatprep.subr.mxu0 0.0
  %2960 = vmatpush1.msra.mxu0 0.0
  %2961 = vmatprep.subr.mxu0 0.0
  %2962 = vmatpush1.msra.mxu0 0.0
  %2963 = vmatprep.subr.mxu0 0.0
  %2964 = vmatpush1.msra.mxu0 0.0
  %2965 = vmatprep.subr.mxu0 0.0
  %2966 = vmatpush1.msra.mxu0 0.0
  %2967 = vmatprep.subr.mxu0 0.0
  %2968 = vmatpush1.msra.mxu0 0.0
  %2969 = vmatprep.subr.mxu0 0.0
  %2970 = vmatpush1.msra.mxu0 0.0
  %2971 = vmatprep.subr.mxu0 0.0
  %2972 = vmatpush1.msra.mxu0 0.0
  %2973 = vmatprep.subr.mxu0 0.0
  %2974 = vmatpush1.msra.mxu0 0.0
  %2975 = vmatprep.mubr.f32.mxu0 0.0
  %2976 = vmatmul.mubr.f32.gmra.mrb[0].mxu0 %v2909
  %v2977 = vpop.f32.mrb[0].mxu0
  %v2978 = vadd.f32 0.0, %v2977
  %v2979 = vpop.f32.mrb[0].mxu0
  %2980 = vdwg.mxu0
  %v2982 = vsel %vm557, %v2907, 0
  %2984 = vmatprep.subr.mxu0 0.0
  %2985 = vmatpush1.msra.mxu0 %v2731
  %2986 = vmatprep.subr.mxu0 0.0
  %2987 = vmatpush1.msra.mxu0 0.0
  %2988 = vmatprep.subr.mxu0 0.0
  %2989 = vmatpush1.msra.mxu0 0.0
  %2990 = vmatprep.subr.mxu0 0.0
  %2991 = vmatpush1.msra.mxu0 0.0
  %2992 = vmatprep.subr.mxu0 0.0
  %2993 = vmatpush1.msra.mxu0 0.0
  %2994 = vmatprep.subr.mxu0 0.0
  %2995 = vmatpush1.msra.mxu0 0.0
  %2996 = vmatprep.subr.mxu0 0.0
  %2997 = vmatpush1.msra.mxu0 0.0
  %2998 = vmatprep.subr.mxu0 0.0
  %2999 = vmatpush1.msra.mxu0 0.0
  %3000 = vmatprep.subr.mxu0 0.0
  %3001 = vmatpush1.msra.mxu0 0.0
  %3002 = vmatprep.subr.mxu0 0.0
  %3003 = vmatpush1.msra.mxu0 0.0
  %3004 = vmatprep.subr.mxu0 0.0
  %3005 = vmatpush1.msra.mxu0 0.0
  %3006 = vmatprep.subr.mxu0 0.0
  %3007 = vmatpush1.msra.mxu0 0.0
  %3008 = vmatprep.subr.mxu0 0.0
  %3009 = vmatpush1.msra.mxu0 0.0
  %3010 = vmatprep.subr.mxu0 0.0
  %3011 = vmatpush1.msra.mxu0 0.0
  %3012 = vmatprep.subr.mxu0 0.0
  %3013 = vmatpush1.msra.mxu0 0.0
  %3014 = vmatprep.subr.mxu0 0.0
  %3015 = vmatpush1.msra.mxu0 0.0
  %3016 = vmatprep.subr.mxu0 0.0
  %3017 = vmatpush1.msra.mxu0 0.0
  %3018 = vmatprep.subr.mxu0 0.0
  %3019 = vmatpush1.msra.mxu0 0.0
  %3020 = vmatprep.subr.mxu0 0.0
  %3021 = vmatpush1.msra.mxu0 0.0
  %3022 = vmatprep.subr.mxu0 0.0
  %3023 = vmatpush1.msra.mxu0 0.0
  %3024 = vmatprep.subr.mxu0 0.0
  %3025 = vmatpush1.msra.mxu0 0.0
  %3026 = vmatprep.subr.mxu0 0.0
  %3027 = vmatpush1.msra.mxu0 0.0
  %3028 = vmatprep.subr.mxu0 0.0
  %3029 = vmatpush1.msra.mxu0 0.0
  %3030 = vmatprep.subr.mxu0 0.0
  %3031 = vmatpush1.msra.mxu0 0.0
  %3032 = vmatprep.subr.mxu0 0.0
  %3033 = vmatpush1.msra.mxu0 0.0
  %3034 = vmatprep.subr.mxu0 0.0
  %3035 = vmatpush1.msra.mxu0 0.0
  %3036 = vmatprep.subr.mxu0 0.0
  %3037 = vmatpush1.msra.mxu0 0.0
  %3038 = vmatprep.subr.mxu0 0.0
  %3039 = vmatpush1.msra.mxu0 0.0
  %3040 = vmatprep.subr.mxu0 0.0
  %3041 = vmatpush1.msra.mxu0 0.0
  %3042 = vmatprep.subr.mxu0 0.0
  %3043 = vmatpush1.msra.mxu0 0.0
  %3044 = vmatprep.subr.mxu0 0.0
  %3045 = vmatpush1.msra.mxu0 0.0
  %3046 = vmatprep.subr.mxu0 0.0
  %3047 = vmatpush1.msra.mxu0 0.0
  %3048 = vmatprep.mubr.f32.mxu0 0.0
  %3049 = vmatmul.mubr.f32.gmra.mrb[0].mxu0 %v2982
  %v3050 = vpop.f32.mrb[0].mxu0
  %v3051 = vadd.f32 0.0, %v3050
  %v3052 = vpop.f32.mrb[0].mxu0
  %3053 = vdwg.mxu0
  %s3054 = scalar_lea.vmem %s10, 48
  %v3055 = vld [vmem:[%s3054] sm:$0xff]
  %v3056 = vld [vmem:[%s3054 + $0x8] sm:$0xff]
  %v3058 = vsel %vm404, %v2978, 0
  %v3061 = vsel %vm404, %v3051, 0
  %3063 = vmatprep.subr.mxu0 0.0
  %3064 = vmatpush1.msra.mxu0 %v3055
  %3065 = vmatprep.subr.mxu0 0.0
  %3066 = vmatpush1.msra.mxu0 %v3056
  %3067 = vmatprep.subr.mxu0 0.0
  %3068 = vmatpush1.msra.mxu0 0.0
  %3069 = vmatprep.subr.mxu0 0.0
  %3070 = vmatpush1.msra.mxu0 0.0
  %3071 = vmatprep.subr.mxu0 0.0
  %3072 = vmatpush1.msra.mxu0 0.0
  %3073 = vmatprep.subr.mxu0 0.0
  %3074 = vmatpush1.msra.mxu0 0.0
  %3075 = vmatprep.subr.mxu0 0.0
  %3076 = vmatpush1.msra.mxu0 0.0
  %3077 = vmatprep.subr.mxu0 0.0
  %3078 = vmatpush1.msra.mxu0 0.0
  %3079 = vmatprep.subr.mxu0 0.0
  %3080 = vmatpush1.msra.mxu0 0.0
  %3081 = vmatprep.subr.mxu0 0.0
  %3082 = vmatpush1.msra.mxu0 0.0
  %3083 = vmatprep.subr.mxu0 0.0
  %3084 = vmatpush1.msra.mxu0 0.0
  %3085 = vmatprep.subr.mxu0 0.0
  %3086 = vmatpush1.msra.mxu0 0.0
  %3087 = vmatprep.subr.mxu0 0.0
  %3088 = vmatpush1.msra.mxu0 0.0
  %3089 = vmatprep.subr.mxu0 0.0
  %3090 = vmatpush1.msra.mxu0 0.0
  %3091 = vmatprep.subr.mxu0 0.0
  %3092 = vmatpush1.msra.mxu0 0.0
  %3093 = vmatprep.subr.mxu0 0.0
  %3094 = vmatpush1.msra.mxu0 0.0
  %3095 = vmatprep.subr.mxu0 0.0
  %3096 = vmatpush1.msra.mxu0 0.0
  %3097 = vmatprep.subr.mxu0 0.0
  %3098 = vmatpush1.msra.mxu0 0.0
  %3099 = vmatprep.subr.mxu0 0.0
  %3100 = vmatpush1.msra.mxu0 0.0
  %3101 = vmatprep.subr.mxu0 0.0
  %3102 = vmatpush1.msra.mxu0 0.0
  %3103 = vmatprep.subr.mxu0 0.0
  %3104 = vmatpush1.msra.mxu0 0.0
  %3105 = vmatprep.subr.mxu0 0.0
  %3106 = vmatpush1.msra.mxu0 0.0
  %3107 = vmatprep.subr.mxu0 0.0
  %3108 = vmatpush1.msra.mxu0 0.0
  %3109 = vmatprep.subr.mxu0 0.0
  %3110 = vmatpush1.msra.mxu0 0.0
  %3111 = vmatprep.subr.mxu0 0.0
  %3112 = vmatpush1.msra.mxu0 0.0
  %3113 = vmatprep.subr.mxu0 0.0
  %3114 = vmatpush1.msra.mxu0 0.0
  %3115 = vmatprep.subr.mxu0 0.0
  %3116 = vmatpush1.msra.mxu0 0.0
  %3117 = vmatprep.subr.mxu0 0.0
  %3118 = vmatpush1.msra.mxu0 0.0
  %3119 = vmatprep.subr.mxu0 0.0
  %3120 = vmatpush1.msra.mxu0 0.0
  %3121 = vmatprep.subr.mxu0 0.0
  %3122 = vmatpush1.msra.mxu0 0.0
  %3123 = vmatprep.subr.mxu0 0.0
  %3124 = vmatpush1.msra.mxu0 0.0
  %3125 = vmatprep.subr.mxu0 0.0
  %3126 = vmatpush1.msra.mxu0 0.0
  %3127 = vmatprep.mubr.f32.mxu0 0.0
  %3128 = vmatmul.mubr.f32.gmra.mrb[0].mxu0 %v3058
  %v3129 = vpop.f32.mrb[0].mxu0
  %v3130 = vadd.f32 0.0, %v3129
  %v3131 = vpop.f32.mrb[0].mxu0
  %3132 = vmatprep.mubr.f32.mxu0 0.0
  %3133 = vmatmul.mubr.f32.gmra.mrb[0].mxu0 %v3061
  %v3134 = vpop.f32.mrb[0].mxu0
  %v3135 = vadd.f32 0.0, %v3134
  %v3136 = vpop.f32.mrb[0].mxu0
  %3137 = vdwg.mxu0
  %v3138 = vadd.f32 %v2466, %v3130
  %v3139 = vadd.f32 %v2467, %v3135
  %v3140 = vadd.f32 %v1773, %v3138
  %v3141 = vadd.f32 %v1774, %v3139
  %s3142 = scalar_lea.vmem %s12, 1
  %v3143 = vld [vmem:[%s3142] sm:$0x1]
  %s3144 = scalar_lea.vmem %s13, 1
  %v3145 = vld [vmem:[%s3144] sm:$0x1]
  %v3146 = vsel %vm80, %v3140, 0.0
  %3147 = vadd.xlane.f32.xlu0 %v3146
  %v3148 = vpop.xlane.xlu0 %3147
  %v3149 = vsel %vm80, %v3141, 0.0
  %3150 = vadd.xlane.f32.xlu0 %v3149
  %v3151 = vpop.xlane.xlu0 %3150
  %v3152 = vmul.f32 %v3148, %v87
  %v3153 = vmul.f32 %v3151, %v87
  %v3154 = vsub.f32 %v3140, %v3152
  %v3155 = vsub.f32 %v3141, %v3153
  %v3156 = vmul.f32 %v3154, %v3154
  %v3157 = vmul.f32 %v3155, %v3155
  %v3158 = vsel %vm80, %v3156, 0.0
  %3159 = vadd.xlane.f32.xlu0 %v3158
  %v3160 = vpop.xlane.xlu0 %3159
  %v3161 = vsel %vm80, %v3157, 0.0
  %3162 = vadd.xlane.f32.xlu0 %v3161
  %v3163 = vpop.xlane.xlu0 %3162
  %v3164 = vmul.f32 %v3160, %v87
  %v3165 = vmul.f32 %v3163, %v87
  %v3166 = vadd.f32 %v3164, 1e-08
  %v3167 = vadd.f32 %v3165, 1e-08
  %v3168 = vrsqrt.pop %v3166
  %v3169 = vrsqrt.pop %v3167
  %v3170 = vmul.f32 %v3154, %v3168
  %v3171 = vmul.f32 %v3155, %v3169
  %v3173 = vlaneseq
  %v3174 = vshrl.u32 %v3173, 7
  %v3175 = vsub.s32 0, %v3174
  %v3176 = vrot.slane %v3143, %v3175
  %v3178 = vmul.f32 %v3170, %v3176
  %v3179 = vmul.f32 %v3171, %v3176
  %v3181 = vlaneseq
  %v3182 = vshrl.u32 %v3181, 7
  %v3183 = vsub.s32 0, %v3182
  %v3184 = vrot.slane %v3145, %v3183
  %v3186 = vadd.f32 %v3178, %v3184
  %v3187 = vadd.f32 %v3179, %v3184
  %s3188 = scalar_lea.vmem %s14, 32
  %v3189 = vld [vmem:[%s3188] sm:$0xff]
  %v3190 = vld [vmem:[%s3188 + $0x8] sm:$0xff]
  %v3191 = vld [vmem:[%s3188 + $0x10] sm:$0xff]
  %v3192 = vld [vmem:[%s3188 + $0x18] sm:$0xff]
  %s3193 = scalar_lea.vmem %s15, 1
  %v3194 = vld [vmem:[%s3193] sm:$0x1]
  %v3196 = vlaneseq
  %v3197 = vshrl.u32 %v3196, 7
  %v3198 = vsub.s32 0, %v3197
  %v3199 = vrot.slane %v3194, %v3198
  %v3202 = vsel %vm80, %v3186, 0
  %v3205 = vsel %vm80, %v3187, 0
  %3207 = vmatprep.subr.mxu0 0.0
  %3208 = vmatpush1.msra.mxu0 %v3189
  %3209 = vmatprep.subr.mxu0 0.0
  %3210 = vmatpush1.msra.mxu0 %v3190
  %3211 = vmatprep.subr.mxu0 0.0
  %3212 = vmatpush1.msra.mxu0 %v3191
  %3213 = vmatprep.subr.mxu0 0.0
  %3214 = vmatpush1.msra.mxu0 %v3192
  %3215 = vmatprep.subr.mxu0 0.0
  %3216 = vmatpush1.msra.mxu0 0.0
  %3217 = vmatprep.subr.mxu0 0.0
  %3218 = vmatpush1.msra.mxu0 0.0
  %3219 = vmatprep.subr.mxu0 0.0
  %3220 = vmatpush1.msra.mxu0 0.0
  %3221 = vmatprep.subr.mxu0 0.0
  %3222 = vmatpush1.msra.mxu0 0.0
  %3223 = vmatprep.subr.mxu0 0.0
  %3224 = vmatpush1.msra.mxu0 0.0
  %3225 = vmatprep.subr.mxu0 0.0
  %3226 = vmatpush1.msra.mxu0 0.0
  %3227 = vmatprep.subr.mxu0 0.0
  %3228 = vmatpush1.msra.mxu0 0.0
  %3229 = vmatprep.subr.mxu0 0.0
  %3230 = vmatpush1.msra.mxu0 0.0
  %3231 = vmatprep.subr.mxu0 0.0
  %3232 = vmatpush1.msra.mxu0 0.0
  %3233 = vmatprep.subr.mxu0 0.0
  %3234 = vmatpush1.msra.mxu0 0.0
  %3235 = vmatprep.subr.mxu0 0.0
  %3236 = vmatpush1.msra.mxu0 0.0
  %3237 = vmatprep.subr.mxu0 0.0
  %3238 = vmatpush1.msra.mxu0 0.0
  %3239 = vmatprep.subr.mxu0 0.0
  %3240 = vmatpush1.msra.mxu0 0.0
  %3241 = vmatprep.subr.mxu0 0.0
  %3242 = vmatpush1.msra.mxu0 0.0
  %3243 = vmatprep.subr.mxu0 0.0
  %3244 = vmatpush1.msra.mxu0 0.0
  %3245 = vmatprep.subr.mxu0 0.0
  %3246 = vmatpush1.msra.mxu0 0.0
  %3247 = vmatprep.subr.mxu0 0.0
  %3248 = vmatpush1.msra.mxu0 0.0
  %3249 = vmatprep.subr.mxu0 0.0
  %3250 = vmatpush1.msra.mxu0 0.0
  %3251 = vmatprep.subr.mxu0 0.0
  %3252 = vmatpush1.msra.mxu0 0.0
  %3253 = vmatprep.subr.mxu0 0.0
  %3254 = vmatpush1.msra.mxu0 0.0
  %3255 = vmatprep.subr.mxu0 0.0
  %3256 = vmatpush1.msra.mxu0 0.0
  %3257 = vmatprep.subr.mxu0 0.0
  %3258 = vmatpush1.msra.mxu0 0.0
  %3259 = vmatprep.subr.mxu0 0.0
  %3260 = vmatpush1.msra.mxu0 0.0
  %3261 = vmatprep.subr.mxu0 0.0
  %3262 = vmatpush1.msra.mxu0 0.0
  %3263 = vmatprep.subr.mxu0 0.0
  %3264 = vmatpush1.msra.mxu0 0.0
  %3265 = vmatprep.subr.mxu0 0.0
  %3266 = vmatpush1.msra.mxu0 0.0
  %3267 = vmatprep.subr.mxu0 0.0
  %3268 = vmatpush1.msra.mxu0 0.0
  %3269 = vmatprep.subr.mxu0 0.0
  %3270 = vmatpush1.msra.mxu0 0.0
  %3271 = vmatprep.mubr.f32.mxu0 0.0
  %3272 = vmatmul.mubr.f32.gmra.mrb[0].mxu0 %v3202
  %v3273 = vpop.f32.mrb[0].mxu0
  %v3274 = vadd.f32 %v3199, %v3273
  %v3275 = vpop.f32.mrb[0].mxu0
  %3276 = vmatprep.mubr.f32.mxu0 0.0
  %3277 = vmatmul.mubr.f32.gmra.mrb[0].mxu0 %v3205
  %v3278 = vpop.f32.mrb[0].mxu0
  %v3279 = vadd.f32 %v3199, %v3278
  %v3280 = vpop.f32.mrb[0].mxu0
  %3281 = vdwg.mxu0
  %v3282 = vmax.f32 %v3274, 0.0
  %v3283 = vmax.f32 %v3279, 0.0
  %s3284 = scalar_lea.vmem %s16, 32
  %v3285 = vld [vmem:[%s3284] sm:$0xff]
  %v3286 = vld [vmem:[%s3284 + $0x8] sm:$0xff]
  %v3287 = vld [vmem:[%s3284 + $0x10] sm:$0xff]
  %v3288 = vld [vmem:[%s3284 + $0x18] sm:$0xff]
  %s3289 = scalar_lea.vmem %s17, 1
  %v3290 = vld [vmem:[%s3289] sm:$0x1]
  %v3292 = vlaneseq
  %v3293 = vshrl.u32 %v3292, 7
  %v3294 = vsub.s32 0, %v3293
  %v3295 = vrot.slane %v3290, %v3294
  %v3298 = vsel %vm80, %v3282, 0
  %v3301 = vsel %vm80, %v3283, 0
  %3303 = vmatprep.subr.mxu0 0.0
  %3304 = vmatpush1.msra.mxu0 %v3285
  %3305 = vmatprep.subr.mxu0 0.0
  %3306 = vmatpush1.msra.mxu0 %v3286
  %3307 = vmatprep.subr.mxu0 0.0
  %3308 = vmatpush1.msra.mxu0 %v3287
  %3309 = vmatprep.subr.mxu0 0.0
  %3310 = vmatpush1.msra.mxu0 %v3288
  %3311 = vmatprep.subr.mxu0 0.0
  %3312 = vmatpush1.msra.mxu0 0.0
  %3313 = vmatprep.subr.mxu0 0.0
  %3314 = vmatpush1.msra.mxu0 0.0
  %3315 = vmatprep.subr.mxu0 0.0
  %3316 = vmatpush1.msra.mxu0 0.0
  %3317 = vmatprep.subr.mxu0 0.0
  %3318 = vmatpush1.msra.mxu0 0.0
  %3319 = vmatprep.subr.mxu0 0.0
  %3320 = vmatpush1.msra.mxu0 0.0
  %3321 = vmatprep.subr.mxu0 0.0
  %3322 = vmatpush1.msra.mxu0 0.0
  %3323 = vmatprep.subr.mxu0 0.0
  %3324 = vmatpush1.msra.mxu0 0.0
  %3325 = vmatprep.subr.mxu0 0.0
  %3326 = vmatpush1.msra.mxu0 0.0
  %3327 = vmatprep.subr.mxu0 0.0
  %3328 = vmatpush1.msra.mxu0 0.0
  %3329 = vmatprep.subr.mxu0 0.0
  %3330 = vmatpush1.msra.mxu0 0.0
  %3331 = vmatprep.subr.mxu0 0.0
  %3332 = vmatpush1.msra.mxu0 0.0
  %3333 = vmatprep.subr.mxu0 0.0
  %3334 = vmatpush1.msra.mxu0 0.0
  %3335 = vmatprep.subr.mxu0 0.0
  %3336 = vmatpush1.msra.mxu0 0.0
  %3337 = vmatprep.subr.mxu0 0.0
  %3338 = vmatpush1.msra.mxu0 0.0
  %3339 = vmatprep.subr.mxu0 0.0
  %3340 = vmatpush1.msra.mxu0 0.0
  %3341 = vmatprep.subr.mxu0 0.0
  %3342 = vmatpush1.msra.mxu0 0.0
  %3343 = vmatprep.subr.mxu0 0.0
  %3344 = vmatpush1.msra.mxu0 0.0
  %3345 = vmatprep.subr.mxu0 0.0
  %3346 = vmatpush1.msra.mxu0 0.0
  %3347 = vmatprep.subr.mxu0 0.0
  %3348 = vmatpush1.msra.mxu0 0.0
  %3349 = vmatprep.subr.mxu0 0.0
  %3350 = vmatpush1.msra.mxu0 0.0
  %3351 = vmatprep.subr.mxu0 0.0
  %3352 = vmatpush1.msra.mxu0 0.0
  %3353 = vmatprep.subr.mxu0 0.0
  %3354 = vmatpush1.msra.mxu0 0.0
  %3355 = vmatprep.subr.mxu0 0.0
  %3356 = vmatpush1.msra.mxu0 0.0
  %3357 = vmatprep.subr.mxu0 0.0
  %3358 = vmatpush1.msra.mxu0 0.0
  %3359 = vmatprep.subr.mxu0 0.0
  %3360 = vmatpush1.msra.mxu0 0.0
  %3361 = vmatprep.subr.mxu0 0.0
  %3362 = vmatpush1.msra.mxu0 0.0
  %3363 = vmatprep.subr.mxu0 0.0
  %3364 = vmatpush1.msra.mxu0 0.0
  %3365 = vmatprep.subr.mxu0 0.0
  %3366 = vmatpush1.msra.mxu0 0.0
  %3367 = vmatprep.mubr.f32.mxu0 0.0
  %3368 = vmatmul.mubr.f32.gmra.mrb[0].mxu0 %v3298
  %v3369 = vpop.f32.mrb[0].mxu0
  %v3370 = vadd.f32 %v3295, %v3369
  %v3371 = vpop.f32.mrb[0].mxu0
  %3372 = vmatprep.mubr.f32.mxu0 0.0
  %3373 = vmatmul.mubr.f32.gmra.mrb[0].mxu0 %v3301
  %v3374 = vpop.f32.mrb[0].mxu0
  %v3375 = vadd.f32 %v3295, %v3374
  %v3376 = vpop.f32.mrb[0].mxu0
  %3377 = vdwg.mxu0
  %v3378 = vadd.f32 %v3370, %v3186
  %v3379 = vadd.f32 %v3375, %v3187
  %v3380 = vmul.f32 %v3378, %v1720
  %v3381 = vmul.f32 %v3379, %v1725
  %v3382 = vld [vmem:[%s18] sm:$0x1]
  %v3383 = vld [vmem:[%s19] sm:$0x1]
  %v3384 = vsel %vm80, %v3380, 0.0
  %3385 = vadd.xlane.f32.xlu0 %v3384
  %v3386 = vpop.xlane.xlu0 %3385
  %v3387 = vsel %vm80, %v3381, 0.0
  %3388 = vadd.xlane.f32.xlu0 %v3387
  %v3389 = vpop.xlane.xlu0 %3388
  %v3390 = vmul.f32 %v3386, %v87
  %v3391 = vmul.f32 %v3389, %v87
  %v3392 = vsub.f32 %v3380, %v3390
  %v3393 = vsub.f32 %v3381, %v3391
  %v3394 = vmul.f32 %v3392, %v3392
  %v3395 = vmul.f32 %v3393, %v3393
  %v3396 = vsel %vm80, %v3394, 0.0
  %3397 = vadd.xlane.f32.xlu0 %v3396
  %v3398 = vpop.xlane.xlu0 %3397
  %v3399 = vsel %vm80, %v3395, 0.0
  %3400 = vadd.xlane.f32.xlu0 %v3399
  %v3401 = vpop.xlane.xlu0 %3400
  %v3402 = vmul.f32 %v3398, %v87
  %v3403 = vmul.f32 %v3401, %v87
  %v3404 = vadd.f32 %v3402, 1e-08
  %v3405 = vadd.f32 %v3403, 1e-08
  %v3406 = vrsqrt.pop %v3404
  %v3407 = vrsqrt.pop %v3405
  %v3408 = vmul.f32 %v3392, %v3406
  %v3409 = vmul.f32 %v3393, %v3407
  %v3411 = vlaneseq
  %v3412 = vshrl.u32 %v3411, 7
  %v3413 = vsub.s32 0, %v3412
  %v3414 = vrot.slane %v3382, %v3413
  %v3416 = vmul.f32 %v3408, %v3414
  %v3417 = vmul.f32 %v3409, %v3414
  %v3419 = vlaneseq
  %v3420 = vshrl.u32 %v3419, 7
  %v3421 = vsub.s32 0, %v3420
  %v3422 = vrot.slane %v3383, %v3421
  %v3424 = vadd.f32 %v3416, %v3422
  %v3425 = vadd.f32 %v3417, %v3422
  %v3426 = vld [vmem:[%s20] sm:$0xf]
  %v3427 = vld [vmem:[%s20 + $0x4] sm:$0xf]
  %v3428 = vld [vmem:[%s20 + $0x8] sm:$0xf]
  %v3429 = vld [vmem:[%s20 + $0xc] sm:$0xf]
  %v3430 = vld [vmem:[%s20 + $0x10] sm:$0xf]
  %v3431 = vld [vmem:[%s20 + $0x14] sm:$0xf]
  %v3432 = vld [vmem:[%s20 + $0x18] sm:$0xf]
  %v3433 = vld [vmem:[%s20 + $0x1c] sm:$0xf]
  %v3434 = vld [vmem:[%s20 + $0x20] sm:$0xf]
  %v3435 = vld [vmem:[%s20 + $0x24] sm:$0xf]
  %v3436 = vld [vmem:[%s20 + $0x28] sm:$0xf]
  %v3437 = vld [vmem:[%s20 + $0x2c] sm:$0xf]
  %v3438 = vld [vmem:[%s20 + $0x30] sm:$0xf]
  %v3439 = vld [vmem:[%s20 + $0x34] sm:$0xf]
  %v3440 = vld [vmem:[%s20 + $0x38] sm:$0xf]
  %v3441 = vld [vmem:[%s20 + $0x3c] sm:$0xf]
  %v3444 = vcombine.high %v3424, %v3424
  %v3446 = vunpack.c.l.s4 1966171168
  %v3447 = vunpack.c.0.s8 %v3446
  %v3448 = vlaneseq
  %v3449 = vshrl.u32 %v3448, 7
  %v3450 = vsub.s32 %v3447, %v3449
  %v3451 = vrot.slane %v3424, %v3450
  %v3453 = vunpack.c.l.s4 1966171168
  %v3454 = vunpack.c.0.s8 %v3453
  %v3455 = vlaneseq
  %v3456 = vshrl.u32 %v3455, 7
  %v3457 = vsub.s32 %v3454, %v3456
  %v3458 = vrot.slane %v3444, %v3457
  %v3459 = vcombine.high %v3451, %v3451
  %v3460 = vcombine.high %v3458, %v3458
  %v3462 = vunpack.c.l.s4 1966171168
  %v3463 = vunpack.c.0.s8 %v3462
  %v3464 = vlaneseq
  %v3465 = vshrl.u32 %v3464, 7
  %v3466 = vsub.s32 %v3463, %v3465
  %v3467 = vrot.slane %v3451, %v3466
  %v3469 = vunpack.c.l.s4 1966171168
  %v3470 = vunpack.c.0.s8 %v3469
  %v3471 = vlaneseq
  %v3472 = vshrl.u32 %v3471, 7
  %v3473 = vsub.s32 %v3470, %v3472
  %v3474 = vrot.slane %v3458, %v3473
  %v3476 = vunpack.c.l.s4 1966171168
  %v3477 = vunpack.c.0.s8 %v3476
  %v3478 = vlaneseq
  %v3479 = vshrl.u32 %v3478, 7
  %v3480 = vsub.s32 %v3477, %v3479
  %v3481 = vrot.slane %v3459, %v3480
  %v3483 = vunpack.c.l.s4 1966171168
  %v3484 = vunpack.c.0.s8 %v3483
  %v3485 = vlaneseq
  %v3486 = vshrl.u32 %v3485, 7
  %v3487 = vsub.s32 %v3484, %v3486
  %v3488 = vrot.slane %v3460, %v3487
  %v3489 = vcombine.high %v3467, %v3467
  %v3490 = vcombine.high %v3474, %v3474
  %v3491 = vcombine.high %v3481, %v3481
  %v3492 = vcombine.high %v3488, %v3488
  %v3493 = vcombine.high %v3425, %v3425
  %v3495 = vunpack.c.l.s4 1966171168
  %v3496 = vunpack.c.0.s8 %v3495
  %v3497 = vlaneseq
  %v3498 = vshrl.u32 %v3497, 7
  %v3499 = vsub.s32 %v3496, %v3498
  %v3500 = vrot.slane %v3425, %v3499
  %v3502 = vunpack.c.l.s4 1966171168
  %v3503 = vunpack.c.0.s8 %v3502
  %v3504 = vlaneseq
  %v3505 = vshrl.u32 %v3504, 7
  %v3506 = vsub.s32 %v3503, %v3505
  %v3507 = vrot.slane %v3493, %v3506
  %v3508 = vcombine.high %v3500, %v3500
  %v3509 = vcombine.high %v3507, %v3507
  %v3511 = vunpack.c.l.s4 1966171168
  %v3512 = vunpack.c.0.s8 %v3511
  %v3513 = vlaneseq
  %v3514 = vshrl.u32 %v3513, 7
  %v3515 = vsub.s32 %v3512, %v3514
  %v3516 = vrot.slane %v3500, %v3515
  %v3518 = vunpack.c.l.s4 1966171168
  %v3519 = vunpack.c.0.s8 %v3518
  %v3520 = vlaneseq
  %v3521 = vshrl.u32 %v3520, 7
  %v3522 = vsub.s32 %v3519, %v3521
  %v3523 = vrot.slane %v3507, %v3522
  %v3525 = vunpack.c.l.s4 1966171168
  %v3526 = vunpack.c.0.s8 %v3525
  %v3527 = vlaneseq
  %v3528 = vshrl.u32 %v3527, 7
  %v3529 = vsub.s32 %v3526, %v3528
  %v3530 = vrot.slane %v3508, %v3529
  %v3532 = vunpack.c.l.s4 1966171168
  %v3533 = vunpack.c.0.s8 %v3532
  %v3534 = vlaneseq
  %v3535 = vshrl.u32 %v3534, 7
  %v3536 = vsub.s32 %v3533, %v3535
  %v3537 = vrot.slane %v3509, %v3536
  %v3538 = vcombine.high %v3516, %v3516
  %v3539 = vcombine.high %v3523, %v3523
  %v3540 = vcombine.high %v3530, %v3530
  %v3541 = vcombine.high %v3537, %v3537
  %v3542 = vlaneseq
  %v3543 = vshrl.u32 %v3542, 7
  %v3544 = vsub.s32 0, %v3543
  %v3545 = vrot.slane %v3467, %v3544
  %v3546 = vlaneseq
  %v3547 = vshrl.u32 %v3546, 7
  %v3548 = vsub.s32 0, %v3547
  %v3549 = vrot.slane %v3481, %v3548
  %v3550 = vlaneseq
  %v3551 = vshrl.u32 %v3550, 7
  %v3552 = vsub.s32 0, %v3551
  %v3553 = vrot.slane %v3489, %v3552
  %v3554 = vlaneseq
  %v3555 = vshrl.u32 %v3554, 7
  %v3556 = vsub.s32 0, %v3555
  %v3557 = vrot.slane %v3491, %v3556
  %v3558 = vlaneseq
  %v3559 = vshrl.u32 %v3558, 7
  %v3560 = vsub.s32 0, %v3559
  %v3561 = vrot.slane %v3474, %v3560
  %v3562 = vlaneseq
  %v3563 = vshrl.u32 %v3562, 7
  %v3564 = vsub.s32 0, %v3563
  %v3565 = vrot.slane %v3488, %v3564
  %v3566 = vlaneseq
  %v3567 = vshrl.u32 %v3566, 7
  %v3568 = vsub.s32 0, %v3567
  %v3569 = vrot.slane %v3490, %v3568
  %v3570 = vlaneseq
  %v3571 = vshrl.u32 %v3570, 7
  %v3572 = vsub.s32 0, %v3571
  %v3573 = vrot.slane %v3492, %v3572
  %v3574 = vlaneseq
  %v3575 = vshrl.u32 %v3574, 7
  %v3576 = vsub.s32 0, %v3575
  %v3577 = vrot.slane %v3516, %v3576
  %v3578 = vlaneseq
  %v3579 = vshrl.u32 %v3578, 7
  %v3580 = vsub.s32 0, %v3579
  %v3581 = vrot.slane %v3530, %v3580
  %v3582 = vlaneseq
  %v3583 = vshrl.u32 %v3582, 7
  %v3584 = vsub.s32 0, %v3583
  %v3585 = vrot.slane %v3538, %v3584
  %v3586 = vlaneseq
  %v3587 = vshrl.u32 %v3586, 7
  %v3588 = vsub.s32 0, %v3587
  %v3589 = vrot.slane %v3540, %v3588
  %v3590 = vlaneseq
  %v3591 = vshrl.u32 %v3590, 7
  %v3592 = vsub.s32 0, %v3591
  %v3593 = vrot.slane %v3523, %v3592
  %v3594 = vlaneseq
  %v3595 = vshrl.u32 %v3594, 7
  %v3596 = vsub.s32 0, %v3595
  %v3597 = vrot.slane %v3537, %v3596
  %v3598 = vlaneseq
  %v3599 = vshrl.u32 %v3598, 7
  %v3600 = vsub.s32 0, %v3599
  %v3601 = vrot.slane %v3539, %v3600
  %v3602 = vlaneseq
  %v3603 = vshrl.u32 %v3602, 7
  %v3604 = vsub.s32 0, %v3603
  %v3605 = vrot.slane %v3541, %v3604
  %v3622 = vmul.f32 %v3545, %v3426
  %v3623 = vmul.f32 %v3549, %v3427
  %v3624 = vmul.f32 %v3553, %v3428
  %v3625 = vmul.f32 %v3557, %v3429
  %v3626 = vmul.f32 %v3561, %v3430
  %v3627 = vmul.f32 %v3565, %v3431
  %v3628 = vmul.f32 %v3569, %v3432
  %v3629 = vmul.f32 %v3573, %v3433
  %v3630 = vmul.f32 %v3577, %v3434
  %v3631 = vmul.f32 %v3581, %v3435
  %v3632 = vmul.f32 %v3585, %v3436
  %v3633 = vmul.f32 %v3589, %v3437
  %v3634 = vmul.f32 %v3593, %v3438
  %v3635 = vmul.f32 %v3597, %v3439
  %v3636 = vmul.f32 %v3601, %v3440
  %v3637 = vmul.f32 %v3605, %v3441
  %vm3638 = vcmask 257024
  %v3639 = vsel %vm3638, %v3622, 0.0
  %3640 = vadd.xlane.f32.xlu0 %v3639
  %v3641 = vpop.xlane.xlu0 %3640
  %v3642 = vsel %vm3638, %v3623, 0.0
  %3643 = vadd.xlane.f32.xlu0 %v3642
  %v3644 = vpop.xlane.xlu0 %3643
  %v3645 = vsel %vm3638, %v3624, 0.0
  %3646 = vadd.xlane.f32.xlu0 %v3645
  %v3647 = vpop.xlane.xlu0 %3646
  %v3648 = vsel %vm3638, %v3625, 0.0
  %3649 = vadd.xlane.f32.xlu0 %v3648
  %v3650 = vpop.xlane.xlu0 %3649
  %v3651 = vsel %vm3638, %v3626, 0.0
  %3652 = vadd.xlane.f32.xlu0 %v3651
  %v3653 = vpop.xlane.xlu0 %3652
  %v3654 = vsel %vm3638, %v3627, 0.0
  %3655 = vadd.xlane.f32.xlu0 %v3654
  %v3656 = vpop.xlane.xlu0 %3655
  %v3657 = vsel %vm3638, %v3628, 0.0
  %3658 = vadd.xlane.f32.xlu0 %v3657
  %v3659 = vpop.xlane.xlu0 %3658
  %v3660 = vsel %vm3638, %v3629, 0.0
  %3661 = vadd.xlane.f32.xlu0 %v3660
  %v3662 = vpop.xlane.xlu0 %3661
  %v3663 = vsel %vm3638, %v3630, 0.0
  %3664 = vadd.xlane.f32.xlu0 %v3663
  %v3665 = vpop.xlane.xlu0 %3664
  %v3666 = vsel %vm3638, %v3631, 0.0
  %3667 = vadd.xlane.f32.xlu0 %v3666
  %v3668 = vpop.xlane.xlu0 %3667
  %v3669 = vsel %vm3638, %v3632, 0.0
  %3670 = vadd.xlane.f32.xlu0 %v3669
  %v3671 = vpop.xlane.xlu0 %3670
  %v3672 = vsel %vm3638, %v3633, 0.0
  %3673 = vadd.xlane.f32.xlu0 %v3672
  %v3674 = vpop.xlane.xlu0 %3673
  %v3675 = vsel %vm3638, %v3634, 0.0
  %3676 = vadd.xlane.f32.xlu0 %v3675
  %v3677 = vpop.xlane.xlu0 %3676
  %v3678 = vsel %vm3638, %v3635, 0.0
  %3679 = vadd.xlane.f32.xlu0 %v3678
  %v3680 = vpop.xlane.xlu0 %3679
  %v3681 = vsel %vm3638, %v3636, 0.0
  %3682 = vadd.xlane.f32.xlu0 %v3681
  %v3683 = vpop.xlane.xlu0 %3682
  %v3684 = vsel %vm3638, %v3637, 0.0
  %3685 = vadd.xlane.f32.xlu0 %v3684
  %v3686 = vpop.xlane.xlu0 %3685
  %v3703 = vlaneseq
  %v3704 = vshrl.u32 %v3703, 7
  %v3705 = vsub.s32 %v75, %v3704
  %v3706 = vrot.slane %v3641, %v3705
  %v3707 = vlaneseq
  %v3708 = vshrl.u32 %v3707, 7
  %v3709 = vsub.s32 %v75, %v3708
  %v3710 = vrot.slane %v3644, %v3709
  %v3711 = vlaneseq
  %v3712 = vshrl.u32 %v3711, 7
  %v3713 = vsub.s32 %v75, %v3712
  %v3714 = vrot.slane %v3647, %v3713
  %v3715 = vlaneseq
  %v3716 = vshrl.u32 %v3715, 7
  %v3717 = vsub.s32 %v75, %v3716
  %v3718 = vrot.slane %v3650, %v3717
  %v3719 = vlaneseq
  %v3720 = vshrl.u32 %v3719, 7
  %v3721 = vsub.s32 %v75, %v3720
  %v3722 = vrot.slane %v3653, %v3721
  %v3723 = vlaneseq
  %v3724 = vshrl.u32 %v3723, 7
  %v3725 = vsub.s32 %v75, %v3724
  %v3726 = vrot.slane %v3656, %v3725
  %v3727 = vlaneseq
  %v3728 = vshrl.u32 %v3727, 7
  %v3729 = vsub.s32 %v75, %v3728
  %v3730 = vrot.slane %v3659, %v3729
  %v3731 = vlaneseq
  %v3732 = vshrl.u32 %v3731, 7
  %v3733 = vsub.s32 %v75, %v3732
  %v3734 = vrot.slane %v3662, %v3733
  %v3735 = vlaneseq
  %v3736 = vshrl.u32 %v3735, 7
  %v3737 = vsub.s32 %v75, %v3736
  %v3738 = vrot.slane %v3665, %v3737
  %v3739 = vlaneseq
  %v3740 = vshrl.u32 %v3739, 7
  %v3741 = vsub.s32 %v75, %v3740
  %v3742 = vrot.slane %v3668, %v3741
  %v3743 = vlaneseq
  %v3744 = vshrl.u32 %v3743, 7
  %v3745 = vsub.s32 %v75, %v3744
  %v3746 = vrot.slane %v3671, %v3745
  %v3747 = vlaneseq
  %v3748 = vshrl.u32 %v3747, 7
  %v3749 = vsub.s32 %v75, %v3748
  %v3750 = vrot.slane %v3674, %v3749
  %v3751 = vlaneseq
  %v3752 = vshrl.u32 %v3751, 7
  %v3753 = vsub.s32 %v75, %v3752
  %v3754 = vrot.slane %v3677, %v3753
  %v3755 = vlaneseq
  %v3756 = vshrl.u32 %v3755, 7
  %v3757 = vsub.s32 %v75, %v3756
  %v3758 = vrot.slane %v3680, %v3757
  %v3759 = vlaneseq
  %v3760 = vshrl.u32 %v3759, 7
  %v3761 = vsub.s32 %v75, %v3760
  %v3762 = vrot.slane %v3683, %v3761
  %v3763 = vlaneseq
  %v3764 = vshrl.u32 %v3763, 7
  %v3765 = vsub.s32 %v75, %v3764
  %v3766 = vrot.slane %v3686, %v3765
  %vm3767 = vcmask 1041409
  %v3768 = vsel %vm3767, %v3710, %v3706
  %vm3769 = vcmask 1042434
  %v3770 = vsel %vm3769, %v3714, %v3768
  %vm3771 = vcmask 1043459
  %v3772 = vsel %vm3771, %v3718, %v3770
  %vm3773 = vcmask 1044484
  %v3774 = vsel %vm3773, %v3722, %v3772
  %vm3775 = vcmask 1045509
  %v3776 = vsel %vm3775, %v3726, %v3774
  %vm3777 = vcmask 1046534
  %v3778 = vsel %vm3777, %v3730, %v3776
  %vm3779 = vcmask 1047559
  %v3780 = vsel %vm3779, %v3734, %v3778
  %v3781 = vsel %vm3767, %v3742, %v3738
  %v3782 = vsel %vm3769, %v3746, %v3781
  %v3783 = vsel %vm3771, %v3750, %v3782
  %v3784 = vsel %vm3773, %v3754, %v3783
  %v3785 = vsel %vm3775, %v3758, %v3784
  %v3786 = vsel %vm3777, %v3762, %v3785
  %v3787 = vsel %vm3779, %v3766, %v3786
  %vm3790 = vcmask 31744
  %3791 = vst.msk [vmem:[%s21] sm:$0xff] %vm3790, %v3780
  %3792 = vst.msk [vmem:[%s21 + $0x8] sm:$0xff] %vm3790, %v3787
  // Predicated region
  $region86: #{sasrec_forward.1} parent=0 // pred_check
    _
  $region87: #{sasrec_forward.1} parent=0 // pred_check_branch
    %3794 = sbr.rel (0) target = $region89
  $region88: #{sasrec_forward.1} parent=0 // pred_region
    _
  $region89: #{sasrec_forward.1} parent=0 // pred_fallthru
    _
  // Predicated region
  $region90: #{sasrec_forward.1} parent=0 // pred_check
    _
  $region91: #{sasrec_forward.1} parent=0 // pred_check_branch
    %3796 = sbr.rel (0) target = $region93
  $region92: #{sasrec_forward.1} parent=0 // pred_region
    _
  $region93: #{sasrec_forward.1} parent=0 // pred_fallthru
    _

</llo_original>
